<compile_context>
chip_gen: v7x
topology: tpu7x:2x2x1
jax: 0.10.0
libtpu: 0.0.40
codegen_flags: <defaults>
</compile_context>

<pallas_src>
import functools

import jax
import jax.numpy as jnp
from jax import lax
from jax.experimental import pallas as pl
from jax.experimental.pallas import tpu as pltpu

EPS = 1e-8          # LayerNorm eps used by the PyTorch module
NEG_INF = -1e30     # additive causal-mask value
GCN_ALPHA = 0.1     # GCNLayer default alpha
LANE = 128          # TPU lane width
VMEM_LIMIT = 48 * 1024 * 1024   # safe on v5e/v6e (128 MiB) and v7x (64 MiB)


def _round_up(x, m):
    return (x + m - 1) // m * m


def _pick_gcn_tiles(np_):
    """np_ is a multiple of 128.  Prefer large tiles; keep >=2 row steps when possible."""
    tm = 128
    for c in (1024, 512, 256):
        if np_ % c == 0 and np_ // c >= 2:
            tm = c
            break
    tk = 128
    for c in (1024, 512, 256):
        if np_ % c == 0:
            tk = c
            break
    return tm, tk


def _choose_batch_tile(b):
    """Pad batch so the tile is >=8 sublanes and the grid has >=2 parallel steps."""
    bp = _round_up(max(b, 16), 8)
    for bt in (16, 8):               # bt<=16 keeps the v7x (64 MiB VMEM) budget safe
        if bp % bt == 0 and bp // bt >= 2:
            return bp, bt
    return bp, 8


# --------------------------- GCN layer kernel -------------------------------
def _gcn_kernel(adj_ref, xk_ref, xr_ref, wT_ref, b_ref, o_ref, acc_ref,
                *, alpha, nk):
    k = pl.program_id(1)

    @pl.when(k == 0)
    def _():
        acc_ref[...] = jnp.zeros_like(acc_ref)

    # adj and x K-tiles are both streamed as bf16; accumulation stays f32.
    acc_ref[...] += jnp.dot(adj_ref[...], xk_ref[...],
                            preferred_element_type=jnp.float32)

    @pl.when(k == nk - 1)
    def _():
        h = alpha * xr_ref[...] + (1.0 - alpha) * acc_ref[...]
        h = jnp.dot(h.astype(jnp.bfloat16), wT_ref[...],
                    preferred_element_type=jnp.float32) + b_ref[...]
        o_ref[...] = jnp.maximum(h, 0.0)


def gcn_layer(adj_bf16, x, wT_bf16, b, alpha=GCN_ALPHA):
    """adj_bf16: (Np,Np) bf16, x: (Np,Dp) f32, wT: (Dp,Dp) bf16, b: (1,Dp) f32."""
    np_, dp = x.shape
    tm, tk = _pick_gcn_tiles(np_)
    nk = np_ // tk
    x_bf16 = x.astype(jnp.bfloat16)          # K-operand streamed as bf16
    return pl.pallas_call(
        functools.partial(_gcn_kernel, alpha=alpha, nk=nk),
        out_shape=jax.ShapeDtypeStruct((np_, dp), jnp.float32),
        grid_spec=pltpu.PrefetchScalarGridSpec(
            num_scalar_prefetch=0,
            grid=(np_ // tm, nk),
            in_specs=[
                pl.BlockSpec((tm, tk), lambda i, k: (i, k)),   # adj tile (bf16)
                pl.BlockSpec((tk, dp), lambda i, k: (k, 0)),   # x K-tile (bf16)
                pl.BlockSpec((tm, dp), lambda i, k: (i, 0)),   # x row-tile (f32, alpha*x)
                pl.BlockSpec((dp, dp), lambda i, k: (0, 0)),   # W^T (bf16)
                pl.BlockSpec((1, dp), lambda i, k: (0, 0)),    # bias
            ],
            out_specs=pl.BlockSpec((tm, dp), lambda i, k: (i, 0)),
            scratch_shapes=[pltpu.VMEM((tm, dp), jnp.float32)],
        ),
        compiler_params=pltpu.CompilerParams(
            dimension_semantics=("parallel", "arbitrary"),
            vmem_limit_bytes=VMEM_LIMIT),
    )(adj_bf16, x_bf16, x, wT_bf16, b)


# --------------- fused transformer blocks + final LN + logits head ----------
_STACK_ORDER = ('ln1w', 'ln1b', 'wq', 'bq', 'wkv', 'bkv', 'wo', 'bo',
                'ln2w', 'ln2b', 'w1', 'b1', 'w2', 'b2')


def _sasrec_fused_kernel(
        seqs_ref, pos_ref, neg_ref,
        ln1w_ref, ln1b_ref, wq_ref, bq_ref, wkv_ref, bkv_ref, wo_ref, bo_ref,
        ln2w_ref, ln2b_ref, w1_ref, b1_ref, w2_ref, b2_ref,
        lnfw_ref, lnfb_ref,
        pos_out_ref, neg_out_ref,
        *, num_blocks, d_real):
    x = seqs_ref[...].astype(jnp.float32)          # bf16 in HBM, f32 math in-kernel
    bt, L, Dp = x.shape
    Lp = pos_out_ref.shape[-1]
    inv_d = 1.0 / float(d_real)

    # LayerNorm statistics only over the real D lanes (rest are zero-padded).
    lane_ok = lax.broadcasted_iota(jnp.int32, (1, 1, Dp), 2) < d_real
    # Causal mask generated in-kernel (no HBM traffic).
    rows = lax.broadcasted_iota(jnp.int32, (L, L), 0)
    cols = lax.broadcasted_iota(jnp.int32, (L, L), 1)
    causal = (cols <= rows)[None, :, :]            # (1, L, L)

    def layernorm(t, w, b):                        # f32 elementwise math
        mu = jnp.sum(t, axis=-1, keepdims=True) * inv_d
        diff = jnp.where(lane_ok, t - mu, 0.0)
        var = jnp.sum(diff * diff, axis=-1, keepdims=True) * inv_d
        return diff * lax.rsqrt(var + EPS) * w + b

    def project(t2, wT, b):                        # (M,Dp)@(Dp,E) on MXU, bf16 in / f32 acc
        return jnp.dot(t2.astype(jnp.bfloat16), wT,
                       preferred_element_type=jnp.float32) + b

    def block_body(blk, x):
        q_in = layernorm(x, ln1w_ref[blk], ln1b_ref[blk])          # LN applied to query only
        # 1/sqrt(d) attention scale is pre-folded into wq/bq at pack time.
        q2 = project(q_in.reshape(bt * L, Dp), wq_ref[blk], bq_ref[blk])   # (M, Dp)
        kv = project(x.reshape(bt * L, Dp), wkv_ref[blk], bkv_ref[blk])    # (M, 2Dp) fused K/V
        q = q2.reshape(bt, L, Dp)
        k = kv[:, :Dp].reshape(bt, L, Dp)
        v = kv[:, Dp:].reshape(bt, L, Dp)

        scores = jnp.einsum('bqd,bkd->bqk',
                            q.astype(jnp.bfloat16), k.astype(jnp.bfloat16),
                            preferred_element_type=jnp.float32)
        scores = jnp.where(causal, scores, NEG_INF)
        m = jnp.max(scores, axis=-1, keepdims=True)
        e = jnp.exp(scores - m)
        p = e * pl.reciprocal(jnp.sum(e, axis=-1, keepdims=True), approx=True)
        attn = jnp.einsum('bqk,bkd->bqd',
                          p.astype(jnp.bfloat16), v.astype(jnp.bfloat16),
                          preferred_element_type=jnp.float32)
        attn = project(attn.reshape(bt * L, Dp), wo_ref[blk], bo_ref[blk]).reshape(bt, L, Dp)

        h = q_in + attn                                            # residual onto LN'd query
        h = layernorm(h, ln2w_ref[blk], ln2b_ref[blk])
        # PointWiseFeedForward: conv1d(k=1) == per-position linear; residual onto its input.
        ff = jnp.maximum(project(h.reshape(bt * L, Dp), w1_ref[blk], b1_ref[blk]), 0.0)
        ff = project(ff, w2_ref[blk], b2_ref[blk]).reshape(bt, L, Dp)
        return h + ff

    x = lax.fori_loop(0, num_blocks, block_body, x)

    log_feats = layernorm(x, lnfw_ref[...], lnfb_ref[...])
    pos_logits = jnp.sum(log_feats * pos_ref[...].astype(jnp.float32), axis=-1)   # (bt, L)
    neg_logits = jnp.sum(log_feats * neg_ref[...].astype(jnp.float32), axis=-1)

    if Lp == L:
        pos_out_ref[...] = pos_logits
        neg_out_ref[...] = neg_logits
    else:
        # Lane-dense output block: write a full (bt, Lp) slab, then the real L columns.
        pos_out_ref[...] = jnp.zeros((bt, Lp), jnp.float32)
        neg_out_ref[...] = jnp.zeros((bt, Lp), jnp.float32)
        pos_out_ref[:, :L] = pos_logits
        neg_out_ref[:, :L] = neg_logits


def sasrec_blocks_and_head(seqs, pos_embs, neg_embs, stacked, lnf_w, lnf_b, d_real):
    B, L, Dp = seqs.shape
    Bp, bt = _choose_batch_tile(B)
    Lp = _round_up(L, LANE)
    num_blocks = stacked['wq'].shape[0]

    if Bp != B:                                   # pad batch so every block is full
        padb = ((0, Bp - B), (0, 0), (0, 0))
        seqs = jnp.pad(seqs, padb)
        pos_embs = jnp.pad(pos_embs, padb)
        neg_embs = jnp.pad(neg_embs, padb)
    nb = Bp // bt

    weights = [stacked[k] for k in _STACK_ORDER] + [lnf_w, lnf_b]

    def const_spec(a):                            # grid-invariant, resident weight
        zeros = (0,) * a.ndim
        return pl.BlockSpec(a.shape, lambda i, z=zeros: z)

    seq_spec = pl.BlockSpec((bt, L, Dp), lambda i: (i, 0, 0))
    in_specs = [seq_spec, seq_spec, seq_spec] + [const_spec(a) for a in weights]
    out_spec = pl.BlockSpec((bt, Lp), lambda i: (i, 0))

    pos_out, neg_out = pl.pallas_call(
        functools.partial(_sasrec_fused_kernel, num_blocks=num_blocks, d_real=d_real),
        out_shape=(jax.ShapeDtypeStruct((Bp, Lp), jnp.float32),
                   jax.ShapeDtypeStruct((Bp, Lp), jnp.float32)),
        grid_spec=pltpu.PrefetchScalarGridSpec(
            num_scalar_prefetch=0, grid=(nb,),
            in_specs=in_specs, out_specs=[out_spec, out_spec]),
        compiler_params=pltpu.CompilerParams(
            dimension_semantics=("parallel",),
            vmem_limit_bytes=VMEM_LIMIT),
    )(seqs, pos_embs, neg_embs, *weights)
    return pos_out[:B, :L], neg_out[:B, :L]


# ------------------------------ full forward ---------------------------------
@functools.partial(jax.jit, static_argnames=('d',))
def sasrec_forward(packed, log_seqs, pos_seqs, neg_seqs, *, d):
    n, dp = packed['item_emb'].shape
    np_ = packed['adj'].shape[0]
    L = log_seqs.shape[1]

    # get_graph_embeddings(): GCN over the (row-padded) item table
    x = jnp.pad(packed['item_emb'], ((0, np_ - n), (0, 0)))
    for wT, b in packed['gcn']:
        x = gcn_layer(packed['adj'], x, wT, b)
    gcn_table = x[:n]

    # log2feats() embedding / positional glue (plain JAX gathers)
    seqs = gcn_table[log_seqs] * (float(d) ** 0.5)
    poss = (jnp.arange(1, L + 1, dtype=jnp.int32)[None, :]
            * (log_seqs != 0).astype(jnp.int32))
    seqs = seqs + packed['pos_emb'][poss]
    seqs = seqs.astype(jnp.bfloat16)              # stream activations as bf16
    # TODO(synk): emb/attn/ffn dropout omitted -> eval-mode semantics.

    # pos/neg embeddings come from the raw item_emb table (no GCN), as in forward()
    pos_embs = packed['item_emb'][pos_seqs].astype(jnp.bfloat16)
    neg_embs = packed['item_emb'][neg_seqs].astype(jnp.bfloat16)

    return sasrec_blocks_and_head(seqs, pos_embs, neg_embs, packed['stacked'],
                                  packed['lnf_w'], packed['lnf_b'], d)


# ------------------- deterministic init + weight packing ---------------------
def init_params(key, n_items_plus1, maxlen, d, num_blocks, num_gcn):
    keys = iter(jax.random.split(key, 64))

    def nrm(shape, scale=0.02):
        return (scale * jax.random.normal(next(keys), shape)).astype(jnp.float32)

    item_emb = nrm((n_items_plus1, d), 1.0).at[0].set(0.0)   # padding_idx=0
    pos_emb = nrm((maxlen + 1, d), 1.0).at[0].set(0.0)       # padding_idx=0
    adj = jnp.abs(nrm((n_items_plus1, n_items_plus1), 1.0))
    adj = adj / jnp.sum(adj, axis=1, keepdims=True)          # stand-in hybrid matrix

    gcn = [(nrm((d, d)), nrm((1, d))) for _ in range(num_gcn)]

    blocks = []
    for _ in range(num_blocks):
        blocks.append(dict(
            ln1_w=jnp.ones((1, d), jnp.float32), ln1_b=jnp.zeros((1, d), jnp.float32),
            wq=nrm((d, d)), wk=nrm((d, d)), wv=nrm((d, d)),
            bq=jnp.zeros((1, d), jnp.float32),
            bk=jnp.zeros((1, d), jnp.float32),
            bv=jnp.zeros((1, d), jnp.float32),
            wo=nrm((d, d)), bo=jnp.zeros((1, d), jnp.float32),
            ln2_w=jnp.ones((1, d), jnp.float32), ln2_b=jnp.zeros((1, d), jnp.float32),
            w1=nrm((d, d)), b1=nrm((1, d)),
            w2=nrm((d, d)), b2=nrm((1, d)),
        ))

    return dict(item_emb=item_emb, pos_emb=pos_emb, adj=adj, gcn=gcn,
                blocks=blocks,
                last_ln_w=jnp.ones((1, d), jnp.float32),
                last_ln_b=jnp.zeros((1, d), jnp.float32))


def pack_params(params, d):
    """Pad hidden dim to 128 lanes, pre-transpose weights to (in,out), fuse K/V,
    fold the 1/sqrt(d) attention scale into wq/bq, stack per-block weights along
    a leading num_blocks axis, and cast matmul weights / adjacency to bf16."""
    dp = _round_up(d, LANE)
    n = params['item_emb'].shape[0]
    np_ = _round_up(max(n, 8), LANE)
    scale = 1.0 / (float(d) ** 0.5)

    def padM(a, r, c):
        return jnp.pad(a, ((0, r - a.shape[0]), (0, c - a.shape[1])))

    item_emb = padM(params['item_emb'], n, dp)
    pos_emb = padM(params['pos_emb'], params['pos_emb'].shape[0], dp)
    adj = padM(params['adj'], np_, np_).astype(jnp.bfloat16)

    gcn = [(padM(w.T, dp, dp).astype(jnp.bfloat16), padM(b, 1, dp))
           for w, b in params['gcn']]

    def stack(fn, dtype=None):
        a = jnp.stack([fn(blk) for blk in params['blocks']], axis=0)
        return a.astype(dtype) if dtype is not None else a

    stacked = dict(
        ln1w=stack(lambda b: padM(b['ln1_w'], 1, dp)),
        ln1b=stack(lambda b: padM(b['ln1_b'], 1, dp)),
        wq=stack(lambda b: padM((b['wq'] * scale).T, dp, dp), jnp.bfloat16),
        bq=stack(lambda b: padM(b['bq'] * scale, 1, dp)),
        wkv=stack(lambda b: jnp.concatenate(
            [padM(b['wk'].T, dp, dp), padM(b['wv'].T, dp, dp)], axis=1), jnp.bfloat16),
        bkv=stack(lambda b: jnp.concatenate(
            [padM(b['bk'], 1, dp), padM(b['bv'], 1, dp)], axis=1)),
        wo=stack(lambda b: padM(b['wo'].T, dp, dp), jnp.bfloat16),
        bo=stack(lambda b: padM(b['bo'], 1, dp)),
        ln2w=stack(lambda b: padM(b['ln2_w'], 1, dp)),
        ln2b=stack(lambda b: padM(b['ln2_b'], 1, dp)),
        w1=stack(lambda b: padM(b['w1'].T, dp, dp), jnp.bfloat16),
        b1=stack(lambda b: padM(b['b1'], 1, dp)),
        w2=stack(lambda b: padM(b['w2'].T, dp, dp), jnp.bfloat16),
        b2=stack(lambda b: padM(b['b2'], 1, dp)),
    )

    return dict(item_emb=item_emb, pos_emb=pos_emb, adj=adj, gcn=gcn,
                stacked=stacked,
                lnf_w=padM(params['last_ln_w'], 1, dp),
                lnf_b=padM(params['last_ln_b'], 1, dp))


if __name__ == "__main__":
    B, L, D = 2, 8, 32            # batch, maxlen, hidden_units
    ITEM_NUM = 15                 # -> embedding table of size 16 (incl. padding 0)
    NUM_BLOCKS, NUM_GCN = 2, 1
    N = ITEM_NUM + 1

    key = jax.random.PRNGKey(0)
    pkey, k1, k2, k3 = jax.random.split(key, 4)
    raw_params = init_params(pkey, N, L, D, NUM_BLOCKS, NUM_GCN)
    packed = pack_params(raw_params, D)

    log_seqs = jax.random.randint(k1, (B, L), 0, N)   # 0 acts as padding
    pos_seqs = jax.random.randint(k2, (B, L), 1, N)
    neg_seqs = jax.random.randint(k3, (B, L), 1, N)

    pos_logits, neg_logits = sasrec_forward(packed, log_seqs, pos_seqs, neg_seqs, d=D)
    jax.block_until_ready((pos_logits, neg_logits))
    assert pos_logits.shape == (B, L) and neg_logits.shape == (B, L)
    assert bool(jnp.all(jnp.isfinite(pos_logits))) and bool(jnp.all(jnp.isfinite(neg_logits)))
    print("KERNEL_OK")
</pallas_src>

<mosaic_0001>
module attributes {stable_mosaic.version = 11 : i64} {
  func.func @_gcn_kernel(%arg0: i32, %arg1: i32, %arg2: memref<128x128xbf16, #tpu.memory_space<vmem>>, %arg3: memref<128x128xbf16, #tpu.memory_space<vmem>>, %arg4: memref<128x128xf32, #tpu.memory_space<vmem>>, %arg5: memref<128x128xbf16, #tpu.memory_space<vmem>>, %arg6: memref<1x128xf32, #tpu.memory_space<vmem>>, %arg7: memref<128x128xf32, #tpu.memory_space<vmem>>, %arg8: memref<128x128xf32, #tpu.memory_space<vmem>>) attributes {dimension_semantics = [#tpu.dimension_semantics<parallel>, #tpu.dimension_semantics<arbitrary>], iteration_bounds = array<i64: 1, 1>, scalar_prefetch = 0 : i64, scratch_operands = 1 : i64, tpu.core_type = #tpu.core_type<tc>, window_params = [{transform_indices = @transform_0, window_bounds = array<i64: 128, 128>}, {transform_indices = @transform_1, window_bounds = array<i64: 128, 128>}, {transform_indices = @transform_2, window_bounds = array<i64: 128, 128>}, {pipeline_mode = #tpu.pipeline_mode<synchronous>, transform_indices = @transform_3, window_bounds = array<i64: 128, 128>}, {pipeline_mode = #tpu.pipeline_mode<synchronous>, transform_indices = @transform_4, window_bounds = array<i64: 1, 128>}, {transform_indices = @transform_5, window_bounds = array<i64: 128, 128>}]} {
    %c0_i32 = arith.constant 0 : i32
    %0 = arith.cmpi eq, %arg1, %c0_i32 : i32
    %1 = arith.extui %0 : i1 to i32
    %c0_i32_0 = arith.constant 0 : i32
    %2 = arith.cmpi ne, %1, %c0_i32_0 : i32
    scf.if %2 {
      %cst_10 = arith.constant 0.000000e+00 : f32
      %12 = vector.broadcast %cst_10 : f32 to vector<128x128xf32>
      %c0_11 = arith.constant 0 : index
      %c0_12 = arith.constant 0 : index
      %13 = vector.load %arg8[%c0_11, %c0_12] : memref<128x128xf32, #tpu.memory_space<vmem>>, vector<128x128xf32>
      tpu.vector_store %arg8[%c0_11, %c0_12], %12 {strides = array<i32>} : memref<128x128xf32, #tpu.memory_space<vmem>>, vector<128x128xf32>,
    } else {
    }
    %c0 = arith.constant 0 : index
    %c0_1 = arith.constant 0 : index
    %3 = vector.load %arg8[%c0, %c0_1] : memref<128x128xf32, #tpu.memory_space<vmem>>, vector<128x128xf32>
    %c0_2 = arith.constant 0 : index
    %c0_3 = arith.constant 0 : index
    %4 = vector.load %arg2[%c0_2, %c0_3] : memref<128x128xbf16, #tpu.memory_space<vmem>>, vector<128x128xbf16>
    %c0_4 = arith.constant 0 : index
    %c0_5 = arith.constant 0 : index
    %5 = vector.load %arg3[%c0_4, %c0_5] : memref<128x128xbf16, #tpu.memory_space<vmem>>, vector<128x128xbf16>
    %cst = arith.constant dense<0.000000e+00> : vector<128x128xf32>
    %6 = tpu.matmul %4, %5, %cst {dimension_numbers = #tpu.dot_dimension_numbers<[1], [0], [0], [1], [0, 0, 1, 1], [], []>} : vector<128x128xbf16>, vector<128x128xbf16>, vector<128x128xf32> -> vector<128x128xf32>
    %7 = arith.addf %3, %6 : vector<128x128xf32>
    %c0_6 = arith.constant 0 : index
    %c0_7 = arith.constant 0 : index
    %8 = vector.load %arg8[%c0_6, %c0_7] : memref<128x128xf32, #tpu.memory_space<vmem>>, vector<128x128xf32>
    tpu.vector_store %arg8[%c0_6, %c0_7], %7 {strides = array<i32>} : memref<128x128xf32, #tpu.memory_space<vmem>>, vector<128x128xf32>,
    %c0_i32_8 = arith.constant 0 : i32
    %9 = arith.cmpi eq, %arg1, %c0_i32_8 : i32
    %10 = arith.extui %9 : i1 to i32
    %c0_i32_9 = arith.constant 0 : i32
    %11 = arith.cmpi ne, %10, %c0_i32_9 : i32
    scf.if %11 {
      %c0_10 = arith.constant 0 : index
      %c0_11 = arith.constant 0 : index
      %12 = vector.load %arg4[%c0_10, %c0_11] : memref<128x128xf32, #tpu.memory_space<vmem>>, vector<128x128xf32>
      %cst_12 = arith.constant 1.000000e-01 : f32
      %13 = vector.broadcast %cst_12 : f32 to vector<128x128xf32>
      %14 = arith.mulf %13, %12 : vector<128x128xf32>
      %c0_13 = arith.constant 0 : index
      %c0_14 = arith.constant 0 : index
      %15 = vector.load %arg8[%c0_13, %c0_14] : memref<128x128xf32, #tpu.memory_space<vmem>>, vector<128x128xf32>
      %cst_15 = arith.constant 0.899999976 : f32
      %16 = vector.broadcast %cst_15 : f32 to vector<128x128xf32>
      %17 = arith.mulf %16, %15 : vector<128x128xf32>
      %18 = arith.addf %14, %17 : vector<128x128xf32>
      %19 = arith.truncf %18 : vector<128x128xf32> to vector<128x128xbf16>
      %c0_16 = arith.constant 0 : index
      %c0_17 = arith.constant 0 : index
      %20 = vector.load %arg5[%c0_16, %c0_17] : memref<128x128xbf16, #tpu.memory_space<vmem>>, vector<128x128xbf16>
      %cst_18 = arith.constant dense<0.000000e+00> : vector<128x128xf32>
      %21 = tpu.matmul %19, %20, %cst_18 {dimension_numbers = #tpu.dot_dimension_numbers<[1], [0], [0], [1], [0, 0, 1, 1], [], []>} : vector<128x128xbf16>, vector<128x128xbf16>, vector<128x128xf32> -> vector<128x128xf32>
      %c0_19 = arith.constant 0 : index
      %c0_20 = arith.constant 0 : index
      %22 = vector.load %arg6[%c0_19, %c0_20] : memref<1x128xf32, #tpu.memory_space<vmem>>, vector<1x128xf32>
      %23 = vector.broadcast %22 : vector<1x128xf32> to vector<128x128xf32>
      %24 = arith.addf %21, %23 : vector<128x128xf32>
      %cst_21 = arith.constant 0.000000e+00 : f32
      %25 = vector.broadcast %cst_21 : f32 to vector<128x128xf32>
      %26 = arith.maximumf %24, %25 : vector<128x128xf32>
      %c0_22 = arith.constant 0 : index
      %c0_23 = arith.constant 0 : index
      %27 = vector.load %arg7[%c0_22, %c0_23] : memref<128x128xf32, #tpu.memory_space<vmem>>, vector<128x128xf32>
      tpu.vector_store %arg7[%c0_22, %c0_23], %26 {strides = array<i32>} : memref<128x128xf32, #tpu.memory_space<vmem>>, vector<128x128xf32>,
    } else {
    }
    return
  }
  func.func @transform_0(%arg0: i32, %arg1: i32) -> (i32, i32) {
    %c0_i32 = arith.constant 0 : i32
    return %arg0, %arg1 : i32, i32
  }
  func.func @transform_1(%arg0: i32, %arg1: i32) -> (i32, i32) {
    %c0_i32 = arith.constant 0 : i32
    %c0_i32_0 = arith.constant 0 : i32
    return %arg1, %c0_i32 : i32, i32
  }
  func.func @transform_2(%arg0: i32, %arg1: i32) -> (i32, i32) {
    %c0_i32 = arith.constant 0 : i32
    %c0_i32_0 = arith.constant 0 : i32
    return %arg0, %c0_i32 : i32, i32
  }
  func.func @transform_3(%arg0: i32, %arg1: i32) -> (i32, i32) {
    %c0_i32 = arith.constant 0 : i32
    %c0_i32_0 = arith.constant 0 : i32
    %c0_i32_1 = arith.constant 0 : i32
    return %c0_i32, %c0_i32_0 : i32, i32
  }
  func.func @transform_4(%arg0: i32, %arg1: i32) -> (i32, i32) {
    %c0_i32 = arith.constant 0 : i32
    %c0_i32_0 = arith.constant 0 : i32
    %c0_i32_1 = arith.constant 0 : i32
    return %c0_i32, %c0_i32_0 : i32, i32
  }
  func.func @transform_5(%arg0: i32, %arg1: i32) -> (i32, i32) {
    %c0_i32 = arith.constant 0 : i32
    %c0_i32_0 = arith.constant 0 : i32
    return %arg0, %c0_i32 : i32, i32
  }
}

module attributes {stable_mosaic.version = 11 : i64} {
  func.func @_sasrec_fused_kernel(%arg0: i32, %arg1: memref<8x8x128xbf16, #tpu.memory_space<vmem>>, %arg2: memref<8x8x128xbf16, #tpu.memory_space<vmem>>, %arg3: memref<8x8x128xbf16, #tpu.memory_space<vmem>>, %arg4: memref<2x1x128xf32, #tpu.memory_space<vmem>>, %arg5: memref<2x1x128xf32, #tpu.memory_space<vmem>>, %arg6: memref<2x128x128xbf16, #tpu.memory_space<vmem>>, %arg7: memref<2x1x128xf32, #tpu.memory_space<vmem>>, %arg8: memref<2x128x256xbf16, #tpu.memory_space<vmem>>, %arg9: memref<2x1x256xf32, #tpu.memory_space<vmem>>, %arg10: memref<2x128x128xbf16, #tpu.memory_space<vmem>>, %arg11: memref<2x1x128xf32, #tpu.memory_space<vmem>>, %arg12: memref<2x1x128xf32, #tpu.memory_space<vmem>>, %arg13: memref<2x1x128xf32, #tpu.memory_space<vmem>>, %arg14: memref<2x128x128xbf16, #tpu.memory_space<vmem>>, %arg15: memref<2x1x128xf32, #tpu.memory_space<vmem>>, %arg16: memref<2x128x128xbf16, #tpu.memory_space<vmem>>, %arg17: memref<2x1x128xf32, #tpu.memory_space<vmem>>, %arg18: memref<1x128xf32, #tpu.memory_space<vmem>>, %arg19: memref<1x128xf32, #tpu.memory_space<vmem>>, %arg20: memref<8x128xf32, #tpu.memory_space<vmem>>, %arg21: memref<8x128xf32, #tpu.memory_space<vmem>>) attributes {dimension_semantics = [#tpu.dimension_semantics<parallel>], iteration_bounds = array<i64: 2>, scalar_prefetch = 0 : i64, scratch_operands = 0 : i64, tpu.core_type = #tpu.core_type<tc>, window_params = [{transform_indices = @transform_0, window_bounds = array<i64: 8, 8, 128>}, {transform_indices = @transform_1, window_bounds = array<i64: 8, 8, 128>}, {transform_indices = @transform_2, window_bounds = array<i64: 8, 8, 128>}, {pipeline_mode = #tpu.pipeline_mode<synchronous>, transform_indices = @transform_3, window_bounds = array<i64: 2, 1, 128>}, {pipeline_mode = #tpu.pipeline_mode<synchronous>, transform_indices = @transform_4, window_bounds = array<i64: 2, 1, 128>}, {pipeline_mode = #tpu.pipeline_mode<synchronous>, transform_indices = @transform_5, window_bounds = array<i64: 2, 128, 128>}, {pipeline_mode = #tpu.pipeline_mode<synchronous>, transform_indices = @transform_6, window_bounds = array<i64: 2, 1, 128>}, {pipeline_mode = #tpu.pipeline_mode<synchronous>, transform_indices = @transform_7, window_bounds = array<i64: 2, 128, 256>}, {pipeline_mode = #tpu.pipeline_mode<synchronous>, transform_indices = @transform_8, window_bounds = array<i64: 2, 1, 256>}, {pipeline_mode = #tpu.pipeline_mode<synchronous>, transform_indices = @transform_9, window_bounds = array<i64: 2, 128, 128>}, {pipeline_mode = #tpu.pipeline_mode<synchronous>, transform_indices = @transform_10, window_bounds = array<i64: 2, 1, 128>}, {pipeline_mode = #tpu.pipeline_mode<synchronous>, transform_indices = @transform_11, window_bounds = array<i64: 2, 1, 128>}, {pipeline_mode = #tpu.pipeline_mode<synchronous>, transform_indices = @transform_12, window_bounds = array<i64: 2, 1, 128>}, {pipeline_mode = #tpu.pipeline_mode<synchronous>, transform_indices = @transform_13, window_bounds = array<i64: 2, 128, 128>}, {pipeline_mode = #tpu.pipeline_mode<synchronous>, transform_indices = @transform_14, window_bounds = array<i64: 2, 1, 128>}, {pipeline_mode = #tpu.pipeline_mode<synchronous>, transform_indices = @transform_15, window_bounds = array<i64: 2, 128, 128>}, {pipeline_mode = #tpu.pipeline_mode<synchronous>, transform_indices = @transform_16, window_bounds = array<i64: 2, 1, 128>}, {pipeline_mode = #tpu.pipeline_mode<synchronous>, transform_indices = @transform_17, window_bounds = array<i64: 1, 128>}, {pipeline_mode = #tpu.pipeline_mode<synchronous>, transform_indices = @transform_18, window_bounds = array<i64: 1, 128>}, {transform_indices = @transform_19, window_bounds = array<i64: 8, 128>}, {transform_indices = @transform_20, window_bounds = array<i64: 8, 128>}]} {
    %c0 = arith.constant 0 : index
    %c0_0 = arith.constant 0 : index
    %c0_1 = arith.constant 0 : index
    %0 = vector.load %arg1[%c0, %c0_0, %c0_1] : memref<8x8x128xbf16, #tpu.memory_space<vmem>>, vector<8x8x128xbf16>
    %1 = arith.extf %0 : vector<8x8x128xbf16> to vector<8x8x128xf32>
    %2 = tpu.iota {dimensions = array<i32: 2>} : vector<1x1x128xi32>
    %c32_i32 = arith.constant 32 : i32
    %3 = vector.broadcast %c32_i32 : i32 to vector<1x1x128xi32>
    %4 = arith.cmpi slt, %2, %3 : vector<1x1x128xi32>
    %5 = tpu.iota {dimensions = array<i32: 0>} : vector<8x8xi32>
    %6 = tpu.iota {dimensions = array<i32: 1>} : vector<8x8xi32>
    %7 = arith.cmpi sle, %6, %5 : vector<8x8xi32>
    %8 = vector.shape_cast %7 : vector<8x8xi1> to vector<1x8x8xi1>
    %c0_i32 = arith.constant 0 : i32
    %c2_i32 = arith.constant 2 : i32
    %9 = arith.addi %c0_i32, %c2_i32 : i32
    %c1_i32 = arith.constant 1 : i32
    %10 = scf.for %arg22 = %c0_i32 to %9 step %c1_i32 iter_args(%arg23 = %1) -> (vector<8x8x128xf32>)  : i32 {
      %53 = arith.index_cast %arg22 : i32 to index
      %c0_30 = arith.constant 0 : index
      %c0_31 = arith.constant 0 : index
      %54 = vector.load %arg4[%53, %c0_30, %c0_31] : memref<2x1x128xf32, #tpu.memory_space<vmem>>, vector<1x1x128xf32>
      %55 = vector.shape_cast %54 : vector<1x1x128xf32> to vector<1x128xf32>
      %56 = arith.index_cast %arg22 : i32 to index
      %c0_32 = arith.constant 0 : index
      %c0_33 = arith.constant 0 : index
      %57 = vector.load %arg5[%56, %c0_32, %c0_33] : memref<2x1x128xf32, #tpu.memory_space<vmem>>, vector<1x1x128xf32>
      %58 = vector.shape_cast %57 : vector<1x1x128xf32> to vector<1x128xf32>
      %cst_34 = arith.constant dense<0.000000e+00> : vector<8x8xf32>
      %59 = vector.multi_reduction <add>, %arg23, %cst_34 [2] : vector<8x8x128xf32> to vector<8x8xf32>
      %60 = vector.shape_cast %59 : vector<8x8xf32> to vector<8x8x1xf32>
      %cst_35 = arith.constant 3.125000e-02 : f32
      %61 = vector.broadcast %cst_35 : f32 to vector<8x8x1xf32>
      %62 = arith.mulf %60, %61 : vector<8x8x1xf32>
      %63 = vector.broadcast %62 : vector<8x8x1xf32> to vector<8x8x128xf32>
      %64 = arith.subf %arg23, %63 : vector<8x8x128xf32>
      %cst_36 = arith.constant 0.000000e+00 : f32
      %65 = vector.shape_cast %4 : vector<1x1x128xi1> to vector<1x1x128xi1>
      %66 = vector.broadcast %65 : vector<1x1x128xi1> to vector<8x8x128xi1>
      %67 = vector.broadcast %cst_36 : f32 to vector<8x8x128xf32>
      %68 = arith.select %66, %64, %67 : vector<8x8x128xi1>, vector<8x8x128xf32>
      %69 = arith.mulf %68, %68 : vector<8x8x128xf32>
      %cst_37 = arith.constant dense<0.000000e+00> : vector<8x8xf32>
      %70 = vector.multi_reduction <add>, %69, %cst_37 [2] : vector<8x8x128xf32> to vector<8x8xf32>
      %71 = vector.shape_cast %70 : vector<8x8xf32> to vector<8x8x1xf32>
      %cst_38 = arith.constant 3.125000e-02 : f32
      %72 = vector.broadcast %cst_38 : f32 to vector<8x8x1xf32>
      %73 = arith.mulf %71, %72 : vector<8x8x1xf32>
      %cst_39 = arith.constant 9.99999993E-9 : f32
      %74 = vector.broadcast %cst_39 : f32 to vector<8x8x1xf32>
      %75 = arith.addf %73, %74 : vector<8x8x1xf32>
      %76 = math.rsqrt %75 : vector<8x8x1xf32>
      %77 = vector.broadcast %76 : vector<8x8x1xf32> to vector<8x8x128xf32>
      %78 = arith.mulf %68, %77 : vector<8x8x128xf32>
      %79 = vector.shape_cast %55 : vector<1x128xf32> to vector<1x1x128xf32>
      %80 = vector.broadcast %79 : vector<1x1x128xf32> to vector<8x8x128xf32>
      %81 = arith.mulf %78, %80 : vector<8x8x128xf32>
      %82 = vector.shape_cast %58 : vector<1x128xf32> to vector<1x1x128xf32>
      %83 = vector.broadcast %82 : vector<1x1x128xf32> to vector<8x8x128xf32>
      %84 = arith.addf %81, %83 : vector<8x8x128xf32>
      %85 = vector.shape_cast %84 : vector<8x8x128xf32> to vector<64x128xf32>
      %86 = arith.index_cast %arg22 : i32 to index
      %c0_40 = arith.constant 0 : index
      %c0_41 = arith.constant 0 : index
      %87 = vector.load %arg6[%86, %c0_40, %c0_41] : memref<2x128x128xbf16, #tpu.memory_space<vmem>>, vector<1x128x128xbf16>
      %88 = vector.shape_cast %87 : vector<1x128x128xbf16> to vector<128x128xbf16>
      %89 = arith.index_cast %arg22 : i32 to index
      %c0_42 = arith.constant 0 : index
      %c0_43 = arith.constant 0 : index
      %90 = vector.load %arg7[%89, %c0_42, %c0_43] : memref<2x1x128xf32, #tpu.memory_space<vmem>>, vector<1x1x128xf32>
      %91 = vector.shape_cast %90 : vector<1x1x128xf32> to vector<1x128xf32>
      %92 = arith.truncf %85 : vector<64x128xf32> to vector<64x128xbf16>
      %cst_44 = arith.constant dense<0.000000e+00> : vector<64x128xf32>
      %93 = tpu.matmul %92, %88, %cst_44 {dimension_numbers = #tpu.dot_dimension_numbers<[1], [0], [0], [1], [0, 0, 1, 1], [], []>} : vector<64x128xbf16>, vector<128x128xbf16>, vector<64x128xf32> -> vector<64x128xf32>
      %94 = vector.broadcast %91 : vector<1x128xf32> to vector<64x128xf32>
      %95 = arith.addf %93, %94 : vector<64x128xf32>
      %96 = vector.shape_cast %arg23 : vector<8x8x128xf32> to vector<64x128xf32>
      %97 = arith.index_cast %arg22 : i32 to index
      %c0_45 = arith.constant 0 : index
      %c0_46 = arith.constant 0 : index
      %98 = vector.load %arg8[%97, %c0_45, %c0_46] : memref<2x128x256xbf16, #tpu.memory_space<vmem>>, vector<1x128x256xbf16>
      %99 = vector.shape_cast %98 : vector<1x128x256xbf16> to vector<128x256xbf16>
      %100 = arith.index_cast %arg22 : i32 to index
      %c0_47 = arith.constant 0 : index
      %c0_48 = arith.constant 0 : index
      %101 = vector.load %arg9[%100, %c0_47, %c0_48] : memref<2x1x256xf32, #tpu.memory_space<vmem>>, vector<1x1x256xf32>
      %102 = vector.shape_cast %101 : vector<1x1x256xf32> to vector<1x256xf32>
      %103 = arith.truncf %96 : vector<64x128xf32> to vector<64x128xbf16>
      %cst_49 = arith.constant dense<0.000000e+00> : vector<64x256xf32>
      %104 = tpu.matmul %103, %99, %cst_49 {dimension_numbers = #tpu.dot_dimension_numbers<[1], [0], [0], [1], [0, 0, 1, 1], [], []>} : vector<64x128xbf16>, vector<128x256xbf16>, vector<64x256xf32> -> vector<64x256xf32>
      %105 = vector.broadcast %102 : vector<1x256xf32> to vector<64x256xf32>
      %106 = arith.addf %104, %105 : vector<64x256xf32>
      %107 = vector.shape_cast %95 : vector<64x128xf32> to vector<8x8x128xf32>
      %108 = vector.extract_strided_slice %106 {offsets = [0, 0], sizes = [64, 128], strides = [1, 1]} : vector<64x256xf32> to vector<64x128xf32>
      %109 = vector.shape_cast %108 : vector<64x128xf32> to vector<8x8x128xf32>
      %110 = vector.extract_strided_slice %106 {offsets = [0, 128], sizes = [64, 128], strides = [1, 1]} : vector<64x256xf32> to vector<64x128xf32>
      %111 = vector.shape_cast %110 : vector<64x128xf32> to vector<8x8x128xf32>
      %112 = arith.truncf %107 : vector<8x8x128xf32> to vector<8x8x128xbf16>
      %113 = arith.truncf %109 : vector<8x8x128xf32> to vector<8x8x128xbf16>
      "tpu.trace_start"() <{level = 10 : i32, message = "bqd,bkd->bqk"}> : () -> ()
      %cst_50 = arith.constant dense<0.000000e+00> : vector<8x8x8xf32>
      %114 = tpu.matmul %112, %113, %cst_50 {dimension_numbers = #tpu.dot_dimension_numbers<[2], [2], [1], [1], [0, 0, 0, 1, 1, 1], [0], [0]>} : vector<8x8x128xbf16>, vector<8x8x128xbf16>, vector<8x8x8xf32> -> vector<8x8x8xf32>
      %cst_51 = arith.constant -1.000000e+30 : f32
      "tpu.trace_stop"() : () -> ()
      %115 = vector.shape_cast %8 : vector<1x8x8xi1> to vector<1x8x8xi1>
      %116 = vector.broadcast %115 : vector<1x8x8xi1> to vector<8x8x8xi1>
      %117 = vector.broadcast %cst_51 : f32 to vector<8x8x8xf32>
      %118 = arith.select %116, %114, %117 : vector<8x8x8xi1>, vector<8x8x8xf32>
      %cst_52 = arith.constant dense<0xFF800000> : vector<8x8xf32>
      %119 = vector.multi_reduction <maximumf>, %118, %cst_52 [2] : vector<8x8x8xf32> to vector<8x8xf32>
      %120 = vector.shape_cast %119 : vector<8x8xf32> to vector<8x8x1xf32>
      %121 = vector.broadcast %120 : vector<8x8x1xf32> to vector<8x8x8xf32>
      %122 = arith.subf %118, %121 : vector<8x8x8xf32>
      %123 = math.exp %122 : vector<8x8x8xf32>
      %cst_53 = arith.constant dense<0.000000e+00> : vector<8x8xf32>
      %124 = vector.multi_reduction <add>, %123, %cst_53 [2] : vector<8x8x8xf32> to vector<8x8xf32>
      %125 = vector.shape_cast %124 : vector<8x8xf32> to vector<8x8x1xf32>
      %126 = tpu.reciprocal %125 {approx = true} : vector<8x8x1xf32> -> vector<8x8x1xf32>
      %127 = vector.broadcast %126 : vector<8x8x1xf32> to vector<8x8x8xf32>
      %128 = arith.mulf %123, %127 : vector<8x8x8xf32>
      %129 = arith.truncf %128 : vector<8x8x8xf32> to vector<8x8x8xbf16>
      %130 = arith.truncf %111 : vector<8x8x128xf32> to vector<8x8x128xbf16>
      "tpu.trace_start"() <{level = 10 : i32, message = "bqk,bkd->bqd"}> : () -> ()
      %cst_54 = arith.constant dense<0.000000e+00> : vector<8x8x128xf32>
      %131 = tpu.matmul %129, %130, %cst_54 {dimension_numbers = #tpu.dot_dimension_numbers<[2], [1], [1], [2], [0, 0, 0, 1, 1, 2], [0], [0]>} : vector<8x8x8xbf16>, vector<8x8x128xbf16>, vector<8x8x128xf32> -> vector<8x8x128xf32>
      "tpu.trace_stop"() : () -> ()
      %132 = vector.shape_cast %131 : vector<8x8x128xf32> to vector<64x128xf32>
      %133 = arith.index_cast %arg22 : i32 to index
      %c0_55 = arith.constant 0 : index
      %c0_56 = arith.constant 0 : index
      %134 = vector.load %arg10[%133, %c0_55, %c0_56] : memref<2x128x128xbf16, #tpu.memory_space<vmem>>, vector<1x128x128xbf16>
      %135 = vector.shape_cast %134 : vector<1x128x128xbf16> to vector<128x128xbf16>
      %136 = arith.index_cast %arg22 : i32 to index
      %c0_57 = arith.constant 0 : index
      %c0_58 = arith.constant 0 : index
      %137 = vector.load %arg11[%136, %c0_57, %c0_58] : memref<2x1x128xf32, #tpu.memory_space<vmem>>, vector<1x1x128xf32>
      %138 = vector.shape_cast %137 : vector<1x1x128xf32> to vector<1x128xf32>
      %139 = arith.truncf %132 : vector<64x128xf32> to vector<64x128xbf16>
      %cst_59 = arith.constant dense<0.000000e+00> : vector<64x128xf32>
      %140 = tpu.matmul %139, %135, %cst_59 {dimension_numbers = #tpu.dot_dimension_numbers<[1], [0], [0], [1], [0, 0, 1, 1], [], []>} : vector<64x128xbf16>, vector<128x128xbf16>, vector<64x128xf32> -> vector<64x128xf32>
      %141 = vector.broadcast %138 : vector<1x128xf32> to vector<64x128xf32>
      %142 = arith.addf %140, %141 : vector<64x128xf32>
      %143 = vector.shape_cast %142 : vector<64x128xf32> to vector<8x8x128xf32>
      %144 = arith.addf %84, %143 : vector<8x8x128xf32>
      %145 = arith.index_cast %arg22 : i32 to index
      %c0_60 = arith.constant 0 : index
      %c0_61 = arith.constant 0 : index
      %146 = vector.load %arg12[%145, %c0_60, %c0_61] : memref<2x1x128xf32, #tpu.memory_space<vmem>>, vector<1x1x128xf32>
      %147 = vector.shape_cast %146 : vector<1x1x128xf32> to vector<1x128xf32>
      %148 = arith.index_cast %arg22 : i32 to index
      %c0_62 = arith.constant 0 : index
      %c0_63 = arith.constant 0 : index
      %149 = vector.load %arg13[%148, %c0_62, %c0_63] : memref<2x1x128xf32, #tpu.memory_space<vmem>>, vector<1x1x128xf32>
      %150 = vector.shape_cast %149 : vector<1x1x128xf32> to vector<1x128xf32>
      %cst_64 = arith.constant dense<0.000000e+00> : vector<8x8xf32>
      %151 = vector.multi_reduction <add>, %144, %cst_64 [2] : vector<8x8x128xf32> to vector<8x8xf32>
      %152 = vector.shape_cast %151 : vector<8x8xf32> to vector<8x8x1xf32>
      %cst_65 = arith.constant 3.125000e-02 : f32
      %153 = vector.broadcast %cst_65 : f32 to vector<8x8x1xf32>
      %154 = arith.mulf %152, %153 : vector<8x8x1xf32>
      %155 = vector.broadcast %154 : vector<8x8x1xf32> to vector<8x8x128xf32>
      %156 = arith.subf %144, %155 : vector<8x8x128xf32>
      %cst_66 = arith.constant 0.000000e+00 : f32
      %157 = vector.shape_cast %4 : vector<1x1x128xi1> to vector<1x1x128xi1>
      %158 = vector.broadcast %157 : vector<1x1x128xi1> to vector<8x8x128xi1>
      %159 = vector.broadcast %cst_66 : f32 to vector<8x8x128xf32>
      %160 = arith.select %158, %156, %159 : vector<8x8x128xi1>, vector<8x8x128xf32>
      %161 = arith.mulf %160, %160 : vector<8x8x128xf32>
      %cst_67 = arith.constant dense<0.000000e+00> : vector<8x8xf32>
      %162 = vector.multi_reduction <add>, %161, %cst_67 [2] : vector<8x8x128xf32> to vector<8x8xf32>
      %163 = vector.shape_cast %162 : vector<8x8xf32> to vector<8x8x1xf32>
      %cst_68 = arith.constant 3.125000e-02 : f32
      %164 = vector.broadcast %cst_68 : f32 to vector<8x8x1xf32>
      %165 = arith.mulf %163, %164 : vector<8x8x1xf32>
      %cst_69 = arith.constant 9.99999993E-9 : f32
      %166 = vector.broadcast %cst_69 : f32 to vector<8x8x1xf32>
      %167 = arith.addf %165, %166 : vector<8x8x1xf32>
      %168 = math.rsqrt %167 : vector<8x8x1xf32>
      %169 = vector.broadcast %168 : vector<8x8x1xf32> to vector<8x8x128xf32>
      %170 = arith.mulf %160, %169 : vector<8x8x128xf32>
      %171 = vector.shape_cast %147 : vector<1x128xf32> to vector<1x1x128xf32>
      %172 = vector.broadcast %171 : vector<1x1x128xf32> to vector<8x8x128xf32>
      %173 = arith.mulf %170, %172 : vector<8x8x128xf32>
      %174 = vector.shape_cast %150 : vector<1x128xf32> to vector<1x1x128xf32>
      %175 = vector.broadcast %174 : vector<1x1x128xf32> to vector<8x8x128xf32>
      %176 = arith.addf %173, %175 : vector<8x8x128xf32>
      %177 = vector.shape_cast %176 : vector<8x8x128xf32> to vector<64x128xf32>
      %178 = arith.index_cast %arg22 : i32 to index
      %c0_70 = arith.constant 0 : index
      %c0_71 = arith.constant 0 : index
      %179 = vector.load %arg14[%178, %c0_70, %c0_71] : memref<2x128x128xbf16, #tpu.memory_space<vmem>>, vector<1x128x128xbf16>
      %180 = vector.shape_cast %179 : vector<1x128x128xbf16> to vector<128x128xbf16>
      %181 = arith.index_cast %arg22 : i32 to index
      %c0_72 = arith.constant 0 : index
      %c0_73 = arith.constant 0 : index
      %182 = vector.load %arg15[%181, %c0_72, %c0_73] : memref<2x1x128xf32, #tpu.memory_space<vmem>>, vector<1x1x128xf32>
      %183 = vector.shape_cast %182 : vector<1x1x128xf32> to vector<1x128xf32>
      %184 = arith.truncf %177 : vector<64x128xf32> to vector<64x128xbf16>
      %cst_74 = arith.constant dense<0.000000e+00> : vector<64x128xf32>
      %185 = tpu.matmul %184, %180, %cst_74 {dimension_numbers = #tpu.dot_dimension_numbers<[1], [0], [0], [1], [0, 0, 1, 1], [], []>} : vector<64x128xbf16>, vector<128x128xbf16>, vector<64x128xf32> -> vector<64x128xf32>
      %186 = vector.broadcast %183 : vector<1x128xf32> to vector<64x128xf32>
      %187 = arith.addf %185, %186 : vector<64x128xf32>
      %cst_75 = arith.constant 0.000000e+00 : f32
      %188 = vector.broadcast %cst_75 : f32 to vector<64x128xf32>
      %189 = arith.maximumf %187, %188 : vector<64x128xf32>
      %190 = arith.index_cast %arg22 : i32 to index
      %c0_76 = arith.constant 0 : index
      %c0_77 = arith.constant 0 : index
      %191 = vector.load %arg16[%190, %c0_76, %c0_77] : memref<2x128x128xbf16, #tpu.memory_space<vmem>>, vector<1x128x128xbf16>
      %192 = vector.shape_cast %191 : vector<1x128x128xbf16> to vector<128x128xbf16>
      %193 = arith.index_cast %arg22 : i32 to index
      %c0_78 = arith.constant 0 : index
      %c0_79 = arith.constant 0 : index
      %194 = vector.load %arg17[%193, %c0_78, %c0_79] : memref<2x1x128xf32, #tpu.memory_space<vmem>>, vector<1x1x128xf32>
      %195 = vector.shape_cast %194 : vector<1x1x128xf32> to vector<1x128xf32>
      %196 = arith.truncf %189 : vector<64x128xf32> to vector<64x128xbf16>
      %cst_80 = arith.constant dense<0.000000e+00> : vector<64x128xf32>
      %197 = tpu.matmul %196, %192, %cst_80 {dimension_numbers = #tpu.dot_dimension_numbers<[1], [0], [0], [1], [0, 0, 1, 1], [], []>} : vector<64x128xbf16>, vector<128x128xbf16>, vector<64x128xf32> -> vector<64x128xf32>
      %198 = vector.broadcast %195 : vector<1x128xf32> to vector<64x128xf32>
      %199 = arith.addf %197, %198 : vector<64x128xf32>
      %200 = vector.shape_cast %199 : vector<64x128xf32> to vector<8x8x128xf32>
      %201 = arith.addf %176, %200 : vector<8x8x128xf32>
      scf.yield %201 : vector<8x8x128xf32>
    }
    %c2_i32_2 = arith.constant 2 : i32
    %c0_3 = arith.constant 0 : index
    %c0_4 = arith.constant 0 : index
    %11 = vector.load %arg18[%c0_3, %c0_4] : memref<1x128xf32, #tpu.memory_space<vmem>>, vector<1x128xf32>
    %c0_5 = arith.constant 0 : index
    %c0_6 = arith.constant 0 : index
    %12 = vector.load %arg19[%c0_5, %c0_6] : memref<1x128xf32, #tpu.memory_space<vmem>>, vector<1x128xf32>
    %cst = arith.constant dense<0.000000e+00> : vector<8x8xf32>
    %13 = vector.multi_reduction <add>, %10, %cst [2] : vector<8x8x128xf32> to vector<8x8xf32>
    %14 = vector.shape_cast %13 : vector<8x8xf32> to vector<8x8x1xf32>
    %cst_7 = arith.constant 3.125000e-02 : f32
    %15 = vector.broadcast %cst_7 : f32 to vector<8x8x1xf32>
    %16 = arith.mulf %14, %15 : vector<8x8x1xf32>
    %17 = vector.broadcast %16 : vector<8x8x1xf32> to vector<8x8x128xf32>
    %18 = arith.subf %10, %17 : vector<8x8x128xf32>
    %cst_8 = arith.constant 0.000000e+00 : f32
    %19 = vector.shape_cast %4 : vector<1x1x128xi1> to vector<1x1x128xi1>
    %20 = vector.broadcast %19 : vector<1x1x128xi1> to vector<8x8x128xi1>
    %21 = vector.broadcast %cst_8 : f32 to vector<8x8x128xf32>
    %22 = arith.select %20, %18, %21 : vector<8x8x128xi1>, vector<8x8x128xf32>
    %23 = arith.mulf %22, %22 : vector<8x8x128xf32>
    %cst_9 = arith.constant dense<0.000000e+00> : vector<8x8xf32>
    %24 = vector.multi_reduction <add>, %23, %cst_9 [2] : vector<8x8x128xf32> to vector<8x8xf32>
    %25 = vector.shape_cast %24 : vector<8x8xf32> to vector<8x8x1xf32>
    %cst_10 = arith.constant 3.125000e-02 : f32
    %26 = vector.broadcast %cst_10 : f32 to vector<8x8x1xf32>
    %27 = arith.mulf %25, %26 : vector<8x8x1xf32>
    %cst_11 = arith.constant 9.99999993E-9 : f32
    %28 = vector.broadcast %cst_11 : f32 to vector<8x8x1xf32>
    %29 = arith.addf %27, %28 : vector<8x8x1xf32>
    %30 = math.rsqrt %29 : vector<8x8x1xf32>
    %31 = vector.broadcast %30 : vector<8x8x1xf32> to vector<8x8x128xf32>
    %32 = arith.mulf %22, %31 : vector<8x8x128xf32>
    %33 = vector.shape_cast %11 : vector<1x128xf32> to vector<1x1x128xf32>
    %34 = vector.broadcast %33 : vector<1x1x128xf32> to vector<8x8x128xf32>
    %35 = arith.mulf %32, %34 : vector<8x8x128xf32>
    %36 = vector.shape_cast %12 : vector<1x128xf32> to vector<1x1x128xf32>
    %37 = vector.broadcast %36 : vector<1x1x128xf32> to vector<8x8x128xf32>
    %38 = arith.addf %35, %37 : vector<8x8x128xf32>
    %c0_12 = arith.constant 0 : index
    %c0_13 = arith.constant 0 : index
    %c0_14 = arith.constant 0 : index
    %39 = vector.load %arg2[%c0_12, %c0_13, %c0_14] : memref<8x8x128xbf16, #tpu.memory_space<vmem>>, vector<8x8x128xbf16>
    %40 = arith.extf %39 : vector<8x8x128xbf16> to vector<8x8x128xf32>
    %41 = arith.mulf %38, %40 : vector<8x8x128xf32>
    %cst_15 = arith.constant dense<0.000000e+00> : vector<8x8xf32>
    %42 = vector.multi_reduction <add>, %41, %cst_15 [2] : vector<8x8x128xf32> to vector<8x8xf32>
    %c0_16 = arith.constant 0 : index
    %c0_17 = arith.constant 0 : index
    %c0_18 = arith.constant 0 : index
    %43 = vector.load %arg3[%c0_16, %c0_17, %c0_18] : memref<8x8x128xbf16, #tpu.memory_space<vmem>>, vector<8x8x128xbf16>
    %44 = arith.extf %43 : vector<8x8x128xbf16> to vector<8x8x128xf32>
    %45 = arith.mulf %38, %44 : vector<8x8x128xf32>
    %cst_19 = arith.constant dense<0.000000e+00> : vector<8x8xf32>
    %46 = vector.multi_reduction <add>, %45, %cst_19 [2] : vector<8x8x128xf32> to vector<8x8xf32>
    %cst_20 = arith.constant 0.000000e+00 : f32
    %47 = vector.broadcast %cst_20 : f32 to vector<8x128xf32>
    %c0_21 = arith.constant 0 : index
    %c0_22 = arith.constant 0 : index
    %48 = vector.load %arg20[%c0_21, %c0_22] : memref<8x128xf32, #tpu.memory_space<vmem>>, vector<8x128xf32>
    tpu.vector_store %arg20[%c0_21, %c0_22], %47 {strides = array<i32>} : memref<8x128xf32, #tpu.memory_space<vmem>>, vector<8x128xf32>,
    %cst_23 = arith.constant 0.000000e+00 : f32
    %49 = vector.broadcast %cst_23 : f32 to vector<8x128xf32>
    %c0_24 = arith.constant 0 : index
    %c0_25 = arith.constant 0 : index
    %50 = vector.load %arg21[%c0_24, %c0_25] : memref<8x128xf32, #tpu.memory_space<vmem>>, vector<8x128xf32>
    tpu.vector_store %arg21[%c0_24, %c0_25], %49 {strides = array<i32>} : memref<8x128xf32, #tpu.memory_space<vmem>>, vector<8x128xf32>,
    %c0_26 = arith.constant 0 : index
    %c0_27 = arith.constant 0 : index
    %51 = vector.load %arg20[%c0_26, %c0_27] : memref<8x128xf32, #tpu.memory_space<vmem>>, vector<8x8xf32>
    tpu.vector_store %arg20[%c0_26, %c0_27], %42 {strides = array<i32>} : memref<8x128xf32, #tpu.memory_space<vmem>>, vector<8x8xf32>,
    %c0_28 = arith.constant 0 : index
    %c0_29 = arith.constant 0 : index
    %52 = vector.load %arg21[%c0_28, %c0_29] : memref<8x128xf32, #tpu.memory_space<vmem>>, vector<8x8xf32>
    tpu.vector_store %arg21[%c0_28, %c0_29], %46 {strides = array<i32>} : memref<8x128xf32, #tpu.memory_space<vmem>>, vector<8x8xf32>,
    return
  }
  func.func @transform_0(%arg0: i32) -> (i32, i32, i32) {
    %c0_i32 = arith.constant 0 : i32
    %c0_i32_0 = arith.constant 0 : i32
    %c0_i32_1 = arith.constant 0 : i32
    return %arg0, %c0_i32, %c0_i32_0 : i32, i32, i32
  }
  func.func @transform_1(%arg0: i32) -> (i32, i32, i32) {
    %c0_i32 = arith.constant 0 : i32
    %c0_i32_0 = arith.constant 0 : i32
    %c0_i32_1 = arith.constant 0 : i32
    return %arg0, %c0_i32, %c0_i32_0 : i32, i32, i32
  }
  func.func @transform_2(%arg0: i32) -> (i32, i32, i32) {
    %c0_i32 = arith.constant 0 : i32
    %c0_i32_0 = arith.constant 0 : i32
    %c0_i32_1 = arith.constant 0 : i32
    return %arg0, %c0_i32, %c0_i32_0 : i32, i32, i32
  }
  func.func @transform_3(%arg0: i32) -> (i32, i32, i32) {
    %c0_i32 = arith.constant 0 : i32
    %c0_i32_0 = arith.constant 0 : i32
    %c0_i32_1 = arith.constant 0 : i32
    %c0_i32_2 = arith.constant 0 : i32
    return %c0_i32, %c0_i32_0, %c0_i32_1 : i32, i32, i32
  }
  func.func @transform_4(%arg0: i32) -> (i32, i32, i32) {
    %c0_i32 = arith.constant 0 : i32
    %c0_i32_0 = arith.constant 0 : i32
    %c0_i32_1 = arith.constant 0 : i32
    %c0_i32_2 = arith.constant 0 : i32
    return %c0_i32, %c0_i32_0, %c0_i32_1 : i32, i32, i32
  }
  func.func @transform_5(%arg0: i32) -> (i32, i32, i32) {
    %c0_i32 = arith.constant 0 : i32
    %c0_i32_0 = arith.constant 0 : i32
    %c0_i32_1 = arith.constant 0 : i32
    %c0_i32_2 = arith.constant 0 : i32
    return %c0_i32, %c0_i32_0, %c0_i32_1 : i32, i32, i32
  }
  func.func @transform_6(%arg0: i32) -> (i32, i32, i32) {
    %c0_i32 = arith.constant 0 : i32
    %c0_i32_0 = arith.constant 0 : i32
    %c0_i32_1 = arith.constant 0 : i32
    %c0_i32_2 = arith.constant 0 : i32
    return %c0_i32, %c0_i32_0, %c0_i32_1 : i32, i32, i32
  }
  func.func @transform_7(%arg0: i32) -> (i32, i32, i32) {
    %c0_i32 = arith.constant 0 : i32
    %c0_i32_0 = arith.constant 0 : i32
    %c0_i32_1 = arith.constant 0 : i32
    %c0_i32_2 = arith.constant 0 : i32
    return %c0_i32, %c0_i32_0, %c0_i32_1 : i32, i32, i32
  }
  func.func @transform_8(%arg0: i32) -> (i32, i32, i32) {
    %c0_i32 = arith.constant 0 : i32
    %c0_i32_0 = arith.constant 0 : i32
    %c0_i32_1 = arith.constant 0 : i32
    %c0_i32_2 = arith.constant 0 : i32
    return %c0_i32, %c0_i32_0, %c0_i32_1 : i32, i32, i32
  }
  func.func @transform_9(%arg0: i32) -> (i32, i32, i32) {
    %c0_i32 = arith.constant 0 : i32
    %c0_i32_0 = arith.constant 0 : i32
    %c0_i32_1 = arith.constant 0 : i32
    %c0_i32_2 = arith.constant 0 : i32
    return %c0_i32, %c0_i32_0, %c0_i32_1 : i32, i32, i32
  }
  func.func @transform_10(%arg0: i32) -> (i32, i32, i32) {
    %c0_i32 = arith.constant 0 : i32
    %c0_i32_0 = arith.constant 0 : i32
    %c0_i32_1 = arith.constant 0 : i32
    %c0_i32_2 = arith.constant 0 : i32
    return %c0_i32, %c0_i32_0, %c0_i32_1 : i32, i32, i32
  }
  func.func @transform_11(%arg0: i32) -> (i32, i32, i32) {
    %c0_i32 = arith.constant 0 : i32
    %c0_i32_0 = arith.constant 0 : i32
    %c0_i32_1 = arith.constant 0 : i32
    %c0_i32_2 = arith.constant 0 : i32
    return %c0_i32, %c0_i32_0, %c0_i32_1 : i32, i32, i32
  }
  func.func @transform_12(%arg0: i32) -> (i32, i32, i32) {
    %c0_i32 = arith.constant 0 : i32
    %c0_i32_0 = arith.constant 0 : i32
    %c0_i32_1 = arith.constant 0 : i32
    %c0_i32_2 = arith.constant 0 : i32
    return %c0_i32, %c0_i32_0, %c0_i32_1 : i32, i32, i32
  }
  func.func @transform_13(%arg0: i32) -> (i32, i32, i32) {
    %c0_i32 = arith.constant 0 : i32
    %c0_i32_0 = arith.constant 0 : i32
    %c0_i32_1 = arith.constant 0 : i32
    %c0_i32_2 = arith.constant 0 : i32
    return %c0_i32, %c0_i32_0, %c0_i32_1 : i32, i32, i32
  }
  func.func @transform_14(%arg0: i32) -> (i32, i32, i32) {
    %c0_i32 = arith.constant 0 : i32
    %c0_i32_0 = arith.constant 0 : i32
    %c0_i32_1 = arith.constant 0 : i32
    %c0_i32_2 = arith.constant 0 : i32
    return %c0_i32, %c0_i32_0, %c0_i32_1 : i32, i32, i32
  }
  func.func @transform_15(%arg0: i32) -> (i32, i32, i32) {
    %c0_i32 = arith.constant 0 : i32
    %c0_i32_0 = arith.constant 0 : i32
    %c0_i32_1 = arith.constant 0 : i32
    %c0_i32_2 = arith.constant 0 : i32
    return %c0_i32, %c0_i32_0, %c0_i32_1 : i32, i32, i32
  }
  func.func @transform_16(%arg0: i32) -> (i32, i32, i32) {
    %c0_i32 = arith.constant 0 : i32
    %c0_i32_0 = arith.constant 0 : i32
    %c0_i32_1 = arith.constant 0 : i32
    %c0_i32_2 = arith.constant 0 : i32
    return %c0_i32, %c0_i32_0, %c0_i32_1 : i32, i32, i32
  }
  func.func @transform_17(%arg0: i32) -> (i32, i32) {
    %c0_i32 = arith.constant 0 : i32
    %c0_i32_0 = arith.constant 0 : i32
    %c0_i32_1 = arith.constant 0 : i32
    return %c0_i32, %c0_i32_0 : i32, i32
  }
  func.func @transform_18(%arg0: i32) -> (i32, i32) {
    %c0_i32 = arith.constant 0 : i32
    %c0_i32_0 = arith.constant 0 : i32
    %c0_i32_1 = arith.constant 0 : i32
    return %c0_i32, %c0_i32_0 : i32, i32
  }
  func.func @transform_19(%arg0: i32) -> (i32, i32) {
    %c0_i32 = arith.constant 0 : i32
    %c0_i32_0 = arith.constant 0 : i32
    return %arg0, %c0_i32 : i32, i32
  }
  func.func @transform_20(%arg0: i32) -> (i32, i32) {
    %c0_i32 = arith.constant 0 : i32
    %c0_i32_0 = arith.constant 0 : i32
    return %arg0, %c0_i32 : i32, i32
  }
}

</mosaic_0001>

<llo_original>
// kernel: sasrec_forward.2
$region0: #{sasrec_forward.2}
  #allocation0 [shape = 'u32[]', space=smem, size = 0x4, offset = 0x4, fixed_abs, tag = 'smem constant byte address 0x4 - core index']
  #allocation1 [shape = 'u32[144,128]{1,0:T(1,128)}', space=vmem, size = 0x12000, scoped, tag = 'internal scratch']
  #allocation2 [shape = 'f32[128,128]{1,0:T(8,128)}', space=vmem, size = 0x10000, scoped, tag = 'scratch operand']
  %s0 = inlined_call_operand.vmem [shape: bf16[128,128], index: 0, kind: input, shape index: {}]
  %s1 = inlined_call_operand.vmem [shape: bf16[128,128], index: 1, kind: input, shape index: {}]
  %s2 = inlined_call_operand.vmem [shape: f32[128,128], index: 2, kind: input, shape index: {}]
  %s3 = inlined_call_operand.vmem [shape: bf16[128,128], index: 3, kind: input, shape index: {}]
  %s4 = inlined_call_operand.vmem [shape: f32[1,128], index: 4, kind: input, shape index: {}]
  %s5 = inlined_call_operand.vmem [shape: f32[128,128], index: 5, kind: output, shape index: {}]
  %s6 = sld [smem:[#allocation0]]
  $region38: #{sasrec_forward.2} parent=0
    _
  %s8 = ssub.s32 1, %s6
  %s9 = scalar_select 0, %s8, %s6
  // Predicated region
  $region2: #{sasrec_forward.2} parent=0 // pred_check
    _
  $region3: #{sasrec_forward.2} parent=0 // pred_check_branch
    %11 = sbr.rel (0) target = $region5
  $region4: #{sasrec_forward.2} parent=0 // pred_region
    _
  $region5: #{sasrec_forward.2} parent=0 // pred_fallthru
    _
  // Predicated region
  $region6: #{sasrec_forward.2} parent=0 // pred_check
    _
  $region7: #{sasrec_forward.2} parent=0 // pred_check_branch
    %13 = sbr.rel (0) target = $region9
  $region8: #{sasrec_forward.2} parent=0 // pred_region
    _
  $region9: #{sasrec_forward.2} parent=0 // pred_fallthru
    _
  // Predicated region
  $region10: #{sasrec_forward.2} parent=0 // pred_check
    _
  $region11: #{sasrec_forward.2} parent=0 // pred_check_branch
    %15 = sbr.rel (0) target = $region13
  $region12: #{sasrec_forward.2} parent=0 // pred_region
    _
  $region13: #{sasrec_forward.2} parent=0 // pred_fallthru
    _
  // Predicated region
  $region14: #{sasrec_forward.2} parent=0 // pred_check
    _
  $region15: #{sasrec_forward.2} parent=0 // pred_check_branch
    %17 = sbr.rel (0) target = $region17
  $region16: #{sasrec_forward.2} parent=0 // pred_region
    _
  $region17: #{sasrec_forward.2} parent=0 // pred_fallthru
    _
  // Predicated region
  $region18: #{sasrec_forward.2} parent=0 // pred_check
    _
  $region19: #{sasrec_forward.2} parent=0 // pred_check_branch
    %19 = sbr.rel (0) target = $region21
  $region20: #{sasrec_forward.2} parent=0 // pred_region
    _
  $region21: #{sasrec_forward.2} parent=0 // pred_fallthru
    _
  %p21 = scmp.eq.s32.totalorder 0, 0
  // Predicated region
  $region22: #{sasrec_forward.2} parent=0 // pred_check
    %p22 = pneg %p21
  $region23: #{sasrec_forward.2} parent=0 // pred_check_branch
    %24 = sbr.rel (%p22) target = $region25
  $region24: #{sasrec_forward.2} parent=0 // pred_region
    %25 = vst [vmem:[#allocation2] sm:$0xff] 0.0
    %26 = vst [vmem:[#allocation2 + $0x8] sm:$0xff] 0.0
    %27 = vst [vmem:[#allocation2 + $0x10] sm:$0xff] 0.0
    %28 = vst [vmem:[#allocation2 + $0x18] sm:$0xff] 0.0
    %29 = vst [vmem:[#allocation2 + $0x20] sm:$0xff] 0.0
    %30 = vst [vmem:[#allocation2 + $0x28] sm:$0xff] 0.0
    %31 = vst [vmem:[#allocation2 + $0x30] sm:$0xff] 0.0
    %32 = vst [vmem:[#allocation2 + $0x38] sm:$0xff] 0.0
    %33 = vst [vmem:[#allocation2 + $0x40] sm:$0xff] 0.0
    %34 = vst [vmem:[#allocation2 + $0x48] sm:$0xff] 0.0
    %35 = vst [vmem:[#allocation2 + $0x50] sm:$0xff] 0.0
    %36 = vst [vmem:[#allocation2 + $0x58] sm:$0xff] 0.0
    %37 = vst [vmem:[#allocation2 + $0x60] sm:$0xff] 0.0
    %38 = vst [vmem:[#allocation2 + $0x68] sm:$0xff] 0.0
    %39 = vst [vmem:[#allocation2 + $0x70] sm:$0xff] 0.0
    %40 = vst [vmem:[#allocation2 + $0x78] sm:$0xff] 0.0
  $region25: #{sasrec_forward.2} parent=0 // pred_fallthru
    _
  %v41 = vld [vmem:[#allocation2] sm:$0xff]
  %v42 = vld [vmem:[#allocation2 + $0x8] sm:$0xff]
  %v43 = vld [vmem:[#allocation2 + $0x10] sm:$0xff]
  %v44 = vld [vmem:[#allocation2 + $0x18] sm:$0xff]
  %v45 = vld [vmem:[#allocation2 + $0x20] sm:$0xff]
  %v46 = vld [vmem:[#allocation2 + $0x28] sm:$0xff]
  %v47 = vld [vmem:[#allocation2 + $0x30] sm:$0xff]
  %v48 = vld [vmem:[#allocation2 + $0x38] sm:$0xff]
  %v49 = vld [vmem:[#allocation2 + $0x40] sm:$0xff]
  %v50 = vld [vmem:[#allocation2 + $0x48] sm:$0xff]
  %v51 = vld [vmem:[#allocation2 + $0x50] sm:$0xff]
  %v52 = vld [vmem:[#allocation2 + $0x58] sm:$0xff]
  %v53 = vld [vmem:[#allocation2 + $0x60] sm:$0xff]
  %v54 = vld [vmem:[#allocation2 + $0x68] sm:$0xff]
  %v55 = vld [vmem:[#allocation2 + $0x70] sm:$0xff]
  %v56 = vld [vmem:[#allocation2 + $0x78] sm:$0xff]
  %v57 = vld [vmem:[%s0] sm:$0xf]
  %v58 = vld [vmem:[%s0 + $0x4] sm:$0xf]
  %v59 = vld [vmem:[%s0 + $0x8] sm:$0xf]
  %v60 = vld [vmem:[%s0 + $0xc] sm:$0xf]
  %v61 = vld [vmem:[%s0 + $0x10] sm:$0xf]
  %v62 = vld [vmem:[%s0 + $0x14] sm:$0xf]
  %v63 = vld [vmem:[%s0 + $0x18] sm:$0xf]
  %v64 = vld [vmem:[%s0 + $0x1c] sm:$0xf]
  %v65 = vld [vmem:[%s0 + $0x20] sm:$0xf]
  %v66 = vld [vmem:[%s0 + $0x24] sm:$0xf]
  %v67 = vld [vmem:[%s0 + $0x28] sm:$0xf]
  %v68 = vld [vmem:[%s0 + $0x2c] sm:$0xf]
  %v69 = vld [vmem:[%s0 + $0x30] sm:$0xf]
  %v70 = vld [vmem:[%s0 + $0x34] sm:$0xf]
  %v71 = vld [vmem:[%s0 + $0x38] sm:$0xf]
  %v72 = vld [vmem:[%s0 + $0x3c] sm:$0xf]
  %v73 = vld [vmem:[%s1] sm:$0xf]
  %v74 = vld [vmem:[%s1 + $0x4] sm:$0xf]
  %v75 = vld [vmem:[%s1 + $0x8] sm:$0xf]
  %v76 = vld [vmem:[%s1 + $0xc] sm:$0xf]
  %v77 = vld [vmem:[%s1 + $0x10] sm:$0xf]
  %v78 = vld [vmem:[%s1 + $0x14] sm:$0xf]
  %v79 = vld [vmem:[%s1 + $0x18] sm:$0xf]
  %v80 = vld [vmem:[%s1 + $0x1c] sm:$0xf]
  %v81 = vld [vmem:[%s1 + $0x20] sm:$0xf]
  %v82 = vld [vmem:[%s1 + $0x24] sm:$0xf]
  %v83 = vld [vmem:[%s1 + $0x28] sm:$0xf]
  %v84 = vld [vmem:[%s1 + $0x2c] sm:$0xf]
  %v85 = vld [vmem:[%s1 + $0x30] sm:$0xf]
  %v86 = vld [vmem:[%s1 + $0x34] sm:$0xf]
  %v87 = vld [vmem:[%s1 + $0x38] sm:$0xf]
  %v88 = vld [vmem:[%s1 + $0x3c] sm:$0xf]
  %v105 = vunpack.c.l.b16 %v57
  %v106 = vunpack.c.l.b16 %v58
  %v107 = vunpack.c.l.b16 %v59
  %v108 = vunpack.c.l.b16 %v60
  %v109 = vunpack.c.l.b16 %v61
  %v110 = vunpack.c.l.b16 %v62
  %v111 = vunpack.c.l.b16 %v63
  %v112 = vunpack.c.l.b16 %v64
  %v113 = vunpack.c.l.b16 %v65
  %v114 = vunpack.c.l.b16 %v66
  %v115 = vunpack.c.l.b16 %v67
  %v116 = vunpack.c.l.b16 %v68
  %v117 = vunpack.c.l.b16 %v69
  %v118 = vunpack.c.l.b16 %v70
  %v119 = vunpack.c.l.b16 %v71
  %v120 = vunpack.c.l.b16 %v72
  %v121 = vpack.c.b16 %v106, %v105
  %v122 = vpack.c.b16 %v108, %v107
  %v123 = vpack.c.b16 %v110, %v109
  %v124 = vpack.c.b16 %v112, %v111
  %v125 = vpack.c.b16 %v114, %v113
  %v126 = vpack.c.b16 %v116, %v115
  %v127 = vpack.c.b16 %v118, %v117
  %v128 = vpack.c.b16 %v120, %v119
  %v153 = vunpack.c.l.b16 %v73
  %v154 = vunpack.c.l.b16 %v74
  %v155 = vunpack.c.l.b16 %v75
  %v156 = vunpack.c.l.b16 %v76
  %v157 = vunpack.c.l.b16 %v77
  %v158 = vunpack.c.l.b16 %v78
  %v159 = vunpack.c.l.b16 %v79
  %v160 = vunpack.c.l.b16 %v80
  %v161 = vunpack.c.l.b16 %v81
  %v162 = vunpack.c.l.b16 %v82
  %v163 = vunpack.c.l.b16 %v83
  %v164 = vunpack.c.l.b16 %v84
  %v165 = vunpack.c.l.b16 %v85
  %v166 = vunpack.c.l.b16 %v86
  %v167 = vunpack.c.l.b16 %v87
  %v168 = vunpack.c.l.b16 %v88
  %v169 = vpack.c.b16 %v154, %v153
  %v170 = vpack.c.b16 %v156, %v155
  %v171 = vpack.c.b16 %v158, %v157
  %v172 = vpack.c.b16 %v160, %v159
  %v173 = vpack.c.b16 %v162, %v161
  %v174 = vpack.c.b16 %v164, %v163
  %v175 = vpack.c.b16 %v166, %v165
  %v176 = vpack.c.b16 %v168, %v167
  %185 = vmatprep.subr.bf16.mxu0 0
  %186 = vmatpush1.bf16.msra.mxu0 %v169
  %187 = vmatprep.subr.bf16.mxu0 0
  %188 = vmatpush1.bf16.msra.mxu0 %v170
  %189 = vmatprep.subr.bf16.mxu0 0
  %190 = vmatpush1.bf16.msra.mxu0 %v171
  %191 = vmatprep.subr.bf16.mxu0 0
  %192 = vmatpush1.bf16.msra.mxu0 %v172
  %193 = vmatprep.subr.bf16.mxu0 0
  %194 = vmatpush1.bf16.msra.mxu0 %v173
  %195 = vmatprep.subr.bf16.mxu0 0
  %196 = vmatpush1.bf16.msra.mxu0 %v174
  %197 = vmatprep.subr.bf16.mxu0 0
  %198 = vmatpush1.bf16.msra.mxu0 %v175
  %199 = vmatprep.subr.bf16.mxu0 0
  %200 = vmatpush1.bf16.msra.mxu0 %v176
  %201 = vmatprep.subr.bf16.mxu0 0
  %202 = vmatpush1.bf16.msra.mxu0 0
  %203 = vmatprep.subr.bf16.mxu0 0
  %204 = vmatpush1.bf16.msra.mxu0 0
  %205 = vmatprep.subr.bf16.mxu0 0
  %206 = vmatpush1.bf16.msra.mxu0 0
  %207 = vmatprep.subr.bf16.mxu0 0
  %208 = vmatpush1.bf16.msra.mxu0 0
  %209 = vmatprep.subr.bf16.mxu0 0
  %210 = vmatpush1.bf16.msra.mxu0 0
  %211 = vmatprep.subr.bf16.mxu0 0
  %212 = vmatpush1.bf16.msra.mxu0 0
  %213 = vmatprep.subr.bf16.mxu0 0
  %214 = vmatpush1.bf16.msra.mxu0 0
  %215 = vmatprep.subr.bf16.mxu0 0
  %216 = vmatpush1.bf16.msra.mxu0 0
  %217 = vmatprep.mubr.bf16.mxu0 0
  %218 = vmatmul.mubr.bf16.gmra.mrb[0].mxu0 %v121
  %v219 = vpop.f32.mrb[0].mxu0
  %v220 = vadd.f32 0.0, %v219
  %v221 = vpop.f32.mrb[0].mxu0
  %v222 = vpop.f32.mrb[0].mxu0
  %v223 = vadd.f32 0.0, %v222
  %v224 = vpop.f32.mrb[0].mxu0
  %225 = vmatprep.mubr.bf16.mxu0 0
  %226 = vmatmul.mubr.bf16.gmra.mrb[0].mxu0 %v122
  %v227 = vpop.f32.mrb[0].mxu0
  %v228 = vadd.f32 0.0, %v227
  %v229 = vpop.f32.mrb[0].mxu0
  %v230 = vpop.f32.mrb[0].mxu0
  %v231 = vadd.f32 0.0, %v230
  %v232 = vpop.f32.mrb[0].mxu0
  %233 = vmatprep.mubr.bf16.mxu0 0
  %234 = vmatmul.mubr.bf16.gmra.mrb[0].mxu0 %v123
  %v235 = vpop.f32.mrb[0].mxu0
  %v236 = vadd.f32 0.0, %v235
  %v237 = vpop.f32.mrb[0].mxu0
  %v238 = vpop.f32.mrb[0].mxu0
  %v239 = vadd.f32 0.0, %v238
  %v240 = vpop.f32.mrb[0].mxu0
  %241 = vmatprep.mubr.bf16.mxu0 0
  %242 = vmatmul.mubr.bf16.gmra.mrb[0].mxu0 %v124
  %v243 = vpop.f32.mrb[0].mxu0
  %v244 = vadd.f32 0.0, %v243
  %v245 = vpop.f32.mrb[0].mxu0
  %v246 = vpop.f32.mrb[0].mxu0
  %v247 = vadd.f32 0.0, %v246
  %v248 = vpop.f32.mrb[0].mxu0
  %249 = vmatprep.mubr.bf16.mxu0 0
  %250 = vmatmul.mubr.bf16.gmra.mrb[0].mxu0 %v125
  %v251 = vpop.f32.mrb[0].mxu0
  %v252 = vadd.f32 0.0, %v251
  %v253 = vpop.f32.mrb[0].mxu0
  %v254 = vpop.f32.mrb[0].mxu0
  %v255 = vadd.f32 0.0, %v254
  %v256 = vpop.f32.mrb[0].mxu0
  %257 = vmatprep.mubr.bf16.mxu0 0
  %258 = vmatmul.mubr.bf16.gmra.mrb[0].mxu0 %v126
  %v259 = vpop.f32.mrb[0].mxu0
  %v260 = vadd.f32 0.0, %v259
  %v261 = vpop.f32.mrb[0].mxu0
  %v262 = vpop.f32.mrb[0].mxu0
  %v263 = vadd.f32 0.0, %v262
  %v264 = vpop.f32.mrb[0].mxu0
  %265 = vmatprep.mubr.bf16.mxu0 0
  %266 = vmatmul.mubr.bf16.gmra.mrb[0].mxu0 %v127
  %v267 = vpop.f32.mrb[0].mxu0
  %v268 = vadd.f32 0.0, %v267
  %v269 = vpop.f32.mrb[0].mxu0
  %v270 = vpop.f32.mrb[0].mxu0
  %v271 = vadd.f32 0.0, %v270
  %v272 = vpop.f32.mrb[0].mxu0
  %273 = vmatprep.mubr.bf16.mxu0 0
  %274 = vmatmul.mubr.bf16.gmra.mrb[0].mxu0 %v128
  %v275 = vpop.f32.mrb[0].mxu0
  %v276 = vadd.f32 0.0, %v275
  %v277 = vpop.f32.mrb[0].mxu0
  %v278 = vpop.f32.mrb[0].mxu0
  %v279 = vadd.f32 0.0, %v278
  %v280 = vpop.f32.mrb[0].mxu0
  %281 = vdwg.mxu0
  %v282 = vadd.f32 %v41, %v220
  %v283 = vadd.f32 %v42, %v223
  %v284 = vadd.f32 %v43, %v228
  %v285 = vadd.f32 %v44, %v231
  %v286 = vadd.f32 %v45, %v236
  %v287 = vadd.f32 %v46, %v239
  %v288 = vadd.f32 %v47, %v244
  %v289 = vadd.f32 %v48, %v247
  %v290 = vadd.f32 %v49, %v252
  %v291 = vadd.f32 %v50, %v255
  %v292 = vadd.f32 %v51, %v260
  %v293 = vadd.f32 %v52, %v263
  %v294 = vadd.f32 %v53, %v268
  %v295 = vadd.f32 %v54, %v271
  %v296 = vadd.f32 %v55, %v276
  %v297 = vadd.f32 %v56, %v279
  %298 = vst [vmem:[#allocation2] sm:$0xff] %v282
  %299 = vst [vmem:[#allocation2 + $0x8] sm:$0xff] %v283
  %300 = vst [vmem:[#allocation2 + $0x10] sm:$0xff] %v284
  %301 = vst [vmem:[#allocation2 + $0x18] sm:$0xff] %v285
  %302 = vst [vmem:[#allocation2 + $0x20] sm:$0xff] %v286
  %303 = vst [vmem:[#allocation2 + $0x28] sm:$0xff] %v287
  %304 = vst [vmem:[#allocation2 + $0x30] sm:$0xff] %v288
  %305 = vst [vmem:[#allocation2 + $0x38] sm:$0xff] %v289
  %306 = vst [vmem:[#allocation2 + $0x40] sm:$0xff] %v290
  %307 = vst [vmem:[#allocation2 + $0x48] sm:$0xff] %v291
  %308 = vst [vmem:[#allocation2 + $0x50] sm:$0xff] %v292
  %309 = vst [vmem:[#allocation2 + $0x58] sm:$0xff] %v293
  %310 = vst [vmem:[#allocation2 + $0x60] sm:$0xff] %v294
  %311 = vst [vmem:[#allocation2 + $0x68] sm:$0xff] %v295
  %312 = vst [vmem:[#allocation2 + $0x70] sm:$0xff] %v296
  %313 = vst [vmem:[#allocation2 + $0x78] sm:$0xff] %v297
  // Predicated region
  $region26: #{sasrec_forward.2} parent=0 // pred_check
    %p314 = pneg %p21
  $region27: #{sasrec_forward.2} parent=0 // pred_check_branch
    %316 = sbr.rel (%p314) target = $region29
  $region28: #{sasrec_forward.2} parent=0 // pred_region
    %v317 = vld [vmem:[%s2] sm:$0xff]
    %v318 = vld [vmem:[%s2 + $0x8] sm:$0xff]
    %v319 = vld [vmem:[%s2 + $0x10] sm:$0xff]
    %v320 = vld [vmem:[%s2 + $0x18] sm:$0xff]
    %v321 = vld [vmem:[%s2 + $0x20] sm:$0xff]
    %v322 = vld [vmem:[%s2 + $0x28] sm:$0xff]
    %v323 = vld [vmem:[%s2 + $0x30] sm:$0xff]
    %v324 = vld [vmem:[%s2 + $0x38] sm:$0xff]
    %v325 = vld [vmem:[%s2 + $0x40] sm:$0xff]
    %v326 = vld [vmem:[%s2 + $0x48] sm:$0xff]
    %v327 = vld [vmem:[%s2 + $0x50] sm:$0xff]
    %v328 = vld [vmem:[%s2 + $0x58] sm:$0xff]
    %v329 = vld [vmem:[%s2 + $0x60] sm:$0xff]
    %v330 = vld [vmem:[%s2 + $0x68] sm:$0xff]
    %v331 = vld [vmem:[%s2 + $0x70] sm:$0xff]
    %v332 = vld [vmem:[%s2 + $0x78] sm:$0xff]
    %v333 = vmul.f32 %v317, 0.1
    %v334 = vmul.f32 %v318, 0.1
    %v335 = vmul.f32 %v319, 0.1
    %v336 = vmul.f32 %v320, 0.1
    %v337 = vmul.f32 %v321, 0.1
    %v338 = vmul.f32 %v322, 0.1
    %v339 = vmul.f32 %v323, 0.1
    %v340 = vmul.f32 %v324, 0.1
    %v341 = vmul.f32 %v325, 0.1
    %v342 = vmul.f32 %v326, 0.1
    %v343 = vmul.f32 %v327, 0.1
    %v344 = vmul.f32 %v328, 0.1
    %v345 = vmul.f32 %v329, 0.1
    %v346 = vmul.f32 %v330, 0.1
    %v347 = vmul.f32 %v331, 0.1
    %v348 = vmul.f32 %v332, 0.1
    %v349 = vld [vmem:[#allocation2] sm:$0xff]
    %v350 = vld [vmem:[#allocation2 + $0x8] sm:$0xff]
    %v351 = vld [vmem:[#allocation2 + $0x10] sm:$0xff]
    %v352 = vld [vmem:[#allocation2 + $0x18] sm:$0xff]
    %v353 = vld [vmem:[#allocation2 + $0x20] sm:$0xff]
    %v354 = vld [vmem:[#allocation2 + $0x28] sm:$0xff]
    %v355 = vld [vmem:[#allocation2 + $0x30] sm:$0xff]
    %v356 = vld [vmem:[#allocation2 + $0x38] sm:$0xff]
    %v357 = vld [vmem:[#allocation2 + $0x40] sm:$0xff]
    %v358 = vld [vmem:[#allocation2 + $0x48] sm:$0xff]
    %v359 = vld [vmem:[#allocation2 + $0x50] sm:$0xff]
    %v360 = vld [vmem:[#allocation2 + $0x58] sm:$0xff]
    %v361 = vld [vmem:[#allocation2 + $0x60] sm:$0xff]
    %v362 = vld [vmem:[#allocation2 + $0x68] sm:$0xff]
    %v363 = vld [vmem:[#allocation2 + $0x70] sm:$0xff]
    %v364 = vld [vmem:[#allocation2 + $0x78] sm:$0xff]
    %v365 = vmul.f32 %v349, 0.9
    %v366 = vmul.f32 %v350, 0.9
    %v367 = vmul.f32 %v351, 0.9
    %v368 = vmul.f32 %v352, 0.9
    %v369 = vmul.f32 %v353, 0.9
    %v370 = vmul.f32 %v354, 0.9
    %v371 = vmul.f32 %v355, 0.9
    %v372 = vmul.f32 %v356, 0.9
    %v373 = vmul.f32 %v357, 0.9
    %v374 = vmul.f32 %v358, 0.9
    %v375 = vmul.f32 %v359, 0.9
    %v376 = vmul.f32 %v360, 0.9
    %v377 = vmul.f32 %v361, 0.9
    %v378 = vmul.f32 %v362, 0.9
    %v379 = vmul.f32 %v363, 0.9
    %v380 = vmul.f32 %v364, 0.9
    %v381 = vadd.f32 %v333, %v365
    %v382 = vadd.f32 %v334, %v366
    %v383 = vadd.f32 %v335, %v367
    %v384 = vadd.f32 %v336, %v368
    %v385 = vadd.f32 %v337, %v369
    %v386 = vadd.f32 %v338, %v370
    %v387 = vadd.f32 %v339, %v371
    %v388 = vadd.f32 %v340, %v372
    %v389 = vadd.f32 %v341, %v373
    %v390 = vadd.f32 %v342, %v374
    %v391 = vadd.f32 %v343, %v375
    %v392 = vadd.f32 %v344, %v376
    %v393 = vadd.f32 %v345, %v377
    %v394 = vadd.f32 %v346, %v378
    %v395 = vadd.f32 %v347, %v379
    %v396 = vadd.f32 %v348, %v380
    %v397 = vpack.c.bf16 %v382, %v381
    %v398 = vpack.c.bf16 %v384, %v383
    %v399 = vpack.c.bf16 %v386, %v385
    %v400 = vpack.c.bf16 %v388, %v387
    %v401 = vpack.c.bf16 %v390, %v389
    %v402 = vpack.c.bf16 %v392, %v391
    %v403 = vpack.c.bf16 %v394, %v393
    %v404 = vpack.c.bf16 %v396, %v395
    %v405 = vld [vmem:[%s3] sm:$0xf]
    %v406 = vld [vmem:[%s3 + $0x4] sm:$0xf]
    %v407 = vld [vmem:[%s3 + $0x8] sm:$0xf]
    %v408 = vld [vmem:[%s3 + $0xc] sm:$0xf]
    %v409 = vld [vmem:[%s3 + $0x10] sm:$0xf]
    %v410 = vld [vmem:[%s3 + $0x14] sm:$0xf]
    %v411 = vld [vmem:[%s3 + $0x18] sm:$0xf]
    %v412 = vld [vmem:[%s3 + $0x1c] sm:$0xf]
    %v413 = vld [vmem:[%s3 + $0x20] sm:$0xf]
    %v414 = vld [vmem:[%s3 + $0x24] sm:$0xf]
    %v415 = vld [vmem:[%s3 + $0x28] sm:$0xf]
    %v416 = vld [vmem:[%s3 + $0x2c] sm:$0xf]
    %v417 = vld [vmem:[%s3 + $0x30] sm:$0xf]
    %v418 = vld [vmem:[%s3 + $0x34] sm:$0xf]
    %v419 = vld [vmem:[%s3 + $0x38] sm:$0xf]
    %v420 = vld [vmem:[%s3 + $0x3c] sm:$0xf]
    %v421 = vld [vmem:[%s4] sm:$0x1]
    %v423 = vlaneseq
    %v424 = vshrl.u32 %v423, 7
    %v425 = vsub.s32 0, %v424
    %v426 = vrot.slane %v421, %v425
    %v444 = vunpack.c.l.b16 %v405
    %v445 = vunpack.c.l.b16 %v406
    %v446 = vunpack.c.l.b16 %v407
    %v447 = vunpack.c.l.b16 %v408
    %v448 = vunpack.c.l.b16 %v409
    %v449 = vunpack.c.l.b16 %v410
    %v450 = vunpack.c.l.b16 %v411
    %v451 = vunpack.c.l.b16 %v412
    %v452 = vunpack.c.l.b16 %v413
    %v453 = vunpack.c.l.b16 %v414
    %v454 = vunpack.c.l.b16 %v415
    %v455 = vunpack.c.l.b16 %v416
    %v456 = vunpack.c.l.b16 %v417
    %v457 = vunpack.c.l.b16 %v418
    %v458 = vunpack.c.l.b16 %v419
    %v459 = vunpack.c.l.b16 %v420
    %v460 = vpack.c.b16 %v445, %v444
    %v461 = vpack.c.b16 %v447, %v446
    %v462 = vpack.c.b16 %v449, %v448
    %v463 = vpack.c.b16 %v451, %v450
    %v464 = vpack.c.b16 %v453, %v452
    %v465 = vpack.c.b16 %v455, %v454
    %v466 = vpack.c.b16 %v457, %v456
    %v467 = vpack.c.b16 %v459, %v458
    %476 = vmatprep.subr.bf16.mxu0 0
    %477 = vmatpush1.bf16.msra.mxu0 %v460
    %478 = vmatprep.subr.bf16.mxu0 0
    %479 = vmatpush1.bf16.msra.mxu0 %v461
    %480 = vmatprep.subr.bf16.mxu0 0
    %481 = vmatpush1.bf16.msra.mxu0 %v462
    %482 = vmatprep.subr.bf16.mxu0 0
    %483 = vmatpush1.bf16.msra.mxu0 %v463
    %484 = vmatprep.subr.bf16.mxu0 0
    %485 = vmatpush1.bf16.msra.mxu0 %v464
    %486 = vmatprep.subr.bf16.mxu0 0
    %487 = vmatpush1.bf16.msra.mxu0 %v465
    %488 = vmatprep.subr.bf16.mxu0 0
    %489 = vmatpush1.bf16.msra.mxu0 %v466
    %490 = vmatprep.subr.bf16.mxu0 0
    %491 = vmatpush1.bf16.msra.mxu0 %v467
    %492 = vmatprep.subr.bf16.mxu0 0
    %493 = vmatpush1.bf16.msra.mxu0 0
    %494 = vmatprep.subr.bf16.mxu0 0
    %495 = vmatpush1.bf16.msra.mxu0 0
    %496 = vmatprep.subr.bf16.mxu0 0
    %497 = vmatpush1.bf16.msra.mxu0 0
    %498 = vmatprep.subr.bf16.mxu0 0
    %499 = vmatpush1.bf16.msra.mxu0 0
    %500 = vmatprep.subr.bf16.mxu0 0
    %501 = vmatpush1.bf16.msra.mxu0 0
    %502 = vmatprep.subr.bf16.mxu0 0
    %503 = vmatpush1.bf16.msra.mxu0 0
    %504 = vmatprep.subr.bf16.mxu0 0
    %505 = vmatpush1.bf16.msra.mxu0 0
    %506 = vmatprep.subr.bf16.mxu0 0
    %507 = vmatpush1.bf16.msra.mxu0 0
    %508 = vmatprep.mubr.bf16.mxu0 0
    %509 = vmatmul.mubr.bf16.gmra.mrb[0].mxu0 %v397
    %v510 = vpop.f32.mrb[0].mxu0
    %v511 = vadd.f32 %v426, %v510
    %v512 = vpop.f32.mrb[0].mxu0
    %v513 = vpop.f32.mrb[0].mxu0
    %v514 = vadd.f32 %v426, %v513
    %v515 = vpop.f32.mrb[0].mxu0
    %516 = vmatprep.mubr.bf16.mxu0 0
    %517 = vmatmul.mubr.bf16.gmra.mrb[0].mxu0 %v398
    %v518 = vpop.f32.mrb[0].mxu0
    %v519 = vadd.f32 %v426, %v518
    %v520 = vpop.f32.mrb[0].mxu0
    %v521 = vpop.f32.mrb[0].mxu0
    %v522 = vadd.f32 %v426, %v521
    %v523 = vpop.f32.mrb[0].mxu0
    %524 = vmatprep.mubr.bf16.mxu0 0
    %525 = vmatmul.mubr.bf16.gmra.mrb[0].mxu0 %v399
    %v526 = vpop.f32.mrb[0].mxu0
    %v527 = vadd.f32 %v426, %v526
    %v528 = vpop.f32.mrb[0].mxu0
    %v529 = vpop.f32.mrb[0].mxu0
    %v530 = vadd.f32 %v426, %v529
    %v531 = vpop.f32.mrb[0].mxu0
    %532 = vmatprep.mubr.bf16.mxu0 0
    %533 = vmatmul.mubr.bf16.gmra.mrb[0].mxu0 %v400
    %v534 = vpop.f32.mrb[0].mxu0
    %v535 = vadd.f32 %v426, %v534
    %v536 = vpop.f32.mrb[0].mxu0
    %v537 = vpop.f32.mrb[0].mxu0
    %v538 = vadd.f32 %v426, %v537
    %v539 = vpop.f32.mrb[0].mxu0
    %540 = vmatprep.mubr.bf16.mxu0 0
    %541 = vmatmul.mubr.bf16.gmra.mrb[0].mxu0 %v401
    %v542 = vpop.f32.mrb[0].mxu0
    %v543 = vadd.f32 %v426, %v542
    %v544 = vpop.f32.mrb[0].mxu0
    %v545 = vpop.f32.mrb[0].mxu0
    %v546 = vadd.f32 %v426, %v545
    %v547 = vpop.f32.mrb[0].mxu0
    %548 = vmatprep.mubr.bf16.mxu0 0
    %549 = vmatmul.mubr.bf16.gmra.mrb[0].mxu0 %v402
    %v550 = vpop.f32.mrb[0].mxu0
    %v551 = vadd.f32 %v426, %v550
    %v552 = vpop.f32.mrb[0].mxu0
    %v553 = vpop.f32.mrb[0].mxu0
    %v554 = vadd.f32 %v426, %v553
    %v555 = vpop.f32.mrb[0].mxu0
    %556 = vmatprep.mubr.bf16.mxu0 0
    %557 = vmatmul.mubr.bf16.gmra.mrb[0].mxu0 %v403
    %v558 = vpop.f32.mrb[0].mxu0
    %v559 = vadd.f32 %v426, %v558
    %v560 = vpop.f32.mrb[0].mxu0
    %v561 = vpop.f32.mrb[0].mxu0
    %v562 = vadd.f32 %v426, %v561
    %v563 = vpop.f32.mrb[0].mxu0
    %564 = vmatprep.mubr.bf16.mxu0 0
    %565 = vmatmul.mubr.bf16.gmra.mrb[0].mxu0 %v404
    %v566 = vpop.f32.mrb[0].mxu0
    %v567 = vadd.f32 %v426, %v566
    %v568 = vpop.f32.mrb[0].mxu0
    %v569 = vpop.f32.mrb[0].mxu0
    %v570 = vadd.f32 %v426, %v569
    %v571 = vpop.f32.mrb[0].mxu0
    %572 = vdwg.mxu0
    %v573 = vmax.f32 %v511, 0.0
    %v574 = vmax.f32 %v514, 0.0
    %v575 = vmax.f32 %v519, 0.0
    %v576 = vmax.f32 %v522, 0.0
    %v577 = vmax.f32 %v527, 0.0
    %v578 = vmax.f32 %v530, 0.0
    %v579 = vmax.f32 %v535, 0.0
    %v580 = vmax.f32 %v538, 0.0
    %v581 = vmax.f32 %v543, 0.0
    %v582 = vmax.f32 %v546, 0.0
    %v583 = vmax.f32 %v551, 0.0
    %v584 = vmax.f32 %v554, 0.0
    %v585 = vmax.f32 %v559, 0.0
    %v586 = vmax.f32 %v562, 0.0
    %v587 = vmax.f32 %v567, 0.0
    %v588 = vmax.f32 %v570, 0.0
    %589 = vst [vmem:[%s5] sm:$0xff] %v573
    %590 = vst [vmem:[%s5 + $0x8] sm:$0xff] %v574
    %591 = vst [vmem:[%s5 + $0x10] sm:$0xff] %v575
    %592 = vst [vmem:[%s5 + $0x18] sm:$0xff] %v576
    %593 = vst [vmem:[%s5 + $0x20] sm:$0xff] %v577
    %594 = vst [vmem:[%s5 + $0x28] sm:$0xff] %v578
    %595 = vst [vmem:[%s5 + $0x30] sm:$0xff] %v579
    %596 = vst [vmem:[%s5 + $0x38] sm:$0xff] %v580
    %597 = vst [vmem:[%s5 + $0x40] sm:$0xff] %v581
    %598 = vst [vmem:[%s5 + $0x48] sm:$0xff] %v582
    %599 = vst [vmem:[%s5 + $0x50] sm:$0xff] %v583
    %600 = vst [vmem:[%s5 + $0x58] sm:$0xff] %v584
    %601 = vst [vmem:[%s5 + $0x60] sm:$0xff] %v585
    %602 = vst [vmem:[%s5 + $0x68] sm:$0xff] %v586
    %603 = vst [vmem:[%s5 + $0x70] sm:$0xff] %v587
    %604 = vst [vmem:[%s5 + $0x78] sm:$0xff] %v588
  $region29: #{sasrec_forward.2} parent=0 // pred_fallthru
    _
  // Predicated region
  $region30: #{sasrec_forward.2} parent=0 // pred_check
    _
  $region31: #{sasrec_forward.2} parent=0 // pred_check_branch
    %606 = sbr.rel (0) target = $region33
  $region32: #{sasrec_forward.2} parent=0 // pred_region
    _
  $region33: #{sasrec_forward.2} parent=0 // pred_fallthru
    _
  // Predicated region
  $region34: #{sasrec_forward.2} parent=0 // pred_check
    _
  $region35: #{sasrec_forward.2} parent=0 // pred_check_branch
    %608 = sbr.rel (0) target = $region37
  $region36: #{sasrec_forward.2} parent=0 // pred_region
    _
  $region37: #{sasrec_forward.2} parent=0 // pred_fallthru
    _

// kernel: sasrec_forward.3
$region0: #{sasrec_forward.3}
  #allocation0 [shape = 'u32[]', space=smem, size = 0x4, offset = 0x4, fixed_abs, tag = 'smem constant byte address 0x4 - core index']
  #allocation1 [shape = 'u32[144,128]{1,0:T(1,128)}', space=vmem, size = 0x12000, scoped, tag = 'internal scratch']
  %s0 = inlined_call_operand.vmem [shape: bf16[16,8,128], index: 0, kind: input, shape index: {}]
  %s1 = inlined_call_operand.vmem [shape: bf16[16,8,128], index: 1, kind: input, shape index: {}]
  %s2 = inlined_call_operand.vmem [shape: bf16[16,8,128], index: 2, kind: input, shape index: {}]
  %s3 = inlined_call_operand.vmem [shape: f32[2,1,128], index: 3, kind: input, shape index: {}]
  %s4 = inlined_call_operand.vmem [shape: f32[2,1,128], index: 4, kind: input, shape index: {}]
  %s5 = inlined_call_operand.vmem [shape: bf16[2,128,128], index: 5, kind: input, shape index: {}]
  %s6 = inlined_call_operand.vmem [shape: f32[2,1,128], index: 6, kind: input, shape index: {}]
  %s7 = inlined_call_operand.vmem [shape: bf16[2,128,256], index: 7, kind: input, shape index: {}]
  %s8 = inlined_call_operand.vmem [shape: f32[2,1,256], index: 8, kind: input, shape index: {}]
  %s9 = inlined_call_operand.vmem [shape: bf16[2,128,128], index: 9, kind: input, shape index: {}]
  %s10 = inlined_call_operand.vmem [shape: f32[2,1,128], index: 10, kind: input, shape index: {}]
  %s11 = inlined_call_operand.vmem [shape: f32[2,1,128], index: 11, kind: input, shape index: {}]
  %s12 = inlined_call_operand.vmem [shape: f32[2,1,128], index: 12, kind: input, shape index: {}]
  %s13 = inlined_call_operand.vmem [shape: bf16[2,128,128], index: 13, kind: input, shape index: {}]
  %s14 = inlined_call_operand.vmem [shape: f32[2,1,128], index: 14, kind: input, shape index: {}]
  %s15 = inlined_call_operand.vmem [shape: bf16[2,128,128], index: 15, kind: input, shape index: {}]
  %s16 = inlined_call_operand.vmem [shape: f32[2,1,128], index: 16, kind: input, shape index: {}]
  %s17 = inlined_call_operand.vmem [shape: f32[1,128], index: 17, kind: input, shape index: {}]
  %s18 = inlined_call_operand.vmem [shape: f32[1,128], index: 18, kind: input, shape index: {}]
  %s19 = inlined_call_operand.vmem [shape: f32[16,128], index: 19, kind: output, shape index: {0}]
  %s20 = inlined_call_operand.vmem [shape: f32[16,128], index: 20, kind: output, shape index: {1}]
  %21 = xla_tuple %s19, %s20
  %s22 = sld [smem:[#allocation0]]
  $region124: #{sasrec_forward.3} parent=0
    _
  %s24 = ssub.s32 1, %s22
  %s25 = scalar_select 0, %s24, %s22
  loop: start=0, step=1, limit=4
  $region2: #{sasrec_forward.3} parent=0 // loop_pre_header
    _
  $region3: #{sasrec_forward.3} parent=0 // loop_header
    %s27 = sphi 0, %s31
    %p28 = scmp.ge.s32.totalorder %s27, 4
    %s37 = sphi 0, %s39
    %s40 = sphi 0, %s37
    %s41 = sphi 0, %s40
    %s57 = sphi 0, %s41
    %s63 = sphi 0, %s65
    %s66 = sphi 0, %s63
    %s67 = sphi 0, %s66
    %s83 = sphi 0, %s67
    %s89 = sphi 0, %s91
    %s92 = sphi 0, %s89
    %s93 = sphi 0, %s92
    %s109 = sphi 0, %s93
    %s113 = sphi 0, %s113
    %s115 = sphi 0, %s113
    %s116 = sphi 0, %s115
    %s130 = sphi 0, %s116
    %s134 = sphi 0, %s134
    %s136 = sphi 0, %s134
    %s137 = sphi 0, %s136
    %s151 = sphi 0, %s137
    %s155 = sphi 0, %s155
    %s157 = sphi 0, %s155
    %s158 = sphi 0, %s157
    %s172 = sphi 0, %s158
    %s176 = sphi 0, %s176
    %s178 = sphi 0, %s176
    %s179 = sphi 0, %s178
    %s193 = sphi 0, %s179
    %s197 = sphi 0, %s197
    %s199 = sphi 0, %s197
    %s200 = sphi 0, %s199
    %s214 = sphi 0, %s200
    %s218 = sphi 0, %s218
    %s220 = sphi 0, %s218
    %s221 = sphi 0, %s220
    %s235 = sphi 0, %s221
    %s239 = sphi 0, %s239
    %s241 = sphi 0, %s239
    %s242 = sphi 0, %s241
    %s256 = sphi 0, %s242
    %s260 = sphi 0, %s260
    %s262 = sphi 0, %s260
    %s263 = sphi 0, %s262
    %s277 = sphi 0, %s263
    %s281 = sphi 0, %s281
    %s283 = sphi 0, %s281
    %s284 = sphi 0, %s283
    %s298 = sphi 0, %s284
    %s302 = sphi 0, %s302
    %s304 = sphi 0, %s302
    %s305 = sphi 0, %s304
    %s319 = sphi 0, %s305
    %s323 = sphi 0, %s323
    %s325 = sphi 0, %s323
    %s326 = sphi 0, %s325
    %s340 = sphi 0, %s326
    %s344 = sphi 0, %s344
    %s346 = sphi 0, %s344
    %s347 = sphi 0, %s346
    %s361 = sphi 0, %s347
    %s365 = sphi 0, %s365
    %s367 = sphi 0, %s365
    %s368 = sphi 0, %s367
    %s382 = sphi 0, %s368
    %s386 = sphi 0, %s386
    %s388 = sphi 0, %s386
    %s389 = sphi 0, %s388
    %s403 = sphi 0, %s389
    %s407 = sphi 0, %s407
    %s409 = sphi 0, %s407
    %s410 = sphi 0, %s409
    %s424 = sphi 0, %s410
    %s428 = sphi 0, %s428
    %s430 = sphi 0, %s428
    %s431 = sphi 0, %s430
    %s445 = sphi 0, %s431
    %s451 = sphi 0, %s453
    %s454 = sphi 0, %s451
    %s455 = sphi 0, %s454
    %s471 = sphi 0, %s455
    %s477 = sphi 0, %s479
    %s480 = sphi 0, %s477
    %s481 = sphi 0, %s480
    %s497 = sphi 0, %s481
  $region4: #{sasrec_forward.3} parent=0 // loop_header_branch
    %30 = sbr.rel (%p28) target = $region8
  $region5: #{sasrec_forward.3} parent=0 // loop_body
    %s32 = ssub.s32 %s27, 1
    %s33 = ssub.s32 %s27, 2
    %s34 = sadd.s32 %s27, 1
    %s35 = ssub.s32 %s27, %s34
    %p36 = scmp.eq.s32.totalorder %s35, 0
    %s38 = sadd.s32 %s37, 1
    %s39 = scalar_select %p36, %s37, %s38
    %p42 = pneg %p36
    %p43 = scmp.eq.s32.totalorder %s27, 1
    %p44 = por %p42, %p43
    %p45 = scmp.ne.s32.totalorder %s37, %s40
    %p46 = scmp.eq.s32.totalorder %s27, 0
    %p47 = por %p45, %p46
    %p48 = scmp.ne.s32.totalorder %s37, %s40
    %p49 = scmp.eq.s32.totalorder %s32, 1
    %p50 = por %p48, %p49
    %p51 = scmp.ne.s32.totalorder %s40, %s41
    %p52 = scmp.eq.s32.totalorder %s32, 0
    %p53 = por %p51, %p52
    %p54 = scmp.ne.s32.totalorder %s40, %s41
    %p55 = scmp.eq.s32.totalorder %s33, 1
    %p56 = por %p54, %p55
    %p58 = scmp.ne.s32.totalorder %s41, %s57
    %p59 = scmp.eq.s32.totalorder %s33, 0
    %p60 = por %p58, %p59
    %s61 = ssub.s32 %s27, %s34
    %p62 = scmp.eq.s32.totalorder %s61, 0
    %s64 = sadd.s32 %s63, 1
    %s65 = scalar_select %p62, %s63, %s64
    %p68 = pneg %p62
    %p69 = scmp.eq.s32.totalorder %s27, 1
    %p70 = por %p68, %p69
    %p71 = scmp.ne.s32.totalorder %s63, %s66
    %p72 = scmp.eq.s32.totalorder %s27, 0
    %p73 = por %p71, %p72
    %p74 = scmp.ne.s32.totalorder %s63, %s66
    %p75 = scmp.eq.s32.totalorder %s32, 1
    %p76 = por %p74, %p75
    %p77 = scmp.ne.s32.totalorder %s66, %s67
    %p78 = scmp.eq.s32.totalorder %s32, 0
    %p79 = por %p77, %p78
    %p80 = scmp.ne.s32.totalorder %s66, %s67
    %p81 = scmp.eq.s32.totalorder %s33, 1
    %p82 = por %p80, %p81
    %p84 = scmp.ne.s32.totalorder %s67, %s83
    %p85 = scmp.eq.s32.totalorder %s33, 0
    %p86 = por %p84, %p85
    %s87 = ssub.s32 %s27, %s34
    %p88 = scmp.eq.s32.totalorder %s87, 0
    %s90 = sadd.s32 %s89, 1
    %s91 = scalar_select %p88, %s89, %s90
    %p94 = pneg %p88
    %p95 = scmp.eq.s32.totalorder %s27, 1
    %p96 = por %p94, %p95
    %p97 = scmp.ne.s32.totalorder %s89, %s92
    %p98 = scmp.eq.s32.totalorder %s27, 0
    %p99 = por %p97, %p98
    %p100 = scmp.ne.s32.totalorder %s89, %s92
    %p101 = scmp.eq.s32.totalorder %s32, 1
    %p102 = por %p100, %p101
    %p103 = scmp.ne.s32.totalorder %s92, %s93
    %p104 = scmp.eq.s32.totalorder %s32, 0
    %p105 = por %p103, %p104
    %p106 = scmp.ne.s32.totalorder %s92, %s93
    %p107 = scmp.eq.s32.totalorder %s33, 1
    %p108 = por %p106, %p107
    %p110 = scmp.ne.s32.totalorder %s93, %s109
    %p111 = scmp.eq.s32.totalorder %s33, 0
    %p112 = por %p110, %p111
    %s114 = sadd.s32 %s113, 1
    %p117 = scmp.eq.s32.totalorder %s27, 1
    %p118 = scmp.ne.s32.totalorder %s113, %s115
    %p119 = scmp.eq.s32.totalorder %s27, 0
    %p120 = por %p118, %p119
    %p121 = scmp.ne.s32.totalorder %s113, %s115
    %p122 = scmp.eq.s32.totalorder %s32, 1
    %p123 = por %p121, %p122
    %p124 = scmp.ne.s32.totalorder %s115, %s116
    %p125 = scmp.eq.s32.totalorder %s32, 0
    %p126 = por %p124, %p125
    %p127 = scmp.ne.s32.totalorder %s115, %s116
    %p128 = scmp.eq.s32.totalorder %s33, 1
    %p129 = por %p127, %p128
    %p131 = scmp.ne.s32.totalorder %s116, %s130
    %p132 = scmp.eq.s32.totalorder %s33, 0
    %p133 = por %p131, %p132
    %s135 = sadd.s32 %s134, 1
    %p138 = scmp.eq.s32.totalorder %s27, 1
    %p139 = scmp.ne.s32.totalorder %s134, %s136
    %p140 = scmp.eq.s32.totalorder %s27, 0
    %p141 = por %p139, %p140
    %p142 = scmp.ne.s32.totalorder %s134, %s136
    %p143 = scmp.eq.s32.totalorder %s32, 1
    %p144 = por %p142, %p143
    %p145 = scmp.ne.s32.totalorder %s136, %s137
    %p146 = scmp.eq.s32.totalorder %s32, 0
    %p147 = por %p145, %p146
    %p148 = scmp.ne.s32.totalorder %s136, %s137
    %p149 = scmp.eq.s32.totalorder %s33, 1
    %p150 = por %p148, %p149
    %p152 = scmp.ne.s32.totalorder %s137, %s151
    %p153 = scmp.eq.s32.totalorder %s33, 0
    %p154 = por %p152, %p153
    %s156 = sadd.s32 %s155, 1
    %p159 = scmp.eq.s32.totalorder %s27, 1
    %p160 = scmp.ne.s32.totalorder %s155, %s157
    %p161 = scmp.eq.s32.totalorder %s27, 0
    %p162 = por %p160, %p161
    %p163 = scmp.ne.s32.totalorder %s155, %s157
    %p164 = scmp.eq.s32.totalorder %s32, 1
    %p165 = por %p163, %p164
    %p166 = scmp.ne.s32.totalorder %s157, %s158
    %p167 = scmp.eq.s32.totalorder %s32, 0
    %p168 = por %p166, %p167
    %p169 = scmp.ne.s32.totalorder %s157, %s158
    %p170 = scmp.eq.s32.totalorder %s33, 1
    %p171 = por %p169, %p170
    %p173 = scmp.ne.s32.totalorder %s158, %s172
    %p174 = scmp.eq.s32.totalorder %s33, 0
    %p175 = por %p173, %p174
    %s177 = sadd.s32 %s176, 1
    %p180 = scmp.eq.s32.totalorder %s27, 1
    %p181 = scmp.ne.s32.totalorder %s176, %s178
    %p182 = scmp.eq.s32.totalorder %s27, 0
    %p183 = por %p181, %p182
    %p184 = scmp.ne.s32.totalorder %s176, %s178
    %p185 = scmp.eq.s32.totalorder %s32, 1
    %p186 = por %p184, %p185
    %p187 = scmp.ne.s32.totalorder %s178, %s179
    %p188 = scmp.eq.s32.totalorder %s32, 0
    %p189 = por %p187, %p188
    %p190 = scmp.ne.s32.totalorder %s178, %s179
    %p191 = scmp.eq.s32.totalorder %s33, 1
    %p192 = por %p190, %p191
    %p194 = scmp.ne.s32.totalorder %s179, %s193
    %p195 = scmp.eq.s32.totalorder %s33, 0
    %p196 = por %p194, %p195
    %s198 = sadd.s32 %s197, 1
    %p201 = scmp.eq.s32.totalorder %s27, 1
    %p202 = scmp.ne.s32.totalorder %s197, %s199
    %p203 = scmp.eq.s32.totalorder %s27, 0
    %p204 = por %p202, %p203
    %p205 = scmp.ne.s32.totalorder %s197, %s199
    %p206 = scmp.eq.s32.totalorder %s32, 1
    %p207 = por %p205, %p206
    %p208 = scmp.ne.s32.totalorder %s199, %s200
    %p209 = scmp.eq.s32.totalorder %s32, 0
    %p210 = por %p208, %p209
    %p211 = scmp.ne.s32.totalorder %s199, %s200
    %p212 = scmp.eq.s32.totalorder %s33, 1
    %p213 = por %p211, %p212
    %p215 = scmp.ne.s32.totalorder %s200, %s214
    %p216 = scmp.eq.s32.totalorder %s33, 0
    %p217 = por %p215, %p216
    %s219 = sadd.s32 %s218, 1
    %p222 = scmp.eq.s32.totalorder %s27, 1
    %p223 = scmp.ne.s32.totalorder %s218, %s220
    %p224 = scmp.eq.s32.totalorder %s27, 0
    %p225 = por %p223, %p224
    %p226 = scmp.ne.s32.totalorder %s218, %s220
    %p227 = scmp.eq.s32.totalorder %s32, 1
    %p228 = por %p226, %p227
    %p229 = scmp.ne.s32.totalorder %s220, %s221
    %p230 = scmp.eq.s32.totalorder %s32, 0
    %p231 = por %p229, %p230
    %p232 = scmp.ne.s32.totalorder %s220, %s221
    %p233 = scmp.eq.s32.totalorder %s33, 1
    %p234 = por %p232, %p233
    %p236 = scmp.ne.s32.totalorder %s221, %s235
    %p237 = scmp.eq.s32.totalorder %s33, 0
    %p238 = por %p236, %p237
    %s240 = sadd.s32 %s239, 1
    %p243 = scmp.eq.s32.totalorder %s27, 1
    %p244 = scmp.ne.s32.totalorder %s239, %s241
    %p245 = scmp.eq.s32.totalorder %s27, 0
    %p246 = por %p244, %p245
    %p247 = scmp.ne.s32.totalorder %s239, %s241
    %p248 = scmp.eq.s32.totalorder %s32, 1
    %p249 = por %p247, %p248
    %p250 = scmp.ne.s32.totalorder %s241, %s242
    %p251 = scmp.eq.s32.totalorder %s32, 0
    %p252 = por %p250, %p251
    %p253 = scmp.ne.s32.totalorder %s241, %s242
    %p254 = scmp.eq.s32.totalorder %s33, 1
    %p255 = por %p253, %p254
    %p257 = scmp.ne.s32.totalorder %s242, %s256
    %p258 = scmp.eq.s32.totalorder %s33, 0
    %p259 = por %p257, %p258
    %s261 = sadd.s32 %s260, 1
    %p264 = scmp.eq.s32.totalorder %s27, 1
    %p265 = scmp.ne.s32.totalorder %s260, %s262
    %p266 = scmp.eq.s32.totalorder %s27, 0
    %p267 = por %p265, %p266
    %p268 = scmp.ne.s32.totalorder %s260, %s262
    %p269 = scmp.eq.s32.totalorder %s32, 1
    %p270 = por %p268, %p269
    %p271 = scmp.ne.s32.totalorder %s262, %s263
    %p272 = scmp.eq.s32.totalorder %s32, 0
    %p273 = por %p271, %p272
    %p274 = scmp.ne.s32.totalorder %s262, %s263
    %p275 = scmp.eq.s32.totalorder %s33, 1
    %p276 = por %p274, %p275
    %p278 = scmp.ne.s32.totalorder %s263, %s277
    %p279 = scmp.eq.s32.totalorder %s33, 0
    %p280 = por %p278, %p279
    %s282 = sadd.s32 %s281, 1
    %p285 = scmp.eq.s32.totalorder %s27, 1
    %p286 = scmp.ne.s32.totalorder %s281, %s283
    %p287 = scmp.eq.s32.totalorder %s27, 0
    %p288 = por %p286, %p287
    %p289 = scmp.ne.s32.totalorder %s281, %s283
    %p290 = scmp.eq.s32.totalorder %s32, 1
    %p291 = por %p289, %p290
    %p292 = scmp.ne.s32.totalorder %s283, %s284
    %p293 = scmp.eq.s32.totalorder %s32, 0
    %p294 = por %p292, %p293
    %p295 = scmp.ne.s32.totalorder %s283, %s284
    %p296 = scmp.eq.s32.totalorder %s33, 1
    %p297 = por %p295, %p296
    %p299 = scmp.ne.s32.totalorder %s284, %s298
    %p300 = scmp.eq.s32.totalorder %s33, 0
    %p301 = por %p299, %p300
    %s303 = sadd.s32 %s302, 1
    %p306 = scmp.eq.s32.totalorder %s27, 1
    %p307 = scmp.ne.s32.totalorder %s302, %s304
    %p308 = scmp.eq.s32.totalorder %s27, 0
    %p309 = por %p307, %p308
    %p310 = scmp.ne.s32.totalorder %s302, %s304
    %p311 = scmp.eq.s32.totalorder %s32, 1
    %p312 = por %p310, %p311
    %p313 = scmp.ne.s32.totalorder %s304, %s305
    %p314 = scmp.eq.s32.totalorder %s32, 0
    %p315 = por %p313, %p314
    %p316 = scmp.ne.s32.totalorder %s304, %s305
    %p317 = scmp.eq.s32.totalorder %s33, 1
    %p318 = por %p316, %p317
    %p320 = scmp.ne.s32.totalorder %s305, %s319
    %p321 = scmp.eq.s32.totalorder %s33, 0
    %p322 = por %p320, %p321
    %s324 = sadd.s32 %s323, 1
    %p327 = scmp.eq.s32.totalorder %s27, 1
    %p328 = scmp.ne.s32.totalorder %s323, %s325
    %p329 = scmp.eq.s32.totalorder %s27, 0
    %p330 = por %p328, %p329
    %p331 = scmp.ne.s32.totalorder %s323, %s325
    %p332 = scmp.eq.s32.totalorder %s32, 1
    %p333 = por %p331, %p332
    %p334 = scmp.ne.s32.totalorder %s325, %s326
    %p335 = scmp.eq.s32.totalorder %s32, 0
    %p336 = por %p334, %p335
    %p337 = scmp.ne.s32.totalorder %s325, %s326
    %p338 = scmp.eq.s32.totalorder %s33, 1
    %p339 = por %p337, %p338
    %p341 = scmp.ne.s32.totalorder %s326, %s340
    %p342 = scmp.eq.s32.totalorder %s33, 0
    %p343 = por %p341, %p342
    %s345 = sadd.s32 %s344, 1
    %p348 = scmp.eq.s32.totalorder %s27, 1
    %p349 = scmp.ne.s32.totalorder %s344, %s346
    %p350 = scmp.eq.s32.totalorder %s27, 0
    %p351 = por %p349, %p350
    %p352 = scmp.ne.s32.totalorder %s344, %s346
    %p353 = scmp.eq.s32.totalorder %s32, 1
    %p354 = por %p352, %p353
    %p355 = scmp.ne.s32.totalorder %s346, %s347
    %p356 = scmp.eq.s32.totalorder %s32, 0
    %p357 = por %p355, %p356
    %p358 = scmp.ne.s32.totalorder %s346, %s347
    %p359 = scmp.eq.s32.totalorder %s33, 1
    %p360 = por %p358, %p359
    %p362 = scmp.ne.s32.totalorder %s347, %s361
    %p363 = scmp.eq.s32.totalorder %s33, 0
    %p364 = por %p362, %p363
    %s366 = sadd.s32 %s365, 1
    %p369 = scmp.eq.s32.totalorder %s27, 1
    %p370 = scmp.ne.s32.totalorder %s365, %s367
    %p371 = scmp.eq.s32.totalorder %s27, 0
    %p372 = por %p370, %p371
    %p373 = scmp.ne.s32.totalorder %s365, %s367
    %p374 = scmp.eq.s32.totalorder %s32, 1
    %p375 = por %p373, %p374
    %p376 = scmp.ne.s32.totalorder %s367, %s368
    %p377 = scmp.eq.s32.totalorder %s32, 0
    %p378 = por %p376, %p377
    %p379 = scmp.ne.s32.totalorder %s367, %s368
    %p380 = scmp.eq.s32.totalorder %s33, 1
    %p381 = por %p379, %p380
    %p383 = scmp.ne.s32.totalorder %s368, %s382
    %p384 = scmp.eq.s32.totalorder %s33, 0
    %p385 = por %p383, %p384
    %s387 = sadd.s32 %s386, 1
    %p390 = scmp.eq.s32.totalorder %s27, 1
    %p391 = scmp.ne.s32.totalorder %s386, %s388
    %p392 = scmp.eq.s32.totalorder %s27, 0
    %p393 = por %p391, %p392
    %p394 = scmp.ne.s32.totalorder %s386, %s388
    %p395 = scmp.eq.s32.totalorder %s32, 1
    %p396 = por %p394, %p395
    %p397 = scmp.ne.s32.totalorder %s388, %s389
    %p398 = scmp.eq.s32.totalorder %s32, 0
    %p399 = por %p397, %p398
    %p400 = scmp.ne.s32.totalorder %s388, %s389
    %p401 = scmp.eq.s32.totalorder %s33, 1
    %p402 = por %p400, %p401
    %p404 = scmp.ne.s32.totalorder %s389, %s403
    %p405 = scmp.eq.s32.totalorder %s33, 0
    %p406 = por %p404, %p405
    %s408 = sadd.s32 %s407, 1
    %p411 = scmp.eq.s32.totalorder %s27, 1
    %p412 = scmp.ne.s32.totalorder %s407, %s409
    %p413 = scmp.eq.s32.totalorder %s27, 0
    %p414 = por %p412, %p413
    %p415 = scmp.ne.s32.totalorder %s407, %s409
    %p416 = scmp.eq.s32.totalorder %s32, 1
    %p417 = por %p415, %p416
    %p418 = scmp.ne.s32.totalorder %s409, %s410
    %p419 = scmp.eq.s32.totalorder %s32, 0
    %p420 = por %p418, %p419
    %p421 = scmp.ne.s32.totalorder %s409, %s410
    %p422 = scmp.eq.s32.totalorder %s33, 1
    %p423 = por %p421, %p422
    %p425 = scmp.ne.s32.totalorder %s410, %s424
    %p426 = scmp.eq.s32.totalorder %s33, 0
    %p427 = por %p425, %p426
    %s429 = sadd.s32 %s428, 1
    %p432 = scmp.eq.s32.totalorder %s27, 1
    %p433 = scmp.ne.s32.totalorder %s428, %s430
    %p434 = scmp.eq.s32.totalorder %s27, 0
    %p435 = por %p433, %p434
    %p436 = scmp.ne.s32.totalorder %s428, %s430
    %p437 = scmp.eq.s32.totalorder %s32, 1
    %p438 = por %p436, %p437
    %p439 = scmp.ne.s32.totalorder %s430, %s431
    %p440 = scmp.eq.s32.totalorder %s32, 0
    %p441 = por %p439, %p440
    %p442 = scmp.ne.s32.totalorder %s430, %s431
    %p443 = scmp.eq.s32.totalorder %s33, 1
    %p444 = por %p442, %p443
    %p446 = scmp.ne.s32.totalorder %s431, %s445
    %p447 = scmp.eq.s32.totalorder %s33, 0
    %p448 = por %p446, %p447
    %s449 = ssub.s32 %s27, %s34
    %p450 = scmp.eq.s32.totalorder %s449, 0
    %s452 = sadd.s32 %s451, 1
    %s453 = scalar_select %p450, %s451, %s452
    %p456 = pneg %p450
    %p457 = scmp.eq.s32.totalorder %s27, 1
    %p458 = por %p456, %p457
    %p459 = scmp.ne.s32.totalorder %s451, %s454
    %p460 = scmp.eq.s32.totalorder %s27, 0
    %p461 = por %p459, %p460
    %p462 = scmp.ne.s32.totalorder %s451, %s454
    %p463 = scmp.eq.s32.totalorder %s32, 1
    %p464 = por %p462, %p463
    %p465 = scmp.ne.s32.totalorder %s454, %s455
    %p466 = scmp.eq.s32.totalorder %s32, 0
    %p467 = por %p465, %p466
    %p468 = scmp.ne.s32.totalorder %s454, %s455
    %p469 = scmp.eq.s32.totalorder %s33, 1
    %p470 = por %p468, %p469
    %p472 = scmp.ne.s32.totalorder %s455, %s471
    %p473 = scmp.eq.s32.totalorder %s33, 0
    %p474 = por %p472, %p473
    %s475 = ssub.s32 %s27, %s34
    %p476 = scmp.eq.s32.totalorder %s475, 0
    %s478 = sadd.s32 %s477, 1
    %s479 = scalar_select %p476, %s477, %s478
    %p482 = pneg %p476
    %p483 = scmp.eq.s32.totalorder %s27, 1
    %p484 = por %p482, %p483
    %p485 = scmp.ne.s32.totalorder %s477, %s480
    %p486 = scmp.eq.s32.totalorder %s27, 0
    %p487 = por %p485, %p486
    %p488 = scmp.ne.s32.totalorder %s477, %s480
    %p489 = scmp.eq.s32.totalorder %s32, 1
    %p490 = por %p488, %p489
    %p491 = scmp.ne.s32.totalorder %s480, %s481
    %p492 = scmp.eq.s32.totalorder %s32, 0
    %p493 = por %p491, %p492
    %p494 = scmp.ne.s32.totalorder %s480, %s481
    %p495 = scmp.eq.s32.totalorder %s33, 1
    %p496 = por %p494, %p495
    %p498 = scmp.ne.s32.totalorder %s481, %s497
    %p499 = scmp.eq.s32.totalorder %s33, 0
    %p500 = por %p498, %p499
    %p501 = scmp.le.s32.totalorder 1, %s27
    %p502 = scmp.lt.s32.totalorder %s27, 3
    %p503 = pnand %p501, %p502
    %p504 = pneg %p503
    // Predicated region
    $region9: #{sasrec_forward.3} parent=5 // pred_check
      _
    $region10: #{sasrec_forward.3} parent=5 // pred_check_branch
      %506 = sbr.rel (%p503) target = $region12
    $region11: #{sasrec_forward.3} parent=5 // pred_region
      %s507 = ssub.s32 %s27, 1
      // Predicated region
      $region13: #{sasrec_forward.3} parent=11 // pred_check
        %p508 = pneg %p126
      $region14: #{sasrec_forward.3} parent=11 // pred_check_branch
        %510 = sbr.rel (%p508) target = $region16
      $region15: #{sasrec_forward.3} parent=11 // pred_region
        _
      $region16: #{sasrec_forward.3} parent=11 // pred_fallthru
        _
      // Predicated region
      $region17: #{sasrec_forward.3} parent=11 // pred_check
        %p511 = pneg %p147
      $region18: #{sasrec_forward.3} parent=11 // pred_check_branch
        %513 = sbr.rel (%p511) target = $region20
      $region19: #{sasrec_forward.3} parent=11 // pred_region
        _
      $region20: #{sasrec_forward.3} parent=11 // pred_fallthru
        _
      // Predicated region
      $region21: #{sasrec_forward.3} parent=11 // pred_check
        %p514 = pneg %p168
      $region22: #{sasrec_forward.3} parent=11 // pred_check_branch
        %516 = sbr.rel (%p514) target = $region24
      $region23: #{sasrec_forward.3} parent=11 // pred_region
        _
      $region24: #{sasrec_forward.3} parent=11 // pred_fallthru
        _
      // Predicated region
      $region25: #{sasrec_forward.3} parent=11 // pred_check
        %p517 = pneg %p189
      $region26: #{sasrec_forward.3} parent=11 // pred_check_branch
        %519 = sbr.rel (%p517) target = $region28
      $region27: #{sasrec_forward.3} parent=11 // pred_region
        _
      $region28: #{sasrec_forward.3} parent=11 // pred_fallthru
        _
      // Predicated region
      $region29: #{sasrec_forward.3} parent=11 // pred_check
        %p520 = pneg %p210
      $region30: #{sasrec_forward.3} parent=11 // pred_check_branch
        %522 = sbr.rel (%p520) target = $region32
      $region31: #{sasrec_forward.3} parent=11 // pred_region
        _
      $region32: #{sasrec_forward.3} parent=11 // pred_fallthru
        _
      // Predicated region
      $region33: #{sasrec_forward.3} parent=11 // pred_check
        %p523 = pneg %p231
      $region34: #{sasrec_forward.3} parent=11 // pred_check_branch
        %525 = sbr.rel (%p523) target = $region36
      $region35: #{sasrec_forward.3} parent=11 // pred_region
        _
      $region36: #{sasrec_forward.3} parent=11 // pred_fallthru
        _
      // Predicated region
      $region37: #{sasrec_forward.3} parent=11 // pred_check
        %p526 = pneg %p252
      $region38: #{sasrec_forward.3} parent=11 // pred_check_branch
        %528 = sbr.rel (%p526) target = $region40
      $region39: #{sasrec_forward.3} parent=11 // pred_region
        _
      $region40: #{sasrec_forward.3} parent=11 // pred_fallthru
        _
      // Predicated region
      $region41: #{sasrec_forward.3} parent=11 // pred_check
        %p529 = pneg %p273
      $region42: #{sasrec_forward.3} parent=11 // pred_check_branch
        %531 = sbr.rel (%p529) target = $region44
      $region43: #{sasrec_forward.3} parent=11 // pred_region
        _
      $region44: #{sasrec_forward.3} parent=11 // pred_fallthru
        _
      // Predicated region
      $region45: #{sasrec_forward.3} parent=11 // pred_check
        %p532 = pneg %p294
      $region46: #{sasrec_forward.3} parent=11 // pred_check_branch
        %534 = sbr.rel (%p532) target = $region48
      $region47: #{sasrec_forward.3} parent=11 // pred_region
        _
      $region48: #{sasrec_forward.3} parent=11 // pred_fallthru
        _
      // Predicated region
      $region49: #{sasrec_forward.3} parent=11 // pred_check
        %p535 = pneg %p315
      $region50: #{sasrec_forward.3} parent=11 // pred_check_branch
        %537 = sbr.rel (%p535) target = $region52
      $region51: #{sasrec_forward.3} parent=11 // pred_region
        _
      $region52: #{sasrec_forward.3} parent=11 // pred_fallthru
        _
      // Predicated region
      $region53: #{sasrec_forward.3} parent=11 // pred_check
        %p538 = pneg %p336
      $region54: #{sasrec_forward.3} parent=11 // pred_check_branch
        %540 = sbr.rel (%p538) target = $region56
      $region55: #{sasrec_forward.3} parent=11 // pred_region
        _
      $region56: #{sasrec_forward.3} parent=11 // pred_fallthru
        _
      // Predicated region
      $region57: #{sasrec_forward.3} parent=11 // pred_check
        %p541 = pneg %p357
      $region58: #{sasrec_forward.3} parent=11 // pred_check_branch
        %543 = sbr.rel (%p541) target = $region60
      $region59: #{sasrec_forward.3} parent=11 // pred_region
        _
      $region60: #{sasrec_forward.3} parent=11 // pred_fallthru
        _
      // Predicated region
      $region61: #{sasrec_forward.3} parent=11 // pred_check
        %p544 = pneg %p378
      $region62: #{sasrec_forward.3} parent=11 // pred_check_branch
        %546 = sbr.rel (%p544) target = $region64
      $region63: #{sasrec_forward.3} parent=11 // pred_region
        _
      $region64: #{sasrec_forward.3} parent=11 // pred_fallthru
        _
      // Predicated region
      $region65: #{sasrec_forward.3} parent=11 // pred_check
        %p547 = pneg %p399
      $region66: #{sasrec_forward.3} parent=11 // pred_check_branch
        %549 = sbr.rel (%p547) target = $region68
      $region67: #{sasrec_forward.3} parent=11 // pred_region
        _
      $region68: #{sasrec_forward.3} parent=11 // pred_fallthru
        _
      // Predicated region
      $region69: #{sasrec_forward.3} parent=11 // pred_check
        %p550 = pneg %p420
      $region70: #{sasrec_forward.3} parent=11 // pred_check_branch
        %552 = sbr.rel (%p550) target = $region72
      $region71: #{sasrec_forward.3} parent=11 // pred_region
        _
      $region72: #{sasrec_forward.3} parent=11 // pred_fallthru
        _
      // Predicated region
      $region73: #{sasrec_forward.3} parent=11 // pred_check
        %p553 = pneg %p441
      $region74: #{sasrec_forward.3} parent=11 // pred_check_branch
        %555 = sbr.rel (%p553) target = $region76
      $region75: #{sasrec_forward.3} parent=11 // pred_region
        _
      $region76: #{sasrec_forward.3} parent=11 // pred_fallthru
        _
    $region12: #{sasrec_forward.3} parent=5 // pred_fallthru
      _
    %p556 = scmp.lt.s32.totalorder %s27, 2
    // Predicated region
    $region77: #{sasrec_forward.3} parent=5 // pred_check
      %p557 = pneg %p556
    $region78: #{sasrec_forward.3} parent=5 // pred_check_branch
      %559 = sbr.rel (%p557) target = $region80
    $region79: #{sasrec_forward.3} parent=5 // pred_region
      // Predicated region
      $region81: #{sasrec_forward.3} parent=79 // pred_check
        %p560 = pneg %p47
      $region82: #{sasrec_forward.3} parent=79 // pred_check_branch
        %562 = sbr.rel (%p560) target = $region84
      $region83: #{sasrec_forward.3} parent=79 // pred_region
        %s563 = smul.u32 8, %s27
        %p564 = scmp.lt.s32.totalorder %s563, 15
        %s565 = scalar_select %p564, %s563, 15
        %s566 = smul.addr %s565, 4
        %s567 = scalar_lea.vmem %s0, %s566
        %s568 = smul.u32 8, %s27
      $region84: #{sasrec_forward.3} parent=79 // pred_fallthru
        _
      // Predicated region
      $region85: #{sasrec_forward.3} parent=79 // pred_check
        %p569 = pneg %p73
      $region86: #{sasrec_forward.3} parent=79 // pred_check_branch
        %571 = sbr.rel (%p569) target = $region88
      $region87: #{sasrec_forward.3} parent=79 // pred_region
        %s572 = smul.u32 8, %s27
        %p573 = scmp.lt.s32.totalorder %s572, 15
        %s574 = scalar_select %p573, %s572, 15
        %s575 = smul.addr %s574, 4
        %s576 = scalar_lea.vmem %s1, %s575
        %s577 = smul.u32 8, %s27
      $region88: #{sasrec_forward.3} parent=79 // pred_fallthru
        _
      // Predicated region
      $region89: #{sasrec_forward.3} parent=79 // pred_check
        %p578 = pneg %p99
      $region90: #{sasrec_forward.3} parent=79 // pred_check_branch
        %580 = sbr.rel (%p578) target = $region92
      $region91: #{sasrec_forward.3} parent=79 // pred_region
        %s581 = smul.u32 8, %s27
        %p582 = scmp.lt.s32.totalorder %s581, 15
        %s583 = scalar_select %p582, %s581, 15
        %s584 = smul.addr %s583, 4
        %s585 = scalar_lea.vmem %s2, %s584
        %s586 = smul.u32 8, %s27
      $region92: #{sasrec_forward.3} parent=79 // pred_fallthru
        _
    $region80: #{sasrec_forward.3} parent=5 // pred_fallthru
      _
    %p587 = scmp.le.s32.totalorder 1, %s27
    %p588 = scmp.lt.s32.totalorder %s27, 3
    %p589 = pnand %p587, %p588
    %p590 = pneg %p589
    // Predicated region
    $region93: #{sasrec_forward.3} parent=5 // pred_check
      _
    $region94: #{sasrec_forward.3} parent=5 // pred_check_branch
      %592 = sbr.rel (%p589) target = $region96
    $region95: #{sasrec_forward.3} parent=5 // pred_region
      %s593 = ssub.s32 %s27, 1
      %s594 = smul.u32 8, %s32
      %p595 = scmp.lt.s32.totalorder %s594, 15
      %s596 = scalar_select %p595, %s594, 15
      %s597 = smul.addr %s596, 4
      %s598 = scalar_lea.vmem %s0, %s597
      %p599 = pneg %p53
      %p600 = pneg %p50
      %s601 = smul.u32 8, %s32
      %p602 = scmp.lt.s32.totalorder %s601, 15
      %s603 = scalar_select %p602, %s601, 15
      %s604 = smul.addr %s603, 4
      %s605 = scalar_lea.vmem %s1, %s604
      %p606 = pneg %p79
      %p607 = pneg %p76
      %s608 = smul.u32 8, %s32
      %p609 = scmp.lt.s32.totalorder %s608, 15
      %s610 = scalar_select %p609, %s608, 15
      %s611 = smul.addr %s610, 4
      %s612 = scalar_lea.vmem %s2, %s611
      %p613 = pneg %p105
      %p614 = pneg %p102
      %p615 = pneg %p126
      %p616 = pneg %p123
      %p617 = pneg %p147
      %p618 = pneg %p144
      %p619 = pneg %p168
      %p620 = pneg %p165
      %p621 = pneg %p189
      %p622 = pneg %p186
      %p623 = pneg %p210
      %p624 = pneg %p207
      %p625 = pneg %p231
      %p626 = pneg %p228
      %p627 = pneg %p252
      %p628 = pneg %p249
      %p629 = pneg %p273
      %p630 = pneg %p270
      %p631 = pneg %p294
      %p632 = pneg %p291
      %p633 = pneg %p315
      %p634 = pneg %p312
      %p635 = pneg %p336
      %p636 = pneg %p333
      %p637 = pneg %p357
      %p638 = pneg %p354
      %p639 = pneg %p378
      %p640 = pneg %p375
      %p641 = pneg %p399
      %p642 = pneg %p396
      %p643 = pneg %p420
      %p644 = pneg %p417
      %p645 = pneg %p441
      %p646 = pneg %p438
      %p647 = pneg %p467
      %p648 = pneg %p464
      %p649 = scmp.lt.s32.totalorder %s32, 1
      %s650 = scalar_select %p649, %s32, 1
      %s651 = smul.addr %s650, 8
      %s652 = scalar_lea.vmem %s19, %s651
      %p653 = pneg %p493
      %p654 = pneg %p490
      %p655 = scmp.lt.s32.totalorder %s32, 1
      %s656 = scalar_select %p655, %s32, 1
      %s657 = smul.addr %s656, 8
      %s658 = scalar_lea.vmem %s20, %s657
      %s659 = smul.u32 8, %s32
      %p660 = scmp.lt.s32.totalorder %s659, 15
      %s661 = scalar_select %p660, %s659, 15
      %s662 = smul.addr %s661, 4
      %s663 = scalar_lea.vmem %s0, %s662
      %s664 = smul.u32 8, %s32
      %s665 = smul.u32 8, %s32
      %p666 = scmp.lt.s32.totalorder %s665, 15
      %s667 = scalar_select %p666, %s665, 15
      %s668 = smul.addr %s667, 4
      %s669 = scalar_lea.vmem %s1, %s668
      %s670 = smul.u32 8, %s32
      %s671 = smul.u32 8, %s32
      %p672 = scmp.lt.s32.totalorder %s671, 15
      %s673 = scalar_select %p672, %s671, 15
      %s674 = smul.addr %s673, 4
      %s675 = scalar_lea.vmem %s2, %s674
      %s676 = smul.u32 8, %s32
      %p677 = scmp.lt.s32.totalorder %s32, 1
      %s678 = scalar_select %p677, %s32, 1
      %s679 = smul.addr %s678, 8
      %s680 = scalar_lea.vmem %s19, %s679
      %p681 = scmp.lt.s32.totalorder %s32, 1
      %s682 = scalar_select %p681, %s32, 1
      %s683 = smul.addr %s682, 8
      %s684 = scalar_lea.vmem %s20, %s683
      %v686 = vld [vmem:[%s663] sm:$0xf]
      %v687 = vld [vmem:[%s663 + $0x4] sm:$0xf]
      %v688 = vld [vmem:[%s663 + $0x8] sm:$0xf]
      %v689 = vld [vmem:[%s663 + $0xc] sm:$0xf]
      %v690 = vld [vmem:[%s663 + $0x10] sm:$0xf]
      %v691 = vld [vmem:[%s663 + $0x14] sm:$0xf]
      %v692 = vld [vmem:[%s663 + $0x18] sm:$0xf]
      %v693 = vld [vmem:[%s663 + $0x1c] sm:$0xf]
      %v694 = vunpack.c.l.bf16 %v686
      %v695 = vunpack.c.l.bf16 %v687
      %v696 = vunpack.c.l.bf16 %v688
      %v697 = vunpack.c.l.bf16 %v689
      %v698 = vunpack.c.l.bf16 %v690
      %v699 = vunpack.c.l.bf16 %v691
      %v700 = vunpack.c.l.bf16 %v692
      %v701 = vunpack.c.l.bf16 %v693
      %v702 = vlaneseq
      %v703 = vand.u32 %v702, 127
      %vm704 = vcmp.lt.s32.totalorder %v703, 32
      %v705 = vlaneseq
      %v706 = vshrl.u32 %v705, 7
      %vm707 = vcmp.le.s32.totalorder %v703, %v706
      loop: start=0, step=1, limit=2
      $region97: #{sasrec_forward.3} parent=95 // loop_pre_header
        _
      $region98: #{sasrec_forward.3} parent=95 // loop_header
        %s709 = sphi 0, %s713
        %p710 = scmp.ge.s32.totalorder %s709, 2
        %v714 = vphi %v694, %v2579
        %v715 = vphi %v695, %v2580
        %v716 = vphi %v696, %v2581
        %v717 = vphi %v697, %v2582
        %v718 = vphi %v698, %v2583
        %v719 = vphi %v699, %v2584
        %v720 = vphi %v700, %v2585
        %v721 = vphi %v701, %v2586
      $region99: #{sasrec_forward.3} parent=95 // loop_header_branch
        %712 = sbr.rel (%p710) target = $region103
      $region100: #{sasrec_forward.3} parent=95 // loop_body
        %s722 = scalar_lea.vmem %s3, %s709
        %v723 = vld [vmem:[%s722] sm:$0x1]
        %s724 = scalar_lea.vmem %s4, %s709
        %v725 = vld [vmem:[%s724] sm:$0x1]
        %726 = vadd.xlane.f32.xlu0 %v714
        %v727 = vpop.xlane.xlu0 %726
        %728 = vadd.xlane.f32.xlu0 %v715
        %v729 = vpop.xlane.xlu0 %728
        %730 = vadd.xlane.f32.xlu0 %v716
        %v731 = vpop.xlane.xlu0 %730
        %732 = vadd.xlane.f32.xlu0 %v717
        %v733 = vpop.xlane.xlu0 %732
        %734 = vadd.xlane.f32.xlu0 %v718
        %v735 = vpop.xlane.xlu0 %734
        %736 = vadd.xlane.f32.xlu0 %v719
        %v737 = vpop.xlane.xlu0 %736
        %738 = vadd.xlane.f32.xlu0 %v720
        %v739 = vpop.xlane.xlu0 %738
        %740 = vadd.xlane.f32.xlu0 %v721
        %v741 = vpop.xlane.xlu0 %740
        %v742 = vmul.f32 %v727, 0.03125
        %v743 = vmul.f32 %v729, 0.03125
        %v744 = vmul.f32 %v731, 0.03125
        %v745 = vmul.f32 %v733, 0.03125
        %v746 = vmul.f32 %v735, 0.03125
        %v747 = vmul.f32 %v737, 0.03125
        %v748 = vmul.f32 %v739, 0.03125
        %v749 = vmul.f32 %v741, 0.03125
        %v750 = vsub.f32 %v714, %v742
        %v751 = vsub.f32 %v715, %v743
        %v752 = vsub.f32 %v716, %v744
        %v753 = vsub.f32 %v717, %v745
        %v754 = vsub.f32 %v718, %v746
        %v755 = vsub.f32 %v719, %v747
        %v756 = vsub.f32 %v720, %v748
        %v757 = vsub.f32 %v721, %v749
        %v758 = vsel %vm704, 1, 0
        %vm759 = vcmp.eq.s32.totalorder %v758, 1
        %v760 = vsel %vm759, %v750, 0.0
        %v761 = vsel %vm759, %v751, 0.0
        %v762 = vsel %vm759, %v752, 0.0
        %v763 = vsel %vm759, %v753, 0.0
        %v764 = vsel %vm759, %v754, 0.0
        %v765 = vsel %vm759, %v755, 0.0
        %v766 = vsel %vm759, %v756, 0.0
        %v767 = vsel %vm759, %v757, 0.0
        %v768 = vmul.f32 %v760, %v760
        %v769 = vmul.f32 %v761, %v761
        %v770 = vmul.f32 %v762, %v762
        %v771 = vmul.f32 %v763, %v763
        %v772 = vmul.f32 %v764, %v764
        %v773 = vmul.f32 %v765, %v765
        %v774 = vmul.f32 %v766, %v766
        %v775 = vmul.f32 %v767, %v767
        %776 = vadd.xlane.f32.xlu0 %v768
        %v777 = vpop.xlane.xlu0 %776
        %778 = vadd.xlane.f32.xlu0 %v769
        %v779 = vpop.xlane.xlu0 %778
        %780 = vadd.xlane.f32.xlu0 %v770
        %v781 = vpop.xlane.xlu0 %780
        %782 = vadd.xlane.f32.xlu0 %v771
        %v783 = vpop.xlane.xlu0 %782
        %784 = vadd.xlane.f32.xlu0 %v772
        %v785 = vpop.xlane.xlu0 %784
        %786 = vadd.xlane.f32.xlu0 %v773
        %v787 = vpop.xlane.xlu0 %786
        %788 = vadd.xlane.f32.xlu0 %v774
        %v789 = vpop.xlane.xlu0 %788
        %790 = vadd.xlane.f32.xlu0 %v775
        %v791 = vpop.xlane.xlu0 %790
        %v792 = vmul.f32 %v777, 0.03125
        %v793 = vmul.f32 %v779, 0.03125
        %v794 = vmul.f32 %v781, 0.03125
        %v795 = vmul.f32 %v783, 0.03125
        %v796 = vmul.f32 %v785, 0.03125
        %v797 = vmul.f32 %v787, 0.03125
        %v798 = vmul.f32 %v789, 0.03125
        %v799 = vmul.f32 %v791, 0.03125
        %v800 = vadd.f32 %v792, 1e-08
        %v801 = vadd.f32 %v793, 1e-08
        %v802 = vadd.f32 %v794, 1e-08
        %v803 = vadd.f32 %v795, 1e-08
        %v804 = vadd.f32 %v796, 1e-08
        %v805 = vadd.f32 %v797, 1e-08
        %v806 = vadd.f32 %v798, 1e-08
        %v807 = vadd.f32 %v799, 1e-08
        %v808 = vrsqrt.pop %v800
        %v809 = vrsqrt.pop %v801
        %v810 = vrsqrt.pop %v802
        %v811 = vrsqrt.pop %v803
        %v812 = vrsqrt.pop %v804
        %v813 = vrsqrt.pop %v805
        %v814 = vrsqrt.pop %v806
        %v815 = vrsqrt.pop %v807
        %v816 = vmul.f32 %v760, %v808
        %v817 = vmul.f32 %v761, %v809
        %v818 = vmul.f32 %v762, %v810
        %v819 = vmul.f32 %v763, %v811
        %v820 = vmul.f32 %v764, %v812
        %v821 = vmul.f32 %v765, %v813
        %v822 = vmul.f32 %v766, %v814
        %v823 = vmul.f32 %v767, %v815
        %v825 = vlaneseq
        %v826 = vshrl.u32 %v825, 7
        %v827 = vsub.s32 0, %v826
        %v828 = vrot.slane %v723, %v827
        %v830 = vmul.f32 %v816, %v828
        %v831 = vmul.f32 %v817, %v828
        %v832 = vmul.f32 %v818, %v828
        %v833 = vmul.f32 %v819, %v828
        %v834 = vmul.f32 %v820, %v828
        %v835 = vmul.f32 %v821, %v828
        %v836 = vmul.f32 %v822, %v828
        %v837 = vmul.f32 %v823, %v828
        %v839 = vlaneseq
        %v840 = vshrl.u32 %v839, 7
        %v841 = vsub.s32 0, %v840
        %v842 = vrot.slane %v725, %v841
        %v844 = vadd.f32 %v830, %v842
        %v845 = vadd.f32 %v831, %v842
        %v846 = vadd.f32 %v832, %v842
        %v847 = vadd.f32 %v833, %v842
        %v848 = vadd.f32 %v834, %v842
        %v849 = vadd.f32 %v835, %v842
        %v850 = vadd.f32 %v836, %v842
        %v851 = vadd.f32 %v837, %v842
        %s852 = smul.u32 %s709, 16
        %s853 = smul.addr %s852, 4
        %s854 = scalar_lea.vmem %s5, %s853
        %v855 = vld [vmem:[%s854] sm:$0xf]
        %v856 = vld [vmem:[%s854 + $0x4] sm:$0xf]
        %v857 = vld [vmem:[%s854 + $0x8] sm:$0xf]
        %v858 = vld [vmem:[%s854 + $0xc] sm:$0xf]
        %v859 = vld [vmem:[%s854 + $0x10] sm:$0xf]
        %v860 = vld [vmem:[%s854 + $0x14] sm:$0xf]
        %v861 = vld [vmem:[%s854 + $0x18] sm:$0xf]
        %v862 = vld [vmem:[%s854 + $0x1c] sm:$0xf]
        %v863 = vld [vmem:[%s854 + $0x20] sm:$0xf]
        %v864 = vld [vmem:[%s854 + $0x24] sm:$0xf]
        %v865 = vld [vmem:[%s854 + $0x28] sm:$0xf]
        %v866 = vld [vmem:[%s854 + $0x2c] sm:$0xf]
        %v867 = vld [vmem:[%s854 + $0x30] sm:$0xf]
        %v868 = vld [vmem:[%s854 + $0x34] sm:$0xf]
        %v869 = vld [vmem:[%s854 + $0x38] sm:$0xf]
        %v870 = vld [vmem:[%s854 + $0x3c] sm:$0xf]
        %s871 = scalar_lea.vmem %s6, %s709
        %v872 = vld [vmem:[%s871] sm:$0x1]
        %v873 = vpack.c.bf16 %v845, %v844
        %v874 = vpack.c.bf16 %v847, %v846
        %v875 = vpack.c.bf16 %v849, %v848
        %v876 = vpack.c.bf16 %v851, %v850
        %v878 = vlaneseq
        %v879 = vshrl.u32 %v878, 7
        %v880 = vsub.s32 0, %v879
        %v881 = vrot.slane %v872, %v880
        %v899 = vunpack.c.l.b16 %v855
        %v900 = vunpack.c.l.b16 %v856
        %v901 = vunpack.c.l.b16 %v857
        %v902 = vunpack.c.l.b16 %v858
        %v903 = vunpack.c.l.b16 %v859
        %v904 = vunpack.c.l.b16 %v860
        %v905 = vunpack.c.l.b16 %v861
        %v906 = vunpack.c.l.b16 %v862
        %v907 = vunpack.c.l.b16 %v863
        %v908 = vunpack.c.l.b16 %v864
        %v909 = vunpack.c.l.b16 %v865
        %v910 = vunpack.c.l.b16 %v866
        %v911 = vunpack.c.l.b16 %v867
        %v912 = vunpack.c.l.b16 %v868
        %v913 = vunpack.c.l.b16 %v869
        %v914 = vunpack.c.l.b16 %v870
        %v915 = vpack.c.b16 %v900, %v899
        %v916 = vpack.c.b16 %v902, %v901
        %v917 = vpack.c.b16 %v904, %v903
        %v918 = vpack.c.b16 %v906, %v905
        %v919 = vpack.c.b16 %v908, %v907
        %v920 = vpack.c.b16 %v910, %v909
        %v921 = vpack.c.b16 %v912, %v911
        %v922 = vpack.c.b16 %v914, %v913
        %931 = vmatprep.subr.bf16.mxu0 0
        %932 = vmatpush1.bf16.msra.mxu0 %v915
        %933 = vmatprep.subr.bf16.mxu0 0
        %934 = vmatpush1.bf16.msra.mxu0 %v916
        %935 = vmatprep.subr.bf16.mxu0 0
        %936 = vmatpush1.bf16.msra.mxu0 %v917
        %937 = vmatprep.subr.bf16.mxu0 0
        %938 = vmatpush1.bf16.msra.mxu0 %v918
        %939 = vmatprep.subr.bf16.mxu0 0
        %940 = vmatpush1.bf16.msra.mxu0 %v919
        %941 = vmatprep.subr.bf16.mxu0 0
        %942 = vmatpush1.bf16.msra.mxu0 %v920
        %943 = vmatprep.subr.bf16.mxu0 0
        %944 = vmatpush1.bf16.msra.mxu0 %v921
        %945 = vmatprep.subr.bf16.mxu0 0
        %946 = vmatpush1.bf16.msra.mxu0 %v922
        %947 = vmatprep.subr.bf16.mxu0 0
        %948 = vmatpush1.bf16.msra.mxu0 0
        %949 = vmatprep.subr.bf16.mxu0 0
        %950 = vmatpush1.bf16.msra.mxu0 0
        %951 = vmatprep.subr.bf16.mxu0 0
        %952 = vmatpush1.bf16.msra.mxu0 0
        %953 = vmatprep.subr.bf16.mxu0 0
        %954 = vmatpush1.bf16.msra.mxu0 0
        %955 = vmatprep.subr.bf16.mxu0 0
        %956 = vmatpush1.bf16.msra.mxu0 0
        %957 = vmatprep.subr.bf16.mxu0 0
        %958 = vmatpush1.bf16.msra.mxu0 0
        %959 = vmatprep.subr.bf16.mxu0 0
        %960 = vmatpush1.bf16.msra.mxu0 0
        %961 = vmatprep.subr.bf16.mxu0 0
        %962 = vmatpush1.bf16.msra.mxu0 0
        %963 = vmatprep.mubr.bf16.mxu0 0
        %964 = vmatmul.mubr.bf16.gmra.mrb[0].mxu0 %v873
        %v965 = vpop.f32.mrb[0].mxu0
        %v966 = vadd.f32 %v881, %v965
        %v967 = vpop.f32.mrb[0].mxu0
        %v968 = vpop.f32.mrb[0].mxu0
        %v969 = vadd.f32 %v881, %v968
        %v970 = vpop.f32.mrb[0].mxu0
        %971 = vmatprep.mubr.bf16.mxu0 0
        %972 = vmatmul.mubr.bf16.gmra.mrb[0].mxu0 %v874
        %v973 = vpop.f32.mrb[0].mxu0
        %v974 = vadd.f32 %v881, %v973
        %v975 = vpop.f32.mrb[0].mxu0
        %v976 = vpop.f32.mrb[0].mxu0
        %v977 = vadd.f32 %v881, %v976
        %v978 = vpop.f32.mrb[0].mxu0
        %979 = vmatprep.mubr.bf16.mxu0 0
        %980 = vmatmul.mubr.bf16.gmra.mrb[0].mxu0 %v875
        %v981 = vpop.f32.mrb[0].mxu0
        %v982 = vadd.f32 %v881, %v981
        %v983 = vpop.f32.mrb[0].mxu0
        %v984 = vpop.f32.mrb[0].mxu0
        %v985 = vadd.f32 %v881, %v984
        %v986 = vpop.f32.mrb[0].mxu0
        %987 = vmatprep.mubr.bf16.mxu0 0
        %988 = vmatmul.mubr.bf16.gmra.mrb[0].mxu0 %v876
        %v989 = vpop.f32.mrb[0].mxu0
        %v990 = vadd.f32 %v881, %v989
        %v991 = vpop.f32.mrb[0].mxu0
        %v992 = vpop.f32.mrb[0].mxu0
        %v993 = vadd.f32 %v881, %v992
        %v994 = vpop.f32.mrb[0].mxu0
        %995 = vdwg.mxu0
        %s996 = smul.u32 %s709, 32
        %s997 = smul.addr %s996, 4
        %s998 = scalar_lea.vmem %s7, %s997
        %v999 = vld [vmem:[%s998] sm:$0xff]
        %v1000 = vld [vmem:[%s998 + $0x8] sm:$0xff]
        %v1001 = vld [vmem:[%s998 + $0x10] sm:$0xff]
        %v1002 = vld [vmem:[%s998 + $0x18] sm:$0xff]
        %v1003 = vld [vmem:[%s998 + $0x20] sm:$0xff]
        %v1004 = vld [vmem:[%s998 + $0x28] sm:$0xff]
        %v1005 = vld [vmem:[%s998 + $0x30] sm:$0xff]
        %v1006 = vld [vmem:[%s998 + $0x38] sm:$0xff]
        %v1007 = vld [vmem:[%s998 + $0x40] sm:$0xff]
        %v1008 = vld [vmem:[%s998 + $0x48] sm:$0xff]
        %v1009 = vld [vmem:[%s998 + $0x50] sm:$0xff]
        %v1010 = vld [vmem:[%s998 + $0x58] sm:$0xff]
        %v1011 = vld [vmem:[%s998 + $0x60] sm:$0xff]
        %v1012 = vld [vmem:[%s998 + $0x68] sm:$0xff]
        %v1013 = vld [vmem:[%s998 + $0x70] sm:$0xff]
        %v1014 = vld [vmem:[%s998 + $0x78] sm:$0xff]
        %s1015 = smul.u32 %s709, 2
        %s1016 = scalar_lea.vmem %s8, %s1015
        %v1017 = vld [vmem:[%s1016] sm:$0x3]
        %v1018 = vpack.c.bf16 %v715, %v714
        %v1019 = vpack.c.bf16 %v717, %v716
        %v1020 = vpack.c.bf16 %v719, %v718
        %v1021 = vpack.c.bf16 %v721, %v720
        %v1023 = vlaneseq
        %v1024 = vshrl.u32 %v1023, 7
        %v1025 = vsub.s32 0, %v1024
        %v1026 = vrot.slane %v1017, %v1025
        %v1027 = vlaneseq
        %v1028 = vshrl.u32 %v1027, 7
        %v1029 = vsub.s32 1, %v1028
        %v1030 = vrot.slane %v1017, %v1029
        %v1049 = vunpack.c.l.b16 %v999
        %v1050 = vunpack.c.h.b16 %v999
        %v1051 = vunpack.c.l.b16 %v1000
        %v1052 = vunpack.c.h.b16 %v1000
        %v1053 = vunpack.c.l.b16 %v1001
        %v1054 = vunpack.c.h.b16 %v1001
        %v1055 = vunpack.c.l.b16 %v1002
        %v1056 = vunpack.c.h.b16 %v1002
        %v1057 = vunpack.c.l.b16 %v1003
        %v1058 = vunpack.c.h.b16 %v1003
        %v1059 = vunpack.c.l.b16 %v1004
        %v1060 = vunpack.c.h.b16 %v1004
        %v1061 = vunpack.c.l.b16 %v1005
        %v1062 = vunpack.c.h.b16 %v1005
        %v1063 = vunpack.c.l.b16 %v1006
        %v1064 = vunpack.c.h.b16 %v1006
        %v1065 = vunpack.c.l.b16 %v1007
        %v1066 = vunpack.c.h.b16 %v1007
        %v1067 = vunpack.c.l.b16 %v1008
        %v1068 = vunpack.c.h.b16 %v1008
        %v1069 = vunpack.c.l.b16 %v1009
        %v1070 = vunpack.c.h.b16 %v1009
        %v1071 = vunpack.c.l.b16 %v1010
        %v1072 = vunpack.c.h.b16 %v1010
        %v1073 = vunpack.c.l.b16 %v1011
        %v1074 = vunpack.c.h.b16 %v1011
        %v1075 = vunpack.c.l.b16 %v1012
        %v1076 = vunpack.c.h.b16 %v1012
        %v1077 = vunpack.c.l.b16 %v1013
        %v1078 = vunpack.c.h.b16 %v1013
        %v1079 = vunpack.c.l.b16 %v1014
        %v1080 = vunpack.c.h.b16 %v1014
        %v1081 = vpack.c.b16 %v1051, %v1049
        %v1082 = vpack.c.b16 %v1052, %v1050
        %v1083 = vpack.c.b16 %v1055, %v1053
        %v1084 = vpack.c.b16 %v1056, %v1054
        %v1085 = vpack.c.b16 %v1059, %v1057
        %v1086 = vpack.c.b16 %v1060, %v1058
        %v1087 = vpack.c.b16 %v1063, %v1061
        %v1088 = vpack.c.b16 %v1064, %v1062
        %v1089 = vpack.c.b16 %v1067, %v1065
        %v1090 = vpack.c.b16 %v1068, %v1066
        %v1091 = vpack.c.b16 %v1071, %v1069
        %v1092 = vpack.c.b16 %v1072, %v1070
        %v1093 = vpack.c.b16 %v1075, %v1073
        %v1094 = vpack.c.b16 %v1076, %v1074
        %v1095 = vpack.c.b16 %v1079, %v1077
        %v1096 = vpack.c.b16 %v1080, %v1078
        %1113 = vmatprep.subr.bf16.mxu0 %v1082
        %1114 = vmatpush1.bf16.msra.mxu0 %v1081
        %1115 = vmatprep.subr.bf16.mxu0 %v1084
        %1116 = vmatpush1.bf16.msra.mxu0 %v1083
        %1117 = vmatprep.subr.bf16.mxu0 %v1086
        %1118 = vmatpush1.bf16.msra.mxu0 %v1085
        %1119 = vmatprep.subr.bf16.mxu0 %v1088
        %1120 = vmatpush1.bf16.msra.mxu0 %v1087
        %1121 = vmatprep.subr.bf16.mxu0 %v1090
        %1122 = vmatpush1.bf16.msra.mxu0 %v1089
        %1123 = vmatprep.subr.bf16.mxu0 %v1092
        %1124 = vmatpush1.bf16.msra.mxu0 %v1091
        %1125 = vmatprep.subr.bf16.mxu0 %v1094
        %1126 = vmatpush1.bf16.msra.mxu0 %v1093
        %1127 = vmatprep.subr.bf16.mxu0 %v1096
        %1128 = vmatpush1.bf16.msra.mxu0 %v1095
        %1129 = vmatprep.subr.bf16.mxu0 0
        %1130 = vmatpush1.bf16.msra.mxu0 0
        %1131 = vmatprep.subr.bf16.mxu0 0
        %1132 = vmatpush1.bf16.msra.mxu0 0
        %1133 = vmatprep.subr.bf16.mxu0 0
        %1134 = vmatpush1.bf16.msra.mxu0 0
        %1135 = vmatprep.subr.bf16.mxu0 0
        %1136 = vmatpush1.bf16.msra.mxu0 0
        %1137 = vmatprep.subr.bf16.mxu0 0
        %1138 = vmatpush1.bf16.msra.mxu0 0
        %1139 = vmatprep.subr.bf16.mxu0 0
        %1140 = vmatpush1.bf16.msra.mxu0 0
        %1141 = vmatprep.subr.bf16.mxu0 0
        %1142 = vmatpush1.bf16.msra.mxu0 0
        %1143 = vmatprep.subr.bf16.mxu0 0
        %1144 = vmatpush1.bf16.msra.mxu0 0
        %1145 = vmatprep.mubr.bf16.mxu0 0
        %1146 = vmatmul.mubr.bf16.gmra.mrb[0].mxu0 %v1018
        %v1147 = vpop.f32.mrb[0].mxu0
        %v1148 = vadd.f32 %v1026, %v1147
        %v1149 = vpop.f32.mrb[0].mxu0
        %v1150 = vadd.f32 %v1030, %v1149
        %v1151 = vpop.f32.mrb[0].mxu0
        %v1152 = vadd.f32 %v1026, %v1151
        %v1153 = vpop.f32.mrb[0].mxu0
        %v1154 = vadd.f32 %v1030, %v1153
        %1155 = vmatprep.mubr.bf16.mxu0 0
        %1156 = vmatmul.mubr.bf16.gmra.mrb[0].mxu0 %v1019
        %v1157 = vpop.f32.mrb[0].mxu0
        %v1158 = vadd.f32 %v1026, %v1157
        %v1159 = vpop.f32.mrb[0].mxu0
        %v1160 = vadd.f32 %v1030, %v1159
        %v1161 = vpop.f32.mrb[0].mxu0
        %v1162 = vadd.f32 %v1026, %v1161
        %v1163 = vpop.f32.mrb[0].mxu0
        %v1164 = vadd.f32 %v1030, %v1163
        %1165 = vmatprep.mubr.bf16.mxu0 0
        %1166 = vmatmul.mubr.bf16.gmra.mrb[0].mxu0 %v1020
        %v1167 = vpop.f32.mrb[0].mxu0
        %v1168 = vadd.f32 %v1026, %v1167
        %v1169 = vpop.f32.mrb[0].mxu0
        %v1170 = vadd.f32 %v1030, %v1169
        %v1171 = vpop.f32.mrb[0].mxu0
        %v1172 = vadd.f32 %v1026, %v1171
        %v1173 = vpop.f32.mrb[0].mxu0
        %v1174 = vadd.f32 %v1030, %v1173
        %1175 = vmatprep.mubr.bf16.mxu0 0
        %1176 = vmatmul.mubr.bf16.gmra.mrb[0].mxu0 %v1021
        %v1177 = vpop.f32.mrb[0].mxu0
        %v1178 = vadd.f32 %v1026, %v1177
        %v1179 = vpop.f32.mrb[0].mxu0
        %v1180 = vadd.f32 %v1030, %v1179
        %v1181 = vpop.f32.mrb[0].mxu0
        %v1182 = vadd.f32 %v1026, %v1181
        %v1183 = vpop.f32.mrb[0].mxu0
        %v1184 = vadd.f32 %v1030, %v1183
        %1185 = vdwg.mxu0
        %v1186 = vpack.c.bf16 %v966, %v966
        %v1187 = vpack.c.bf16 %v969, %v969
        %v1188 = vpack.c.bf16 %v974, %v974
        %v1189 = vpack.c.bf16 %v977, %v977
        %v1190 = vpack.c.bf16 %v982, %v982
        %v1191 = vpack.c.bf16 %v985, %v985
        %v1192 = vpack.c.bf16 %v990, %v990
        %v1193 = vpack.c.bf16 %v993, %v993
        %v1194 = vpack.c.bf16 %v1148, %v1148
        %v1195 = vpack.c.bf16 %v1152, %v1152
        %v1196 = vpack.c.bf16 %v1158, %v1158
        %v1197 = vpack.c.bf16 %v1162, %v1162
        %v1198 = vpack.c.bf16 %v1168, %v1168
        %v1199 = vpack.c.bf16 %v1172, %v1172
        %v1200 = vpack.c.bf16 %v1178, %v1178
        %v1201 = vpack.c.bf16 %v1182, %v1182
        %1202 = vmatprep.subr.bf16.mxu0 0
        %1203 = vmatpush1.bf16.xpose.msra.mxu0 %v1194
        %1204 = vmatprep.subr.bf16.mxu0 0
        %1205 = vmatpush1.bf16.xpose.msra.mxu0 0
        %1206 = vmatprep.subr.bf16.mxu0 0
        %1207 = vmatpush1.bf16.xpose.msra.mxu0 0
        %1208 = vmatprep.subr.bf16.mxu0 0
        %1209 = vmatpush1.bf16.xpose.msra.mxu0 0
        %1210 = vmatprep.subr.bf16.mxu0 0
        %1211 = vmatpush1.bf16.xpose.msra.mxu0 0
        %1212 = vmatprep.subr.bf16.mxu0 0
        %1213 = vmatpush1.bf16.xpose.msra.mxu0 0
        %1214 = vmatprep.subr.bf16.mxu0 0
        %1215 = vmatpush1.bf16.xpose.msra.mxu0 0
        %1216 = vmatprep.subr.bf16.mxu0 0
        %1217 = vmatpush1.bf16.xpose.msra.mxu0 0
        %1218 = vmatprep.subr.bf16.mxu0 0
        %1219 = vmatpush1.bf16.xpose.msra.mxu0 0
        %1220 = vmatprep.subr.bf16.mxu0 0
        %1221 = vmatpush1.bf16.xpose.msra.mxu0 0
        %1222 = vmatprep.subr.bf16.mxu0 0
        %1223 = vmatpush1.bf16.xpose.msra.mxu0 0
        %1224 = vmatprep.subr.bf16.mxu0 0
        %1225 = vmatpush1.bf16.xpose.msra.mxu0 0
        %1226 = vmatprep.subr.bf16.mxu0 0
        %1227 = vmatpush1.bf16.xpose.msra.mxu0 0
        %1228 = vmatprep.subr.bf16.mxu0 0
        %1229 = vmatpush1.bf16.xpose.msra.mxu0 0
        %1230 = vmatprep.subr.bf16.mxu0 0
        %1231 = vmatpush1.bf16.xpose.msra.mxu0 0
        %1232 = vmatprep.subr.bf16.mxu0 0
        %1233 = vmatpush1.bf16.xpose.msra.mxu0 0
        %1234 = vmatprep.mubr.bf16.mxu0 0
        %1235 = vmatmul.mubr.bf16.gmra.mrb[0].mxu0 %v1186
        %v1236 = vpop.f32.mrb[0].mxu0
        %v1237 = vadd.f32 0.0, %v1236
        %v1238 = vpop.f32.mrb[0].mxu0
        %v1239 = vpop.f32.mrb[0].mxu0
        %v1240 = vpop.f32.mrb[0].mxu0
        %1241 = vdwg.mxu0
        %1242 = vmatprep.subr.bf16.mxu0 0
        %1243 = vmatpush1.bf16.xpose.msra.mxu0 %v1195
        %1244 = vmatprep.subr.bf16.mxu0 0
        %1245 = vmatpush1.bf16.xpose.msra.mxu0 0
        %1246 = vmatprep.subr.bf16.mxu0 0
        %1247 = vmatpush1.bf16.xpose.msra.mxu0 0
        %1248 = vmatprep.subr.bf16.mxu0 0
        %1249 = vmatpush1.bf16.xpose.msra.mxu0 0
        %1250 = vmatprep.subr.bf16.mxu0 0
        %1251 = vmatpush1.bf16.xpose.msra.mxu0 0
        %1252 = vmatprep.subr.bf16.mxu0 0
        %1253 = vmatpush1.bf16.xpose.msra.mxu0 0
        %1254 = vmatprep.subr.bf16.mxu0 0
        %1255 = vmatpush1.bf16.xpose.msra.mxu0 0
        %1256 = vmatprep.subr.bf16.mxu0 0
        %1257 = vmatpush1.bf16.xpose.msra.mxu0 0
        %1258 = vmatprep.subr.bf16.mxu0 0
        %1259 = vmatpush1.bf16.xpose.msra.mxu0 0
        %1260 = vmatprep.subr.bf16.mxu0 0
        %1261 = vmatpush1.bf16.xpose.msra.mxu0 0
        %1262 = vmatprep.subr.bf16.mxu0 0
        %1263 = vmatpush1.bf16.xpose.msra.mxu0 0
        %1264 = vmatprep.subr.bf16.mxu0 0
        %1265 = vmatpush1.bf16.xpose.msra.mxu0 0
        %1266 = vmatprep.subr.bf16.mxu0 0
        %1267 = vmatpush1.bf16.xpose.msra.mxu0 0
        %1268 = vmatprep.subr.bf16.mxu0 0
        %1269 = vmatpush1.bf16.xpose.msra.mxu0 0
        %1270 = vmatprep.subr.bf16.mxu0 0
        %1271 = vmatpush1.bf16.xpose.msra.mxu0 0
        %1272 = vmatprep.subr.bf16.mxu0 0
        %1273 = vmatpush1.bf16.xpose.msra.mxu0 0
        %1274 = vmatprep.mubr.bf16.mxu0 0
        %1275 = vmatmul.mubr.bf16.gmra.mrb[0].mxu0 %v1187
        %v1276 = vpop.f32.mrb[0].mxu0
        %v1277 = vadd.f32 0.0, %v1276
        %v1278 = vpop.f32.mrb[0].mxu0
        %v1279 = vpop.f32.mrb[0].mxu0
        %v1280 = vpop.f32.mrb[0].mxu0
        %1281 = vdwg.mxu0
        %1282 = vmatprep.subr.bf16.mxu0 0
        %1283 = vmatpush1.bf16.xpose.msra.mxu0 %v1196
        %1284 = vmatprep.subr.bf16.mxu0 0
        %1285 = vmatpush1.bf16.xpose.msra.mxu0 0
        %1286 = vmatprep.subr.bf16.mxu0 0
        %1287 = vmatpush1.bf16.xpose.msra.mxu0 0
        %1288 = vmatprep.subr.bf16.mxu0 0
        %1289 = vmatpush1.bf16.xpose.msra.mxu0 0
        %1290 = vmatprep.subr.bf16.mxu0 0
        %1291 = vmatpush1.bf16.xpose.msra.mxu0 0
        %1292 = vmatprep.subr.bf16.mxu0 0
        %1293 = vmatpush1.bf16.xpose.msra.mxu0 0
        %1294 = vmatprep.subr.bf16.mxu0 0
        %1295 = vmatpush1.bf16.xpose.msra.mxu0 0
        %1296 = vmatprep.subr.bf16.mxu0 0
        %1297 = vmatpush1.bf16.xpose.msra.mxu0 0
        %1298 = vmatprep.subr.bf16.mxu0 0
        %1299 = vmatpush1.bf16.xpose.msra.mxu0 0
        %1300 = vmatprep.subr.bf16.mxu0 0
        %1301 = vmatpush1.bf16.xpose.msra.mxu0 0
        %1302 = vmatprep.subr.bf16.mxu0 0
        %1303 = vmatpush1.bf16.xpose.msra.mxu0 0
        %1304 = vmatprep.subr.bf16.mxu0 0
        %1305 = vmatpush1.bf16.xpose.msra.mxu0 0
        %1306 = vmatprep.subr.bf16.mxu0 0
        %1307 = vmatpush1.bf16.xpose.msra.mxu0 0
        %1308 = vmatprep.subr.bf16.mxu0 0
        %1309 = vmatpush1.bf16.xpose.msra.mxu0 0
        %1310 = vmatprep.subr.bf16.mxu0 0
        %1311 = vmatpush1.bf16.xpose.msra.mxu0 0
        %1312 = vmatprep.subr.bf16.mxu0 0
        %1313 = vmatpush1.bf16.xpose.msra.mxu0 0
        %1314 = vmatprep.mubr.bf16.mxu0 0
        %1315 = vmatmul.mubr.bf16.gmra.mrb[0].mxu0 %v1188
        %v1316 = vpop.f32.mrb[0].mxu0
        %v1317 = vadd.f32 0.0, %v1316
        %v1318 = vpop.f32.mrb[0].mxu0
        %v1319 = vpop.f32.mrb[0].mxu0
        %v1320 = vpop.f32.mrb[0].mxu0
        %1321 = vdwg.mxu0
        %1322 = vmatprep.subr.bf16.mxu0 0
        %1323 = vmatpush1.bf16.xpose.msra.mxu0 %v1197
        %1324 = vmatprep.subr.bf16.mxu0 0
        %1325 = vmatpush1.bf16.xpose.msra.mxu0 0
        %1326 = vmatprep.subr.bf16.mxu0 0
        %1327 = vmatpush1.bf16.xpose.msra.mxu0 0
        %1328 = vmatprep.subr.bf16.mxu0 0
        %1329 = vmatpush1.bf16.xpose.msra.mxu0 0
        %1330 = vmatprep.subr.bf16.mxu0 0
        %1331 = vmatpush1.bf16.xpose.msra.mxu0 0
        %1332 = vmatprep.subr.bf16.mxu0 0
        %1333 = vmatpush1.bf16.xpose.msra.mxu0 0
        %1334 = vmatprep.subr.bf16.mxu0 0
        %1335 = vmatpush1.bf16.xpose.msra.mxu0 0
        %1336 = vmatprep.subr.bf16.mxu0 0
        %1337 = vmatpush1.bf16.xpose.msra.mxu0 0
        %1338 = vmatprep.subr.bf16.mxu0 0
        %1339 = vmatpush1.bf16.xpose.msra.mxu0 0
        %1340 = vmatprep.subr.bf16.mxu0 0
        %1341 = vmatpush1.bf16.xpose.msra.mxu0 0
        %1342 = vmatprep.subr.bf16.mxu0 0
        %1343 = vmatpush1.bf16.xpose.msra.mxu0 0
        %1344 = vmatprep.subr.bf16.mxu0 0
        %1345 = vmatpush1.bf16.xpose.msra.mxu0 0
        %1346 = vmatprep.subr.bf16.mxu0 0
        %1347 = vmatpush1.bf16.xpose.msra.mxu0 0
        %1348 = vmatprep.subr.bf16.mxu0 0
        %1349 = vmatpush1.bf16.xpose.msra.mxu0 0
        %1350 = vmatprep.subr.bf16.mxu0 0
        %1351 = vmatpush1.bf16.xpose.msra.mxu0 0
        %1352 = vmatprep.subr.bf16.mxu0 0
        %1353 = vmatpush1.bf16.xpose.msra.mxu0 0
        %1354 = vmatprep.mubr.bf16.mxu0 0
        %1355 = vmatmul.mubr.bf16.gmra.mrb[0].mxu0 %v1189
        %v1356 = vpop.f32.mrb[0].mxu0
        %v1357 = vadd.f32 0.0, %v1356
        %v1358 = vpop.f32.mrb[0].mxu0
        %v1359 = vpop.f32.mrb[0].mxu0
        %v1360 = vpop.f32.mrb[0].mxu0
        %1361 = vdwg.mxu0
        %1362 = vmatprep.subr.bf16.mxu0 0
        %1363 = vmatpush1.bf16.xpose.msra.mxu0 %v1198
        %1364 = vmatprep.subr.bf16.mxu0 0
        %1365 = vmatpush1.bf16.xpose.msra.mxu0 0
        %1366 = vmatprep.subr.bf16.mxu0 0
        %1367 = vmatpush1.bf16.xpose.msra.mxu0 0
        %1368 = vmatprep.subr.bf16.mxu0 0
        %1369 = vmatpush1.bf16.xpose.msra.mxu0 0
        %1370 = vmatprep.subr.bf16.mxu0 0
        %1371 = vmatpush1.bf16.xpose.msra.mxu0 0
        %1372 = vmatprep.subr.bf16.mxu0 0
        %1373 = vmatpush1.bf16.xpose.msra.mxu0 0
        %1374 = vmatprep.subr.bf16.mxu0 0
        %1375 = vmatpush1.bf16.xpose.msra.mxu0 0
        %1376 = vmatprep.subr.bf16.mxu0 0
        %1377 = vmatpush1.bf16.xpose.msra.mxu0 0
        %1378 = vmatprep.subr.bf16.mxu0 0
        %1379 = vmatpush1.bf16.xpose.msra.mxu0 0
        %1380 = vmatprep.subr.bf16.mxu0 0
        %1381 = vmatpush1.bf16.xpose.msra.mxu0 0
        %1382 = vmatprep.subr.bf16.mxu0 0
        %1383 = vmatpush1.bf16.xpose.msra.mxu0 0
        %1384 = vmatprep.subr.bf16.mxu0 0
        %1385 = vmatpush1.bf16.xpose.msra.mxu0 0
        %1386 = vmatprep.subr.bf16.mxu0 0
        %1387 = vmatpush1.bf16.xpose.msra.mxu0 0
        %1388 = vmatprep.subr.bf16.mxu0 0
        %1389 = vmatpush1.bf16.xpose.msra.mxu0 0
        %1390 = vmatprep.subr.bf16.mxu0 0
        %1391 = vmatpush1.bf16.xpose.msra.mxu0 0
        %1392 = vmatprep.subr.bf16.mxu0 0
        %1393 = vmatpush1.bf16.xpose.msra.mxu0 0
        %1394 = vmatprep.mubr.bf16.mxu0 0
        %1395 = vmatmul.mubr.bf16.gmra.mrb[0].mxu0 %v1190
        %v1396 = vpop.f32.mrb[0].mxu0
        %v1397 = vadd.f32 0.0, %v1396
        %v1398 = vpop.f32.mrb[0].mxu0
        %v1399 = vpop.f32.mrb[0].mxu0
        %v1400 = vpop.f32.mrb[0].mxu0
        %1401 = vdwg.mxu0
        %1402 = vmatprep.subr.bf16.mxu0 0
        %1403 = vmatpush1.bf16.xpose.msra.mxu0 %v1199
        %1404 = vmatprep.subr.bf16.mxu0 0
        %1405 = vmatpush1.bf16.xpose.msra.mxu0 0
        %1406 = vmatprep.subr.bf16.mxu0 0
        %1407 = vmatpush1.bf16.xpose.msra.mxu0 0
        %1408 = vmatprep.subr.bf16.mxu0 0
        %1409 = vmatpush1.bf16.xpose.msra.mxu0 0
        %1410 = vmatprep.subr.bf16.mxu0 0
        %1411 = vmatpush1.bf16.xpose.msra.mxu0 0
        %1412 = vmatprep.subr.bf16.mxu0 0
        %1413 = vmatpush1.bf16.xpose.msra.mxu0 0
        %1414 = vmatprep.subr.bf16.mxu0 0
        %1415 = vmatpush1.bf16.xpose.msra.mxu0 0
        %1416 = vmatprep.subr.bf16.mxu0 0
        %1417 = vmatpush1.bf16.xpose.msra.mxu0 0
        %1418 = vmatprep.subr.bf16.mxu0 0
        %1419 = vmatpush1.bf16.xpose.msra.mxu0 0
        %1420 = vmatprep.subr.bf16.mxu0 0
        %1421 = vmatpush1.bf16.xpose.msra.mxu0 0
        %1422 = vmatprep.subr.bf16.mxu0 0
        %1423 = vmatpush1.bf16.xpose.msra.mxu0 0
        %1424 = vmatprep.subr.bf16.mxu0 0
        %1425 = vmatpush1.bf16.xpose.msra.mxu0 0
        %1426 = vmatprep.subr.bf16.mxu0 0
        %1427 = vmatpush1.bf16.xpose.msra.mxu0 0
        %1428 = vmatprep.subr.bf16.mxu0 0
        %1429 = vmatpush1.bf16.xpose.msra.mxu0 0
        %1430 = vmatprep.subr.bf16.mxu0 0
        %1431 = vmatpush1.bf16.xpose.msra.mxu0 0
        %1432 = vmatprep.subr.bf16.mxu0 0
        %1433 = vmatpush1.bf16.xpose.msra.mxu0 0
        %1434 = vmatprep.mubr.bf16.mxu0 0
        %1435 = vmatmul.mubr.bf16.gmra.mrb[0].mxu0 %v1191
        %v1436 = vpop.f32.mrb[0].mxu0
        %v1437 = vadd.f32 0.0, %v1436
        %v1438 = vpop.f32.mrb[0].mxu0
        %v1439 = vpop.f32.mrb[0].mxu0
        %v1440 = vpop.f32.mrb[0].mxu0
        %1441 = vdwg.mxu0
        %1442 = vmatprep.subr.bf16.mxu0 0
        %1443 = vmatpush1.bf16.xpose.msra.mxu0 %v1200
        %1444 = vmatprep.subr.bf16.mxu0 0
        %1445 = vmatpush1.bf16.xpose.msra.mxu0 0
        %1446 = vmatprep.subr.bf16.mxu0 0
        %1447 = vmatpush1.bf16.xpose.msra.mxu0 0
        %1448 = vmatprep.subr.bf16.mxu0 0
        %1449 = vmatpush1.bf16.xpose.msra.mxu0 0
        %1450 = vmatprep.subr.bf16.mxu0 0
        %1451 = vmatpush1.bf16.xpose.msra.mxu0 0
        %1452 = vmatprep.subr.bf16.mxu0 0
        %1453 = vmatpush1.bf16.xpose.msra.mxu0 0
        %1454 = vmatprep.subr.bf16.mxu0 0
        %1455 = vmatpush1.bf16.xpose.msra.mxu0 0
        %1456 = vmatprep.subr.bf16.mxu0 0
        %1457 = vmatpush1.bf16.xpose.msra.mxu0 0
        %1458 = vmatprep.subr.bf16.mxu0 0
        %1459 = vmatpush1.bf16.xpose.msra.mxu0 0
        %1460 = vmatprep.subr.bf16.mxu0 0
        %1461 = vmatpush1.bf16.xpose.msra.mxu0 0
        %1462 = vmatprep.subr.bf16.mxu0 0
        %1463 = vmatpush1.bf16.xpose.msra.mxu0 0
        %1464 = vmatprep.subr.bf16.mxu0 0
        %1465 = vmatpush1.bf16.xpose.msra.mxu0 0
        %1466 = vmatprep.subr.bf16.mxu0 0
        %1467 = vmatpush1.bf16.xpose.msra.mxu0 0
        %1468 = vmatprep.subr.bf16.mxu0 0
        %1469 = vmatpush1.bf16.xpose.msra.mxu0 0
        %1470 = vmatprep.subr.bf16.mxu0 0
        %1471 = vmatpush1.bf16.xpose.msra.mxu0 0
        %1472 = vmatprep.subr.bf16.mxu0 0
        %1473 = vmatpush1.bf16.xpose.msra.mxu0 0
        %1474 = vmatprep.mubr.bf16.mxu0 0
        %1475 = vmatmul.mubr.bf16.gmra.mrb[0].mxu0 %v1192
        %v1476 = vpop.f32.mrb[0].mxu0
        %v1477 = vadd.f32 0.0, %v1476
        %v1478 = vpop.f32.mrb[0].mxu0
        %v1479 = vpop.f32.mrb[0].mxu0
        %v1480 = vpop.f32.mrb[0].mxu0
        %1481 = vdwg.mxu0
        %1482 = vmatprep.subr.bf16.mxu0 0
        %1483 = vmatpush1.bf16.xpose.msra.mxu0 %v1201
        %1484 = vmatprep.subr.bf16.mxu0 0
        %1485 = vmatpush1.bf16.xpose.msra.mxu0 0
        %1486 = vmatprep.subr.bf16.mxu0 0
        %1487 = vmatpush1.bf16.xpose.msra.mxu0 0
        %1488 = vmatprep.subr.bf16.mxu0 0
        %1489 = vmatpush1.bf16.xpose.msra.mxu0 0
        %1490 = vmatprep.subr.bf16.mxu0 0
        %1491 = vmatpush1.bf16.xpose.msra.mxu0 0
        %1492 = vmatprep.subr.bf16.mxu0 0
        %1493 = vmatpush1.bf16.xpose.msra.mxu0 0
        %1494 = vmatprep.subr.bf16.mxu0 0
        %1495 = vmatpush1.bf16.xpose.msra.mxu0 0
        %1496 = vmatprep.subr.bf16.mxu0 0
        %1497 = vmatpush1.bf16.xpose.msra.mxu0 0
        %1498 = vmatprep.subr.bf16.mxu0 0
        %1499 = vmatpush1.bf16.xpose.msra.mxu0 0
        %1500 = vmatprep.subr.bf16.mxu0 0
        %1501 = vmatpush1.bf16.xpose.msra.mxu0 0
        %1502 = vmatprep.subr.bf16.mxu0 0
        %1503 = vmatpush1.bf16.xpose.msra.mxu0 0
        %1504 = vmatprep.subr.bf16.mxu0 0
        %1505 = vmatpush1.bf16.xpose.msra.mxu0 0
        %1506 = vmatprep.subr.bf16.mxu0 0
        %1507 = vmatpush1.bf16.xpose.msra.mxu0 0
        %1508 = vmatprep.subr.bf16.mxu0 0
        %1509 = vmatpush1.bf16.xpose.msra.mxu0 0
        %1510 = vmatprep.subr.bf16.mxu0 0
        %1511 = vmatpush1.bf16.xpose.msra.mxu0 0
        %1512 = vmatprep.subr.bf16.mxu0 0
        %1513 = vmatpush1.bf16.xpose.msra.mxu0 0
        %1514 = vmatprep.mubr.bf16.mxu0 0
        %1515 = vmatmul.mubr.bf16.gmra.mrb[0].mxu0 %v1193
        %v1516 = vpop.f32.mrb[0].mxu0
        %v1517 = vadd.f32 0.0, %v1516
        %v1518 = vpop.f32.mrb[0].mxu0
        %v1519 = vpop.f32.mrb[0].mxu0
        %v1520 = vpop.f32.mrb[0].mxu0
        %1521 = vdwg.mxu0
        %v1522 = vsel %vm707, 1, 0
        %vm1523 = vcmp.eq.s32.totalorder %v1522, 1
        %v1524 = vsel %vm1523, %v1237, -1e+30
        %v1525 = vsel %vm1523, %v1277, -1e+30
        %v1526 = vsel %vm1523, %v1317, -1e+30
        %v1527 = vsel %vm1523, %v1357, -1e+30
        %v1528 = vsel %vm1523, %v1397, -1e+30
        %v1529 = vsel %vm1523, %v1437, -1e+30
        %v1530 = vsel %vm1523, %v1477, -1e+30
        %v1531 = vsel %vm1523, %v1517, -1e+30
        %vm1532 = vcmask 64512
        %v1533 = vsel %vm1532, %v1524, -inf
        %1534 = vmax.xlane.f32.xlu0 %v1533
        %v1535 = vpop.xlane.xlu0 %1534
        %v1536 = vsel %vm1532, %v1525, -inf
        %1537 = vmax.xlane.f32.xlu0 %v1536
        %v1538 = vpop.xlane.xlu0 %1537
        %v1539 = vsel %vm1532, %v1526, -inf
        %1540 = vmax.xlane.f32.xlu0 %v1539
        %v1541 = vpop.xlane.xlu0 %1540
        %v1542 = vsel %vm1532, %v1527, -inf
        %1543 = vmax.xlane.f32.xlu0 %v1542
        %v1544 = vpop.xlane.xlu0 %1543
        %v1545 = vsel %vm1532, %v1528, -inf
        %1546 = vmax.xlane.f32.xlu0 %v1545
        %v1547 = vpop.xlane.xlu0 %1546
        %v1548 = vsel %vm1532, %v1529, -inf
        %1549 = vmax.xlane.f32.xlu0 %v1548
        %v1550 = vpop.xlane.xlu0 %1549
        %v1551 = vsel %vm1532, %v1530, -inf
        %1552 = vmax.xlane.f32.xlu0 %v1551
        %v1553 = vpop.xlane.xlu0 %1552
        %v1554 = vsel %vm1532, %v1531, -inf
        %1555 = vmax.xlane.f32.xlu0 %v1554
        %v1556 = vpop.xlane.xlu0 %1555
        %v1557 = vsub.f32 %v1524, %v1535
        %v1558 = vsub.f32 %v1525, %v1538
        %v1559 = vsub.f32 %v1526, %v1541
        %v1560 = vsub.f32 %v1527, %v1544
        %v1561 = vsub.f32 %v1528, %v1547
        %v1562 = vsub.f32 %v1529, %v1550
        %v1563 = vsub.f32 %v1530, %v1553
        %v1564 = vsub.f32 %v1531, %v1556
        %v1565 = vmul.f32 %v1557, 1.442695
        %v1566 = vpow.pop %v1565
        %v1567 = vmul.f32 %v1558, 1.442695
        %v1568 = vpow.pop %v1567
        %v1569 = vmul.f32 %v1559, 1.442695
        %v1570 = vpow.pop %v1569
        %v1571 = vmul.f32 %v1560, 1.442695
        %v1572 = vpow.pop %v1571
        %v1573 = vmul.f32 %v1561, 1.442695
        %v1574 = vpow.pop %v1573
        %v1575 = vmul.f32 %v1562, 1.442695
        %v1576 = vpow.pop %v1575
        %v1577 = vmul.f32 %v1563, 1.442695
        %v1578 = vpow.pop %v1577
        %v1579 = vmul.f32 %v1564, 1.442695
        %v1580 = vpow.pop %v1579
        %v1581 = vsel %vm1532, %v1566, 0.0
        %1582 = vadd.xlane.f32.xlu0 %v1581
        %v1583 = vpop.xlane.xlu0 %1582
        %v1584 = vsel %vm1532, %v1568, 0.0
        %1585 = vadd.xlane.f32.xlu0 %v1584
        %v1586 = vpop.xlane.xlu0 %1585
        %v1587 = vsel %vm1532, %v1570, 0.0
        %1588 = vadd.xlane.f32.xlu0 %v1587
        %v1589 = vpop.xlane.xlu0 %1588
        %v1590 = vsel %vm1532, %v1572, 0.0
        %1591 = vadd.xlane.f32.xlu0 %v1590
        %v1592 = vpop.xlane.xlu0 %1591
        %v1593 = vsel %vm1532, %v1574, 0.0
        %1594 = vadd.xlane.f32.xlu0 %v1593
        %v1595 = vpop.xlane.xlu0 %1594
        %v1596 = vsel %vm1532, %v1576, 0.0
        %1597 = vadd.xlane.f32.xlu0 %v1596
        %v1598 = vpop.xlane.xlu0 %1597
        %v1599 = vsel %vm1532, %v1578, 0.0
        %1600 = vadd.xlane.f32.xlu0 %v1599
        %v1601 = vpop.xlane.xlu0 %1600
        %v1602 = vsel %vm1532, %v1580, 0.0
        %1603 = vadd.xlane.f32.xlu0 %v1602
        %v1604 = vpop.xlane.xlu0 %1603
        %v1605 = vrcp.pop %v1583
        %v1606 = vrcp.pop %v1586
        %v1607 = vrcp.pop %v1589
        %v1608 = vrcp.pop %v1592
        %v1609 = vrcp.pop %v1595
        %v1610 = vrcp.pop %v1598
        %v1611 = vrcp.pop %v1601
        %v1612 = vrcp.pop %v1604
        %v1613 = vmul.f32 %v1566, %v1605
        %v1614 = vmul.f32 %v1568, %v1606
        %v1615 = vmul.f32 %v1570, %v1607
        %v1616 = vmul.f32 %v1572, %v1608
        %v1617 = vmul.f32 %v1574, %v1609
        %v1618 = vmul.f32 %v1576, %v1610
        %v1619 = vmul.f32 %v1578, %v1611
        %v1620 = vmul.f32 %v1580, %v1612
        %v1621 = vpack.c.bf16 %v1613, %v1613
        %v1622 = vpack.c.bf16 %v1614, %v1614
        %v1623 = vpack.c.bf16 %v1615, %v1615
        %v1624 = vpack.c.bf16 %v1616, %v1616
        %v1625 = vpack.c.bf16 %v1617, %v1617
        %v1626 = vpack.c.bf16 %v1618, %v1618
        %v1627 = vpack.c.bf16 %v1619, %v1619
        %v1628 = vpack.c.bf16 %v1620, %v1620
        %v1629 = vpack.c.bf16 %v1150, %v1150
        %v1630 = vpack.c.bf16 %v1154, %v1154
        %v1631 = vpack.c.bf16 %v1160, %v1160
        %v1632 = vpack.c.bf16 %v1164, %v1164
        %v1633 = vpack.c.bf16 %v1170, %v1170
        %v1634 = vpack.c.bf16 %v1174, %v1174
        %v1635 = vpack.c.bf16 %v1180, %v1180
        %v1636 = vpack.c.bf16 %v1184, %v1184
        %v1638 = vsel %vm1532, %v1621, 0
        %vm1640 = vcmask 1043456
        %v1642 = vsel %vm1640, %v1629, 0
        %1644 = vmatprep.subr.bf16.mxu0 0
        %1645 = vmatpush1.bf16.msra.mxu0 %v1642
        %1646 = vmatprep.subr.bf16.mxu0 0
        %1647 = vmatpush1.bf16.msra.mxu0 0
        %1648 = vmatprep.subr.bf16.mxu0 0
        %1649 = vmatpush1.bf16.msra.mxu0 0
        %1650 = vmatprep.subr.bf16.mxu0 0
        %1651 = vmatpush1.bf16.msra.mxu0 0
        %1652 = vmatprep.subr.bf16.mxu0 0
        %1653 = vmatpush1.bf16.msra.mxu0 0
        %1654 = vmatprep.subr.bf16.mxu0 0
        %1655 = vmatpush1.bf16.msra.mxu0 0
        %1656 = vmatprep.subr.bf16.mxu0 0
        %1657 = vmatpush1.bf16.msra.mxu0 0
        %1658 = vmatprep.subr.bf16.mxu0 0
        %1659 = vmatpush1.bf16.msra.mxu0 0
        %1660 = vmatprep.subr.bf16.mxu0 0
        %1661 = vmatpush1.bf16.msra.mxu0 0
        %1662 = vmatprep.subr.bf16.mxu0 0
        %1663 = vmatpush1.bf16.msra.mxu0 0
        %1664 = vmatprep.subr.bf16.mxu0 0
        %1665 = vmatpush1.bf16.msra.mxu0 0
        %1666 = vmatprep.subr.bf16.mxu0 0
        %1667 = vmatpush1.bf16.msra.mxu0 0
        %1668 = vmatprep.subr.bf16.mxu0 0
        %1669 = vmatpush1.bf16.msra.mxu0 0
        %1670 = vmatprep.subr.bf16.mxu0 0
        %1671 = vmatpush1.bf16.msra.mxu0 0
        %1672 = vmatprep.subr.bf16.mxu0 0
        %1673 = vmatpush1.bf16.msra.mxu0 0
        %1674 = vmatprep.subr.bf16.mxu0 0
        %1675 = vmatpush1.bf16.msra.mxu0 0
        %1676 = vmatprep.mubr.bf16.mxu0 0
        %1677 = vmatmul.mubr.bf16.gmra.mrb[0].mxu0 %v1638
        %v1678 = vpop.f32.mrb[0].mxu0
        %v1679 = vadd.f32 0.0, %v1678
        %v1680 = vpop.f32.mrb[0].mxu0
        %v1681 = vpop.f32.mrb[0].mxu0
        %v1682 = vpop.f32.mrb[0].mxu0
        %1683 = vdwg.mxu0
        %v1685 = vsel %vm1532, %v1622, 0
        %v1688 = vsel %vm1640, %v1630, 0
        %1690 = vmatprep.subr.bf16.mxu0 0
        %1691 = vmatpush1.bf16.msra.mxu0 %v1688
        %1692 = vmatprep.subr.bf16.mxu0 0
        %1693 = vmatpush1.bf16.msra.mxu0 0
        %1694 = vmatprep.subr.bf16.mxu0 0
        %1695 = vmatpush1.bf16.msra.mxu0 0
        %1696 = vmatprep.subr.bf16.mxu0 0
        %1697 = vmatpush1.bf16.msra.mxu0 0
        %1698 = vmatprep.subr.bf16.mxu0 0
        %1699 = vmatpush1.bf16.msra.mxu0 0
        %1700 = vmatprep.subr.bf16.mxu0 0
        %1701 = vmatpush1.bf16.msra.mxu0 0
        %1702 = vmatprep.subr.bf16.mxu0 0
        %1703 = vmatpush1.bf16.msra.mxu0 0
        %1704 = vmatprep.subr.bf16.mxu0 0
        %1705 = vmatpush1.bf16.msra.mxu0 0
        %1706 = vmatprep.subr.bf16.mxu0 0
        %1707 = vmatpush1.bf16.msra.mxu0 0
        %1708 = vmatprep.subr.bf16.mxu0 0
        %1709 = vmatpush1.bf16.msra.mxu0 0
        %1710 = vmatprep.subr.bf16.mxu0 0
        %1711 = vmatpush1.bf16.msra.mxu0 0
        %1712 = vmatprep.subr.bf16.mxu0 0
        %1713 = vmatpush1.bf16.msra.mxu0 0
        %1714 = vmatprep.subr.bf16.mxu0 0
        %1715 = vmatpush1.bf16.msra.mxu0 0
        %1716 = vmatprep.subr.bf16.mxu0 0
        %1717 = vmatpush1.bf16.msra.mxu0 0
        %1718 = vmatprep.subr.bf16.mxu0 0
        %1719 = vmatpush1.bf16.msra.mxu0 0
        %1720 = vmatprep.subr.bf16.mxu0 0
        %1721 = vmatpush1.bf16.msra.mxu0 0
        %1722 = vmatprep.mubr.bf16.mxu0 0
        %1723 = vmatmul.mubr.bf16.gmra.mrb[0].mxu0 %v1685
        %v1724 = vpop.f32.mrb[0].mxu0
        %v1725 = vadd.f32 0.0, %v1724
        %v1726 = vpop.f32.mrb[0].mxu0
        %v1727 = vpop.f32.mrb[0].mxu0
        %v1728 = vpop.f32.mrb[0].mxu0
        %1729 = vdwg.mxu0
        %v1731 = vsel %vm1532, %v1623, 0
        %v1734 = vsel %vm1640, %v1631, 0
        %1736 = vmatprep.subr.bf16.mxu0 0
        %1737 = vmatpush1.bf16.msra.mxu0 %v1734
        %1738 = vmatprep.subr.bf16.mxu0 0
        %1739 = vmatpush1.bf16.msra.mxu0 0
        %1740 = vmatprep.subr.bf16.mxu0 0
        %1741 = vmatpush1.bf16.msra.mxu0 0
        %1742 = vmatprep.subr.bf16.mxu0 0
        %1743 = vmatpush1.bf16.msra.mxu0 0
        %1744 = vmatprep.subr.bf16.mxu0 0
        %1745 = vmatpush1.bf16.msra.mxu0 0
        %1746 = vmatprep.subr.bf16.mxu0 0
        %1747 = vmatpush1.bf16.msra.mxu0 0
        %1748 = vmatprep.subr.bf16.mxu0 0
        %1749 = vmatpush1.bf16.msra.mxu0 0
        %1750 = vmatprep.subr.bf16.mxu0 0
        %1751 = vmatpush1.bf16.msra.mxu0 0
        %1752 = vmatprep.subr.bf16.mxu0 0
        %1753 = vmatpush1.bf16.msra.mxu0 0
        %1754 = vmatprep.subr.bf16.mxu0 0
        %1755 = vmatpush1.bf16.msra.mxu0 0
        %1756 = vmatprep.subr.bf16.mxu0 0
        %1757 = vmatpush1.bf16.msra.mxu0 0
        %1758 = vmatprep.subr.bf16.mxu0 0
        %1759 = vmatpush1.bf16.msra.mxu0 0
        %1760 = vmatprep.subr.bf16.mxu0 0
        %1761 = vmatpush1.bf16.msra.mxu0 0
        %1762 = vmatprep.subr.bf16.mxu0 0
        %1763 = vmatpush1.bf16.msra.mxu0 0
        %1764 = vmatprep.subr.bf16.mxu0 0
        %1765 = vmatpush1.bf16.msra.mxu0 0
        %1766 = vmatprep.subr.bf16.mxu0 0
        %1767 = vmatpush1.bf16.msra.mxu0 0
        %1768 = vmatprep.mubr.bf16.mxu0 0
        %1769 = vmatmul.mubr.bf16.gmra.mrb[0].mxu0 %v1731
        %v1770 = vpop.f32.mrb[0].mxu0
        %v1771 = vadd.f32 0.0, %v1770
        %v1772 = vpop.f32.mrb[0].mxu0
        %v1773 = vpop.f32.mrb[0].mxu0
        %v1774 = vpop.f32.mrb[0].mxu0
        %1775 = vdwg.mxu0
        %v1777 = vsel %vm1532, %v1624, 0
        %v1780 = vsel %vm1640, %v1632, 0
        %1782 = vmatprep.subr.bf16.mxu0 0
        %1783 = vmatpush1.bf16.msra.mxu0 %v1780
        %1784 = vmatprep.subr.bf16.mxu0 0
        %1785 = vmatpush1.bf16.msra.mxu0 0
        %1786 = vmatprep.subr.bf16.mxu0 0
        %1787 = vmatpush1.bf16.msra.mxu0 0
        %1788 = vmatprep.subr.bf16.mxu0 0
        %1789 = vmatpush1.bf16.msra.mxu0 0
        %1790 = vmatprep.subr.bf16.mxu0 0
        %1791 = vmatpush1.bf16.msra.mxu0 0
        %1792 = vmatprep.subr.bf16.mxu0 0
        %1793 = vmatpush1.bf16.msra.mxu0 0
        %1794 = vmatprep.subr.bf16.mxu0 0
        %1795 = vmatpush1.bf16.msra.mxu0 0
        %1796 = vmatprep.subr.bf16.mxu0 0
        %1797 = vmatpush1.bf16.msra.mxu0 0
        %1798 = vmatprep.subr.bf16.mxu0 0
        %1799 = vmatpush1.bf16.msra.mxu0 0
        %1800 = vmatprep.subr.bf16.mxu0 0
        %1801 = vmatpush1.bf16.msra.mxu0 0
        %1802 = vmatprep.subr.bf16.mxu0 0
        %1803 = vmatpush1.bf16.msra.mxu0 0
        %1804 = vmatprep.subr.bf16.mxu0 0
        %1805 = vmatpush1.bf16.msra.mxu0 0
        %1806 = vmatprep.subr.bf16.mxu0 0
        %1807 = vmatpush1.bf16.msra.mxu0 0
        %1808 = vmatprep.subr.bf16.mxu0 0
        %1809 = vmatpush1.bf16.msra.mxu0 0
        %1810 = vmatprep.subr.bf16.mxu0 0
        %1811 = vmatpush1.bf16.msra.mxu0 0
        %1812 = vmatprep.subr.bf16.mxu0 0
        %1813 = vmatpush1.bf16.msra.mxu0 0
        %1814 = vmatprep.mubr.bf16.mxu0 0
        %1815 = vmatmul.mubr.bf16.gmra.mrb[0].mxu0 %v1777
        %v1816 = vpop.f32.mrb[0].mxu0
        %v1817 = vadd.f32 0.0, %v1816
        %v1818 = vpop.f32.mrb[0].mxu0
        %v1819 = vpop.f32.mrb[0].mxu0
        %v1820 = vpop.f32.mrb[0].mxu0
        %1821 = vdwg.mxu0
        %v1823 = vsel %vm1532, %v1625, 0
        %v1826 = vsel %vm1640, %v1633, 0
        %1828 = vmatprep.subr.bf16.mxu0 0
        %1829 = vmatpush1.bf16.msra.mxu0 %v1826
        %1830 = vmatprep.subr.bf16.mxu0 0
        %1831 = vmatpush1.bf16.msra.mxu0 0
        %1832 = vmatprep.subr.bf16.mxu0 0
        %1833 = vmatpush1.bf16.msra.mxu0 0
        %1834 = vmatprep.subr.bf16.mxu0 0
        %1835 = vmatpush1.bf16.msra.mxu0 0
        %1836 = vmatprep.subr.bf16.mxu0 0
        %1837 = vmatpush1.bf16.msra.mxu0 0
        %1838 = vmatprep.subr.bf16.mxu0 0
        %1839 = vmatpush1.bf16.msra.mxu0 0
        %1840 = vmatprep.subr.bf16.mxu0 0
        %1841 = vmatpush1.bf16.msra.mxu0 0
        %1842 = vmatprep.subr.bf16.mxu0 0
        %1843 = vmatpush1.bf16.msra.mxu0 0
        %1844 = vmatprep.subr.bf16.mxu0 0
        %1845 = vmatpush1.bf16.msra.mxu0 0
        %1846 = vmatprep.subr.bf16.mxu0 0
        %1847 = vmatpush1.bf16.msra.mxu0 0
        %1848 = vmatprep.subr.bf16.mxu0 0
        %1849 = vmatpush1.bf16.msra.mxu0 0
        %1850 = vmatprep.subr.bf16.mxu0 0
        %1851 = vmatpush1.bf16.msra.mxu0 0
        %1852 = vmatprep.subr.bf16.mxu0 0
        %1853 = vmatpush1.bf16.msra.mxu0 0
        %1854 = vmatprep.subr.bf16.mxu0 0
        %1855 = vmatpush1.bf16.msra.mxu0 0
        %1856 = vmatprep.subr.bf16.mxu0 0
        %1857 = vmatpush1.bf16.msra.mxu0 0
        %1858 = vmatprep.subr.bf16.mxu0 0
        %1859 = vmatpush1.bf16.msra.mxu0 0
        %1860 = vmatprep.mubr.bf16.mxu0 0
        %1861 = vmatmul.mubr.bf16.gmra.mrb[0].mxu0 %v1823
        %v1862 = vpop.f32.mrb[0].mxu0
        %v1863 = vadd.f32 0.0, %v1862
        %v1864 = vpop.f32.mrb[0].mxu0
        %v1865 = vpop.f32.mrb[0].mxu0
        %v1866 = vpop.f32.mrb[0].mxu0
        %1867 = vdwg.mxu0
        %v1869 = vsel %vm1532, %v1626, 0
        %v1872 = vsel %vm1640, %v1634, 0
        %1874 = vmatprep.subr.bf16.mxu0 0
        %1875 = vmatpush1.bf16.msra.mxu0 %v1872
        %1876 = vmatprep.subr.bf16.mxu0 0
        %1877 = vmatpush1.bf16.msra.mxu0 0
        %1878 = vmatprep.subr.bf16.mxu0 0
        %1879 = vmatpush1.bf16.msra.mxu0 0
        %1880 = vmatprep.subr.bf16.mxu0 0
        %1881 = vmatpush1.bf16.msra.mxu0 0
        %1882 = vmatprep.subr.bf16.mxu0 0
        %1883 = vmatpush1.bf16.msra.mxu0 0
        %1884 = vmatprep.subr.bf16.mxu0 0
        %1885 = vmatpush1.bf16.msra.mxu0 0
        %1886 = vmatprep.subr.bf16.mxu0 0
        %1887 = vmatpush1.bf16.msra.mxu0 0
        %1888 = vmatprep.subr.bf16.mxu0 0
        %1889 = vmatpush1.bf16.msra.mxu0 0
        %1890 = vmatprep.subr.bf16.mxu0 0
        %1891 = vmatpush1.bf16.msra.mxu0 0
        %1892 = vmatprep.subr.bf16.mxu0 0
        %1893 = vmatpush1.bf16.msra.mxu0 0
        %1894 = vmatprep.subr.bf16.mxu0 0
        %1895 = vmatpush1.bf16.msra.mxu0 0
        %1896 = vmatprep.subr.bf16.mxu0 0
        %1897 = vmatpush1.bf16.msra.mxu0 0
        %1898 = vmatprep.subr.bf16.mxu0 0
        %1899 = vmatpush1.bf16.msra.mxu0 0
        %1900 = vmatprep.subr.bf16.mxu0 0
        %1901 = vmatpush1.bf16.msra.mxu0 0
        %1902 = vmatprep.subr.bf16.mxu0 0
        %1903 = vmatpush1.bf16.msra.mxu0 0
        %1904 = vmatprep.subr.bf16.mxu0 0
        %1905 = vmatpush1.bf16.msra.mxu0 0
        %1906 = vmatprep.mubr.bf16.mxu0 0
        %1907 = vmatmul.mubr.bf16.gmra.mrb[0].mxu0 %v1869
        %v1908 = vpop.f32.mrb[0].mxu0
        %v1909 = vadd.f32 0.0, %v1908
        %v1910 = vpop.f32.mrb[0].mxu0
        %v1911 = vpop.f32.mrb[0].mxu0
        %v1912 = vpop.f32.mrb[0].mxu0
        %1913 = vdwg.mxu0
        %v1915 = vsel %vm1532, %v1627, 0
        %v1918 = vsel %vm1640, %v1635, 0
        %1920 = vmatprep.subr.bf16.mxu0 0
        %1921 = vmatpush1.bf16.msra.mxu0 %v1918
        %1922 = vmatprep.subr.bf16.mxu0 0
        %1923 = vmatpush1.bf16.msra.mxu0 0
        %1924 = vmatprep.subr.bf16.mxu0 0
        %1925 = vmatpush1.bf16.msra.mxu0 0
        %1926 = vmatprep.subr.bf16.mxu0 0
        %1927 = vmatpush1.bf16.msra.mxu0 0
        %1928 = vmatprep.subr.bf16.mxu0 0
        %1929 = vmatpush1.bf16.msra.mxu0 0
        %1930 = vmatprep.subr.bf16.mxu0 0
        %1931 = vmatpush1.bf16.msra.mxu0 0
        %1932 = vmatprep.subr.bf16.mxu0 0
        %1933 = vmatpush1.bf16.msra.mxu0 0
        %1934 = vmatprep.subr.bf16.mxu0 0
        %1935 = vmatpush1.bf16.msra.mxu0 0
        %1936 = vmatprep.subr.bf16.mxu0 0
        %1937 = vmatpush1.bf16.msra.mxu0 0
        %1938 = vmatprep.subr.bf16.mxu0 0
        %1939 = vmatpush1.bf16.msra.mxu0 0
        %1940 = vmatprep.subr.bf16.mxu0 0
        %1941 = vmatpush1.bf16.msra.mxu0 0
        %1942 = vmatprep.subr.bf16.mxu0 0
        %1943 = vmatpush1.bf16.msra.mxu0 0
        %1944 = vmatprep.subr.bf16.mxu0 0
        %1945 = vmatpush1.bf16.msra.mxu0 0
        %1946 = vmatprep.subr.bf16.mxu0 0
        %1947 = vmatpush1.bf16.msra.mxu0 0
        %1948 = vmatprep.subr.bf16.mxu0 0
        %1949 = vmatpush1.bf16.msra.mxu0 0
        %1950 = vmatprep.subr.bf16.mxu0 0
        %1951 = vmatpush1.bf16.msra.mxu0 0
        %1952 = vmatprep.mubr.bf16.mxu0 0
        %1953 = vmatmul.mubr.bf16.gmra.mrb[0].mxu0 %v1915
        %v1954 = vpop.f32.mrb[0].mxu0
        %v1955 = vadd.f32 0.0, %v1954
        %v1956 = vpop.f32.mrb[0].mxu0
        %v1957 = vpop.f32.mrb[0].mxu0
        %v1958 = vpop.f32.mrb[0].mxu0
        %1959 = vdwg.mxu0
        %v1961 = vsel %vm1532, %v1628, 0
        %v1964 = vsel %vm1640, %v1636, 0
        %1966 = vmatprep.subr.bf16.mxu0 0
        %1967 = vmatpush1.bf16.msra.mxu0 %v1964
        %1968 = vmatprep.subr.bf16.mxu0 0
        %1969 = vmatpush1.bf16.msra.mxu0 0
        %1970 = vmatprep.subr.bf16.mxu0 0
        %1971 = vmatpush1.bf16.msra.mxu0 0
        %1972 = vmatprep.subr.bf16.mxu0 0
        %1973 = vmatpush1.bf16.msra.mxu0 0
        %1974 = vmatprep.subr.bf16.mxu0 0
        %1975 = vmatpush1.bf16.msra.mxu0 0
        %1976 = vmatprep.subr.bf16.mxu0 0
        %1977 = vmatpush1.bf16.msra.mxu0 0
        %1978 = vmatprep.subr.bf16.mxu0 0
        %1979 = vmatpush1.bf16.msra.mxu0 0
        %1980 = vmatprep.subr.bf16.mxu0 0
        %1981 = vmatpush1.bf16.msra.mxu0 0
        %1982 = vmatprep.subr.bf16.mxu0 0
        %1983 = vmatpush1.bf16.msra.mxu0 0
        %1984 = vmatprep.subr.bf16.mxu0 0
        %1985 = vmatpush1.bf16.msra.mxu0 0
        %1986 = vmatprep.subr.bf16.mxu0 0
        %1987 = vmatpush1.bf16.msra.mxu0 0
        %1988 = vmatprep.subr.bf16.mxu0 0
        %1989 = vmatpush1.bf16.msra.mxu0 0
        %1990 = vmatprep.subr.bf16.mxu0 0
        %1991 = vmatpush1.bf16.msra.mxu0 0
        %1992 = vmatprep.subr.bf16.mxu0 0
        %1993 = vmatpush1.bf16.msra.mxu0 0
        %1994 = vmatprep.subr.bf16.mxu0 0
        %1995 = vmatpush1.bf16.msra.mxu0 0
        %1996 = vmatprep.subr.bf16.mxu0 0
        %1997 = vmatpush1.bf16.msra.mxu0 0
        %1998 = vmatprep.mubr.bf16.mxu0 0
        %1999 = vmatmul.mubr.bf16.gmra.mrb[0].mxu0 %v1961
        %v2000 = vpop.f32.mrb[0].mxu0
        %v2001 = vadd.f32 0.0, %v2000
        %v2002 = vpop.f32.mrb[0].mxu0
        %v2003 = vpop.f32.mrb[0].mxu0
        %v2004 = vpop.f32.mrb[0].mxu0
        %2005 = vdwg.mxu0
        %s2006 = smul.addr %s852, 4
        %s2007 = scalar_lea.vmem %s9, %s2006
        %v2008 = vld [vmem:[%s2007] sm:$0xf]
        %v2009 = vld [vmem:[%s2007 + $0x4] sm:$0xf]
        %v2010 = vld [vmem:[%s2007 + $0x8] sm:$0xf]
        %v2011 = vld [vmem:[%s2007 + $0xc] sm:$0xf]
        %v2012 = vld [vmem:[%s2007 + $0x10] sm:$0xf]
        %v2013 = vld [vmem:[%s2007 + $0x14] sm:$0xf]
        %v2014 = vld [vmem:[%s2007 + $0x18] sm:$0xf]
        %v2015 = vld [vmem:[%s2007 + $0x1c] sm:$0xf]
        %v2016 = vld [vmem:[%s2007 + $0x20] sm:$0xf]
        %v2017 = vld [vmem:[%s2007 + $0x24] sm:$0xf]
        %v2018 = vld [vmem:[%s2007 + $0x28] sm:$0xf]
        %v2019 = vld [vmem:[%s2007 + $0x2c] sm:$0xf]
        %v2020 = vld [vmem:[%s2007 + $0x30] sm:$0xf]
        %v2021 = vld [vmem:[%s2007 + $0x34] sm:$0xf]
        %v2022 = vld [vmem:[%s2007 + $0x38] sm:$0xf]
        %v2023 = vld [vmem:[%s2007 + $0x3c] sm:$0xf]
        %s2024 = scalar_lea.vmem %s10, %s709
        %v2025 = vld [vmem:[%s2024] sm:$0x1]
        %v2026 = vpack.c.bf16 %v1725, %v1679
        %v2027 = vpack.c.bf16 %v1817, %v1771
        %v2028 = vpack.c.bf16 %v1909, %v1863
        %v2029 = vpack.c.bf16 %v2001, %v1955
        %v2031 = vlaneseq
        %v2032 = vshrl.u32 %v2031, 7
        %v2033 = vsub.s32 0, %v2032
        %v2034 = vrot.slane %v2025, %v2033
        %v2052 = vunpack.c.l.b16 %v2008
        %v2053 = vunpack.c.l.b16 %v2009
        %v2054 = vunpack.c.l.b16 %v2010
        %v2055 = vunpack.c.l.b16 %v2011
        %v2056 = vunpack.c.l.b16 %v2012
        %v2057 = vunpack.c.l.b16 %v2013
        %v2058 = vunpack.c.l.b16 %v2014
        %v2059 = vunpack.c.l.b16 %v2015
        %v2060 = vunpack.c.l.b16 %v2016
        %v2061 = vunpack.c.l.b16 %v2017
        %v2062 = vunpack.c.l.b16 %v2018
        %v2063 = vunpack.c.l.b16 %v2019
        %v2064 = vunpack.c.l.b16 %v2020
        %v2065 = vunpack.c.l.b16 %v2021
        %v2066 = vunpack.c.l.b16 %v2022
        %v2067 = vunpack.c.l.b16 %v2023
        %v2068 = vpack.c.b16 %v2053, %v2052
        %v2069 = vpack.c.b16 %v2055, %v2054
        %v2070 = vpack.c.b16 %v2057, %v2056
        %v2071 = vpack.c.b16 %v2059, %v2058
        %v2072 = vpack.c.b16 %v2061, %v2060
        %v2073 = vpack.c.b16 %v2063, %v2062
        %v2074 = vpack.c.b16 %v2065, %v2064
        %v2075 = vpack.c.b16 %v2067, %v2066
        %2084 = vmatprep.subr.bf16.mxu0 0
        %2085 = vmatpush1.bf16.msra.mxu0 %v2068
        %2086 = vmatprep.subr.bf16.mxu0 0
        %2087 = vmatpush1.bf16.msra.mxu0 %v2069
        %2088 = vmatprep.subr.bf16.mxu0 0
        %2089 = vmatpush1.bf16.msra.mxu0 %v2070
        %2090 = vmatprep.subr.bf16.mxu0 0
        %2091 = vmatpush1.bf16.msra.mxu0 %v2071
        %2092 = vmatprep.subr.bf16.mxu0 0
        %2093 = vmatpush1.bf16.msra.mxu0 %v2072
        %2094 = vmatprep.subr.bf16.mxu0 0
        %2095 = vmatpush1.bf16.msra.mxu0 %v2073
        %2096 = vmatprep.subr.bf16.mxu0 0
        %2097 = vmatpush1.bf16.msra.mxu0 %v2074
        %2098 = vmatprep.subr.bf16.mxu0 0
        %2099 = vmatpush1.bf16.msra.mxu0 %v2075
        %2100 = vmatprep.subr.bf16.mxu0 0
        %2101 = vmatpush1.bf16.msra.mxu0 0
        %2102 = vmatprep.subr.bf16.mxu0 0
        %2103 = vmatpush1.bf16.msra.mxu0 0
        %2104 = vmatprep.subr.bf16.mxu0 0
        %2105 = vmatpush1.bf16.msra.mxu0 0
        %2106 = vmatprep.subr.bf16.mxu0 0
        %2107 = vmatpush1.bf16.msra.mxu0 0
        %2108 = vmatprep.subr.bf16.mxu0 0
        %2109 = vmatpush1.bf16.msra.mxu0 0
        %2110 = vmatprep.subr.bf16.mxu0 0
        %2111 = vmatpush1.bf16.msra.mxu0 0
        %2112 = vmatprep.subr.bf16.mxu0 0
        %2113 = vmatpush1.bf16.msra.mxu0 0
        %2114 = vmatprep.subr.bf16.mxu0 0
        %2115 = vmatpush1.bf16.msra.mxu0 0
        %2116 = vmatprep.mubr.bf16.mxu0 0
        %2117 = vmatmul.mubr.bf16.gmra.mrb[0].mxu0 %v2026
        %v2118 = vpop.f32.mrb[0].mxu0
        %v2119 = vadd.f32 %v2034, %v2118
        %v2120 = vpop.f32.mrb[0].mxu0
        %v2121 = vpop.f32.mrb[0].mxu0
        %v2122 = vadd.f32 %v2034, %v2121
        %v2123 = vpop.f32.mrb[0].mxu0
        %2124 = vmatprep.mubr.bf16.mxu0 0
        %2125 = vmatmul.mubr.bf16.gmra.mrb[0].mxu0 %v2027
        %v2126 = vpop.f32.mrb[0].mxu0
        %v2127 = vadd.f32 %v2034, %v2126
        %v2128 = vpop.f32.mrb[0].mxu0
        %v2129 = vpop.f32.mrb[0].mxu0
        %v2130 = vadd.f32 %v2034, %v2129
        %v2131 = vpop.f32.mrb[0].mxu0
        %2132 = vmatprep.mubr.bf16.mxu0 0
        %2133 = vmatmul.mubr.bf16.gmra.mrb[0].mxu0 %v2028
        %v2134 = vpop.f32.mrb[0].mxu0
        %v2135 = vadd.f32 %v2034, %v2134
        %v2136 = vpop.f32.mrb[0].mxu0
        %v2137 = vpop.f32.mrb[0].mxu0
        %v2138 = vadd.f32 %v2034, %v2137
        %v2139 = vpop.f32.mrb[0].mxu0
        %2140 = vmatprep.mubr.bf16.mxu0 0
        %2141 = vmatmul.mubr.bf16.gmra.mrb[0].mxu0 %v2029
        %v2142 = vpop.f32.mrb[0].mxu0
        %v2143 = vadd.f32 %v2034, %v2142
        %v2144 = vpop.f32.mrb[0].mxu0
        %v2145 = vpop.f32.mrb[0].mxu0
        %v2146 = vadd.f32 %v2034, %v2145
        %v2147 = vpop.f32.mrb[0].mxu0
        %2148 = vdwg.mxu0
        %v2149 = vadd.f32 %v844, %v2119
        %v2150 = vadd.f32 %v845, %v2122
        %v2151 = vadd.f32 %v846, %v2127
        %v2152 = vadd.f32 %v847, %v2130
        %v2153 = vadd.f32 %v848, %v2135
        %v2154 = vadd.f32 %v849, %v2138
        %v2155 = vadd.f32 %v850, %v2143
        %v2156 = vadd.f32 %v851, %v2146
        %s2157 = scalar_lea.vmem %s11, %s709
        %v2158 = vld [vmem:[%s2157] sm:$0x1]
        %s2159 = scalar_lea.vmem %s12, %s709
        %v2160 = vld [vmem:[%s2159] sm:$0x1]
        %2161 = vadd.xlane.f32.xlu0 %v2149
        %v2162 = vpop.xlane.xlu0 %2161
        %2163 = vadd.xlane.f32.xlu0 %v2150
        %v2164 = vpop.xlane.xlu0 %2163
        %2165 = vadd.xlane.f32.xlu0 %v2151
        %v2166 = vpop.xlane.xlu0 %2165
        %2167 = vadd.xlane.f32.xlu0 %v2152
        %v2168 = vpop.xlane.xlu0 %2167
        %2169 = vadd.xlane.f32.xlu0 %v2153
        %v2170 = vpop.xlane.xlu0 %2169
        %2171 = vadd.xlane.f32.xlu0 %v2154
        %v2172 = vpop.xlane.xlu0 %2171
        %2173 = vadd.xlane.f32.xlu0 %v2155
        %v2174 = vpop.xlane.xlu0 %2173
        %2175 = vadd.xlane.f32.xlu0 %v2156
        %v2176 = vpop.xlane.xlu0 %2175
        %v2177 = vmul.f32 %v2162, 0.03125
        %v2178 = vmul.f32 %v2164, 0.03125
        %v2179 = vmul.f32 %v2166, 0.03125
        %v2180 = vmul.f32 %v2168, 0.03125
        %v2181 = vmul.f32 %v2170, 0.03125
        %v2182 = vmul.f32 %v2172, 0.03125
        %v2183 = vmul.f32 %v2174, 0.03125
        %v2184 = vmul.f32 %v2176, 0.03125
        %v2185 = vsub.f32 %v2149, %v2177
        %v2186 = vsub.f32 %v2150, %v2178
        %v2187 = vsub.f32 %v2151, %v2179
        %v2188 = vsub.f32 %v2152, %v2180
        %v2189 = vsub.f32 %v2153, %v2181
        %v2190 = vsub.f32 %v2154, %v2182
        %v2191 = vsub.f32 %v2155, %v2183
        %v2192 = vsub.f32 %v2156, %v2184
        %v2193 = vsel %vm759, %v2185, 0.0
        %v2194 = vsel %vm759, %v2186, 0.0
        %v2195 = vsel %vm759, %v2187, 0.0
        %v2196 = vsel %vm759, %v2188, 0.0
        %v2197 = vsel %vm759, %v2189, 0.0
        %v2198 = vsel %vm759, %v2190, 0.0
        %v2199 = vsel %vm759, %v2191, 0.0
        %v2200 = vsel %vm759, %v2192, 0.0
        %v2201 = vmul.f32 %v2193, %v2193
        %v2202 = vmul.f32 %v2194, %v2194
        %v2203 = vmul.f32 %v2195, %v2195
        %v2204 = vmul.f32 %v2196, %v2196
        %v2205 = vmul.f32 %v2197, %v2197
        %v2206 = vmul.f32 %v2198, %v2198
        %v2207 = vmul.f32 %v2199, %v2199
        %v2208 = vmul.f32 %v2200, %v2200
        %2209 = vadd.xlane.f32.xlu0 %v2201
        %v2210 = vpop.xlane.xlu0 %2209
        %2211 = vadd.xlane.f32.xlu0 %v2202
        %v2212 = vpop.xlane.xlu0 %2211
        %2213 = vadd.xlane.f32.xlu0 %v2203
        %v2214 = vpop.xlane.xlu0 %2213
        %2215 = vadd.xlane.f32.xlu0 %v2204
        %v2216 = vpop.xlane.xlu0 %2215
        %2217 = vadd.xlane.f32.xlu0 %v2205
        %v2218 = vpop.xlane.xlu0 %2217
        %2219 = vadd.xlane.f32.xlu0 %v2206
        %v2220 = vpop.xlane.xlu0 %2219
        %2221 = vadd.xlane.f32.xlu0 %v2207
        %v2222 = vpop.xlane.xlu0 %2221
        %2223 = vadd.xlane.f32.xlu0 %v2208
        %v2224 = vpop.xlane.xlu0 %2223
        %v2225 = vmul.f32 %v2210, 0.03125
        %v2226 = vmul.f32 %v2212, 0.03125
        %v2227 = vmul.f32 %v2214, 0.03125
        %v2228 = vmul.f32 %v2216, 0.03125
        %v2229 = vmul.f32 %v2218, 0.03125
        %v2230 = vmul.f32 %v2220, 0.03125
        %v2231 = vmul.f32 %v2222, 0.03125
        %v2232 = vmul.f32 %v2224, 0.03125
        %v2233 = vadd.f32 %v2225, 1e-08
        %v2234 = vadd.f32 %v2226, 1e-08
        %v2235 = vadd.f32 %v2227, 1e-08
        %v2236 = vadd.f32 %v2228, 1e-08
        %v2237 = vadd.f32 %v2229, 1e-08
        %v2238 = vadd.f32 %v2230, 1e-08
        %v2239 = vadd.f32 %v2231, 1e-08
        %v2240 = vadd.f32 %v2232, 1e-08
        %v2241 = vrsqrt.pop %v2233
        %v2242 = vrsqrt.pop %v2234
        %v2243 = vrsqrt.pop %v2235
        %v2244 = vrsqrt.pop %v2236
        %v2245 = vrsqrt.pop %v2237
        %v2246 = vrsqrt.pop %v2238
        %v2247 = vrsqrt.pop %v2239
        %v2248 = vrsqrt.pop %v2240
        %v2249 = vmul.f32 %v2193, %v2241
        %v2250 = vmul.f32 %v2194, %v2242
        %v2251 = vmul.f32 %v2195, %v2243
        %v2252 = vmul.f32 %v2196, %v2244
        %v2253 = vmul.f32 %v2197, %v2245
        %v2254 = vmul.f32 %v2198, %v2246
        %v2255 = vmul.f32 %v2199, %v2247
        %v2256 = vmul.f32 %v2200, %v2248
        %v2258 = vlaneseq
        %v2259 = vshrl.u32 %v2258, 7
        %v2260 = vsub.s32 0, %v2259
        %v2261 = vrot.slane %v2158, %v2260
        %v2263 = vmul.f32 %v2249, %v2261
        %v2264 = vmul.f32 %v2250, %v2261
        %v2265 = vmul.f32 %v2251, %v2261
        %v2266 = vmul.f32 %v2252, %v2261
        %v2267 = vmul.f32 %v2253, %v2261
        %v2268 = vmul.f32 %v2254, %v2261
        %v2269 = vmul.f32 %v2255, %v2261
        %v2270 = vmul.f32 %v2256, %v2261
        %v2272 = vlaneseq
        %v2273 = vshrl.u32 %v2272, 7
        %v2274 = vsub.s32 0, %v2273
        %v2275 = vrot.slane %v2160, %v2274
        %v2277 = vadd.f32 %v2263, %v2275
        %v2278 = vadd.f32 %v2264, %v2275
        %v2279 = vadd.f32 %v2265, %v2275
        %v2280 = vadd.f32 %v2266, %v2275
        %v2281 = vadd.f32 %v2267, %v2275
        %v2282 = vadd.f32 %v2268, %v2275
        %v2283 = vadd.f32 %v2269, %v2275
        %v2284 = vadd.f32 %v2270, %v2275
        %s2285 = smul.addr %s852, 4
        %s2286 = scalar_lea.vmem %s13, %s2285
        %v2287 = vld [vmem:[%s2286] sm:$0xf]
        %v2288 = vld [vmem:[%s2286 + $0x4] sm:$0xf]
        %v2289 = vld [vmem:[%s2286 + $0x8] sm:$0xf]
        %v2290 = vld [vmem:[%s2286 + $0xc] sm:$0xf]
        %v2291 = vld [vmem:[%s2286 + $0x10] sm:$0xf]
        %v2292 = vld [vmem:[%s2286 + $0x14] sm:$0xf]
        %v2293 = vld [vmem:[%s2286 + $0x18] sm:$0xf]
        %v2294 = vld [vmem:[%s2286 + $0x1c] sm:$0xf]
        %v2295 = vld [vmem:[%s2286 + $0x20] sm:$0xf]
        %v2296 = vld [vmem:[%s2286 + $0x24] sm:$0xf]
        %v2297 = vld [vmem:[%s2286 + $0x28] sm:$0xf]
        %v2298 = vld [vmem:[%s2286 + $0x2c] sm:$0xf]
        %v2299 = vld [vmem:[%s2286 + $0x30] sm:$0xf]
        %v2300 = vld [vmem:[%s2286 + $0x34] sm:$0xf]
        %v2301 = vld [vmem:[%s2286 + $0x38] sm:$0xf]
        %v2302 = vld [vmem:[%s2286 + $0x3c] sm:$0xf]
        %s2303 = scalar_lea.vmem %s14, %s709
        %v2304 = vld [vmem:[%s2303] sm:$0x1]
        %v2305 = vpack.c.bf16 %v2278, %v2277
        %v2306 = vpack.c.bf16 %v2280, %v2279
        %v2307 = vpack.c.bf16 %v2282, %v2281
        %v2308 = vpack.c.bf16 %v2284, %v2283
        %v2310 = vlaneseq
        %v2311 = vshrl.u32 %v2310, 7
        %v2312 = vsub.s32 0, %v2311
        %v2313 = vrot.slane %v2304, %v2312
        %v2331 = vunpack.c.l.b16 %v2287
        %v2332 = vunpack.c.l.b16 %v2288
        %v2333 = vunpack.c.l.b16 %v2289
        %v2334 = vunpack.c.l.b16 %v2290
        %v2335 = vunpack.c.l.b16 %v2291
        %v2336 = vunpack.c.l.b16 %v2292
        %v2337 = vunpack.c.l.b16 %v2293
        %v2338 = vunpack.c.l.b16 %v2294
        %v2339 = vunpack.c.l.b16 %v2295
        %v2340 = vunpack.c.l.b16 %v2296
        %v2341 = vunpack.c.l.b16 %v2297
        %v2342 = vunpack.c.l.b16 %v2298
        %v2343 = vunpack.c.l.b16 %v2299
        %v2344 = vunpack.c.l.b16 %v2300
        %v2345 = vunpack.c.l.b16 %v2301
        %v2346 = vunpack.c.l.b16 %v2302
        %v2347 = vpack.c.b16 %v2332, %v2331
        %v2348 = vpack.c.b16 %v2334, %v2333
        %v2349 = vpack.c.b16 %v2336, %v2335
        %v2350 = vpack.c.b16 %v2338, %v2337
        %v2351 = vpack.c.b16 %v2340, %v2339
        %v2352 = vpack.c.b16 %v2342, %v2341
        %v2353 = vpack.c.b16 %v2344, %v2343
        %v2354 = vpack.c.b16 %v2346, %v2345
        %2363 = vmatprep.subr.bf16.mxu0 0
        %2364 = vmatpush1.bf16.msra.mxu0 %v2347
        %2365 = vmatprep.subr.bf16.mxu0 0
        %2366 = vmatpush1.bf16.msra.mxu0 %v2348
        %2367 = vmatprep.subr.bf16.mxu0 0
        %2368 = vmatpush1.bf16.msra.mxu0 %v2349
        %2369 = vmatprep.subr.bf16.mxu0 0
        %2370 = vmatpush1.bf16.msra.mxu0 %v2350
        %2371 = vmatprep.subr.bf16.mxu0 0
        %2372 = vmatpush1.bf16.msra.mxu0 %v2351
        %2373 = vmatprep.subr.bf16.mxu0 0
        %2374 = vmatpush1.bf16.msra.mxu0 %v2352
        %2375 = vmatprep.subr.bf16.mxu0 0
        %2376 = vmatpush1.bf16.msra.mxu0 %v2353
        %2377 = vmatprep.subr.bf16.mxu0 0
        %2378 = vmatpush1.bf16.msra.mxu0 %v2354
        %2379 = vmatprep.subr.bf16.mxu0 0
        %2380 = vmatpush1.bf16.msra.mxu0 0
        %2381 = vmatprep.subr.bf16.mxu0 0
        %2382 = vmatpush1.bf16.msra.mxu0 0
        %2383 = vmatprep.subr.bf16.mxu0 0
        %2384 = vmatpush1.bf16.msra.mxu0 0
        %2385 = vmatprep.subr.bf16.mxu0 0
        %2386 = vmatpush1.bf16.msra.mxu0 0
        %2387 = vmatprep.subr.bf16.mxu0 0
        %2388 = vmatpush1.bf16.msra.mxu0 0
        %2389 = vmatprep.subr.bf16.mxu0 0
        %2390 = vmatpush1.bf16.msra.mxu0 0
        %2391 = vmatprep.subr.bf16.mxu0 0
        %2392 = vmatpush1.bf16.msra.mxu0 0
        %2393 = vmatprep.subr.bf16.mxu0 0
        %2394 = vmatpush1.bf16.msra.mxu0 0
        %2395 = vmatprep.mubr.bf16.mxu0 0
        %2396 = vmatmul.mubr.bf16.gmra.mrb[0].mxu0 %v2305
        %v2397 = vpop.f32.mrb[0].mxu0
        %v2398 = vadd.f32 %v2313, %v2397
        %v2399 = vpop.f32.mrb[0].mxu0
        %v2400 = vpop.f32.mrb[0].mxu0
        %v2401 = vadd.f32 %v2313, %v2400
        %v2402 = vpop.f32.mrb[0].mxu0
        %2403 = vmatprep.mubr.bf16.mxu0 0
        %2404 = vmatmul.mubr.bf16.gmra.mrb[0].mxu0 %v2306
        %v2405 = vpop.f32.mrb[0].mxu0
        %v2406 = vadd.f32 %v2313, %v2405
        %v2407 = vpop.f32.mrb[0].mxu0
        %v2408 = vpop.f32.mrb[0].mxu0
        %v2409 = vadd.f32 %v2313, %v2408
        %v2410 = vpop.f32.mrb[0].mxu0
        %2411 = vmatprep.mubr.bf16.mxu0 0
        %2412 = vmatmul.mubr.bf16.gmra.mrb[0].mxu0 %v2307
        %v2413 = vpop.f32.mrb[0].mxu0
        %v2414 = vadd.f32 %v2313, %v2413
        %v2415 = vpop.f32.mrb[0].mxu0
        %v2416 = vpop.f32.mrb[0].mxu0
        %v2417 = vadd.f32 %v2313, %v2416
        %v2418 = vpop.f32.mrb[0].mxu0
        %2419 = vmatprep.mubr.bf16.mxu0 0
        %2420 = vmatmul.mubr.bf16.gmra.mrb[0].mxu0 %v2308
        %v2421 = vpop.f32.mrb[0].mxu0
        %v2422 = vadd.f32 %v2313, %v2421
        %v2423 = vpop.f32.mrb[0].mxu0
        %v2424 = vpop.f32.mrb[0].mxu0
        %v2425 = vadd.f32 %v2313, %v2424
        %v2426 = vpop.f32.mrb[0].mxu0
        %2427 = vdwg.mxu0
        %v2428 = vmax.f32 %v2398, 0.0
        %v2429 = vmax.f32 %v2401, 0.0
        %v2430 = vmax.f32 %v2406, 0.0
        %v2431 = vmax.f32 %v2409, 0.0
        %v2432 = vmax.f32 %v2414, 0.0
        %v2433 = vmax.f32 %v2417, 0.0
        %v2434 = vmax.f32 %v2422, 0.0
        %v2435 = vmax.f32 %v2425, 0.0
        %s2436 = smul.addr %s852, 4
        %s2437 = scalar_lea.vmem %s15, %s2436
        %v2438 = vld [vmem:[%s2437] sm:$0xf]
        %v2439 = vld [vmem:[%s2437 + $0x4] sm:$0xf]
        %v2440 = vld [vmem:[%s2437 + $0x8] sm:$0xf]
        %v2441 = vld [vmem:[%s2437 + $0xc] sm:$0xf]
        %v2442 = vld [vmem:[%s2437 + $0x10] sm:$0xf]
        %v2443 = vld [vmem:[%s2437 + $0x14] sm:$0xf]
        %v2444 = vld [vmem:[%s2437 + $0x18] sm:$0xf]
        %v2445 = vld [vmem:[%s2437 + $0x1c] sm:$0xf]
        %v2446 = vld [vmem:[%s2437 + $0x20] sm:$0xf]
        %v2447 = vld [vmem:[%s2437 + $0x24] sm:$0xf]
        %v2448 = vld [vmem:[%s2437 + $0x28] sm:$0xf]
        %v2449 = vld [vmem:[%s2437 + $0x2c] sm:$0xf]
        %v2450 = vld [vmem:[%s2437 + $0x30] sm:$0xf]
        %v2451 = vld [vmem:[%s2437 + $0x34] sm:$0xf]
        %v2452 = vld [vmem:[%s2437 + $0x38] sm:$0xf]
        %v2453 = vld [vmem:[%s2437 + $0x3c] sm:$0xf]
        %s2454 = scalar_lea.vmem %s16, %s709
        %v2455 = vld [vmem:[%s2454] sm:$0x1]
        %v2456 = vpack.c.bf16 %v2429, %v2428
        %v2457 = vpack.c.bf16 %v2431, %v2430
        %v2458 = vpack.c.bf16 %v2433, %v2432
        %v2459 = vpack.c.bf16 %v2435, %v2434
        %v2461 = vlaneseq
        %v2462 = vshrl.u32 %v2461, 7
        %v2463 = vsub.s32 0, %v2462
        %v2464 = vrot.slane %v2455, %v2463
        %v2482 = vunpack.c.l.b16 %v2438
        %v2483 = vunpack.c.l.b16 %v2439
        %v2484 = vunpack.c.l.b16 %v2440
        %v2485 = vunpack.c.l.b16 %v2441
        %v2486 = vunpack.c.l.b16 %v2442
        %v2487 = vunpack.c.l.b16 %v2443
        %v2488 = vunpack.c.l.b16 %v2444
        %v2489 = vunpack.c.l.b16 %v2445
        %v2490 = vunpack.c.l.b16 %v2446
        %v2491 = vunpack.c.l.b16 %v2447
        %v2492 = vunpack.c.l.b16 %v2448
        %v2493 = vunpack.c.l.b16 %v2449
        %v2494 = vunpack.c.l.b16 %v2450
        %v2495 = vunpack.c.l.b16 %v2451
        %v2496 = vunpack.c.l.b16 %v2452
        %v2497 = vunpack.c.l.b16 %v2453
        %v2498 = vpack.c.b16 %v2483, %v2482
        %v2499 = vpack.c.b16 %v2485, %v2484
        %v2500 = vpack.c.b16 %v2487, %v2486
        %v2501 = vpack.c.b16 %v2489, %v2488
        %v2502 = vpack.c.b16 %v2491, %v2490
        %v2503 = vpack.c.b16 %v2493, %v2492
        %v2504 = vpack.c.b16 %v2495, %v2494
        %v2505 = vpack.c.b16 %v2497, %v2496
        %2514 = vmatprep.subr.bf16.mxu0 0
        %2515 = vmatpush1.bf16.msra.mxu0 %v2498
        %2516 = vmatprep.subr.bf16.mxu0 0
        %2517 = vmatpush1.bf16.msra.mxu0 %v2499
        %2518 = vmatprep.subr.bf16.mxu0 0
        %2519 = vmatpush1.bf16.msra.mxu0 %v2500
        %2520 = vmatprep.subr.bf16.mxu0 0
        %2521 = vmatpush1.bf16.msra.mxu0 %v2501
        %2522 = vmatprep.subr.bf16.mxu0 0
        %2523 = vmatpush1.bf16.msra.mxu0 %v2502
        %2524 = vmatprep.subr.bf16.mxu0 0
        %2525 = vmatpush1.bf16.msra.mxu0 %v2503
        %2526 = vmatprep.subr.bf16.mxu0 0
        %2527 = vmatpush1.bf16.msra.mxu0 %v2504
        %2528 = vmatprep.subr.bf16.mxu0 0
        %2529 = vmatpush1.bf16.msra.mxu0 %v2505
        %2530 = vmatprep.subr.bf16.mxu0 0
        %2531 = vmatpush1.bf16.msra.mxu0 0
        %2532 = vmatprep.subr.bf16.mxu0 0
        %2533 = vmatpush1.bf16.msra.mxu0 0
        %2534 = vmatprep.subr.bf16.mxu0 0
        %2535 = vmatpush1.bf16.msra.mxu0 0
        %2536 = vmatprep.subr.bf16.mxu0 0
        %2537 = vmatpush1.bf16.msra.mxu0 0
        %2538 = vmatprep.subr.bf16.mxu0 0
        %2539 = vmatpush1.bf16.msra.mxu0 0
        %2540 = vmatprep.subr.bf16.mxu0 0
        %2541 = vmatpush1.bf16.msra.mxu0 0
        %2542 = vmatprep.subr.bf16.mxu0 0
        %2543 = vmatpush1.bf16.msra.mxu0 0
        %2544 = vmatprep.subr.bf16.mxu0 0
        %2545 = vmatpush1.bf16.msra.mxu0 0
        %2546 = vmatprep.mubr.bf16.mxu0 0
        %2547 = vmatmul.mubr.bf16.gmra.mrb[0].mxu0 %v2456
        %v2548 = vpop.f32.mrb[0].mxu0
        %v2549 = vadd.f32 %v2464, %v2548
        %v2550 = vpop.f32.mrb[0].mxu0
        %v2551 = vpop.f32.mrb[0].mxu0
        %v2552 = vadd.f32 %v2464, %v2551
        %v2553 = vpop.f32.mrb[0].mxu0
        %2554 = vmatprep.mubr.bf16.mxu0 0
        %2555 = vmatmul.mubr.bf16.gmra.mrb[0].mxu0 %v2457
        %v2556 = vpop.f32.mrb[0].mxu0
        %v2557 = vadd.f32 %v2464, %v2556
        %v2558 = vpop.f32.mrb[0].mxu0
        %v2559 = vpop.f32.mrb[0].mxu0
        %v2560 = vadd.f32 %v2464, %v2559
        %v2561 = vpop.f32.mrb[0].mxu0
        %2562 = vmatprep.mubr.bf16.mxu0 0
        %2563 = vmatmul.mubr.bf16.gmra.mrb[0].mxu0 %v2458
        %v2564 = vpop.f32.mrb[0].mxu0
        %v2565 = vadd.f32 %v2464, %v2564
        %v2566 = vpop.f32.mrb[0].mxu0
        %v2567 = vpop.f32.mrb[0].mxu0
        %v2568 = vadd.f32 %v2464, %v2567
        %v2569 = vpop.f32.mrb[0].mxu0
        %2570 = vmatprep.mubr.bf16.mxu0 0
        %2571 = vmatmul.mubr.bf16.gmra.mrb[0].mxu0 %v2459
        %v2572 = vpop.f32.mrb[0].mxu0
        %v2573 = vadd.f32 %v2464, %v2572
        %v2574 = vpop.f32.mrb[0].mxu0
        %v2575 = vpop.f32.mrb[0].mxu0
        %v2576 = vadd.f32 %v2464, %v2575
        %v2577 = vpop.f32.mrb[0].mxu0
        %2578 = vdwg.mxu0
        %v2579 = vadd.f32 %v2277, %v2549
        %v2580 = vadd.f32 %v2278, %v2552
        %v2581 = vadd.f32 %v2279, %v2557
        %v2582 = vadd.f32 %v2280, %v2560
        %v2583 = vadd.f32 %v2281, %v2565
        %v2584 = vadd.f32 %v2282, %v2568
        %v2585 = vadd.f32 %v2283, %v2573
        %v2586 = vadd.f32 %v2284, %v2576
      $region101: #{sasrec_forward.3} parent=95 // loop_footer
        %s713 = sadd.s32 1, %s709
      $region102: #{sasrec_forward.3} parent=95 // loop_footer_branch
        %708 = sbr.rel target = $region98
      $region103: #{sasrec_forward.3} parent=95 // loop_exit
        _
      %v2587 = vld [vmem:[%s17] sm:$0x1]
      %v2588 = vld [vmem:[%s18] sm:$0x1]
      %2589 = vadd.xlane.f32.xlu0 %v714
      %v2590 = vpop.xlane.xlu0 %2589
      %2591 = vadd.xlane.f32.xlu0 %v715
      %v2592 = vpop.xlane.xlu0 %2591
      %2593 = vadd.xlane.f32.xlu0 %v716
      %v2594 = vpop.xlane.xlu0 %2593
      %2595 = vadd.xlane.f32.xlu0 %v717
      %v2596 = vpop.xlane.xlu0 %2595
      %2597 = vadd.xlane.f32.xlu0 %v718
      %v2598 = vpop.xlane.xlu0 %2597
      %2599 = vadd.xlane.f32.xlu0 %v719
      %v2600 = vpop.xlane.xlu0 %2599
      %2601 = vadd.xlane.f32.xlu0 %v720
      %v2602 = vpop.xlane.xlu0 %2601
      %2603 = vadd.xlane.f32.xlu0 %v721
      %v2604 = vpop.xlane.xlu0 %2603
      %v2605 = vmul.f32 %v2590, 0.03125
      %v2606 = vmul.f32 %v2592, 0.03125
      %v2607 = vmul.f32 %v2594, 0.03125
      %v2608 = vmul.f32 %v2596, 0.03125
      %v2609 = vmul.f32 %v2598, 0.03125
      %v2610 = vmul.f32 %v2600, 0.03125
      %v2611 = vmul.f32 %v2602, 0.03125
      %v2612 = vmul.f32 %v2604, 0.03125
      %v2613 = vsub.f32 %v714, %v2605
      %v2614 = vsub.f32 %v715, %v2606
      %v2615 = vsub.f32 %v716, %v2607
      %v2616 = vsub.f32 %v717, %v2608
      %v2617 = vsub.f32 %v718, %v2609
      %v2618 = vsub.f32 %v719, %v2610
      %v2619 = vsub.f32 %v720, %v2611
      %v2620 = vsub.f32 %v721, %v2612
      %v2621 = vsel %vm704, 1, 0
      %vm2622 = vcmp.eq.s32.totalorder %v2621, 1
      %v2623 = vsel %vm2622, %v2613, 0.0
      %v2624 = vsel %vm2622, %v2614, 0.0
      %v2625 = vsel %vm2622, %v2615, 0.0
      %v2626 = vsel %vm2622, %v2616, 0.0
      %v2627 = vsel %vm2622, %v2617, 0.0
      %v2628 = vsel %vm2622, %v2618, 0.0
      %v2629 = vsel %vm2622, %v2619, 0.0
      %v2630 = vsel %vm2622, %v2620, 0.0
      %v2631 = vmul.f32 %v2623, %v2623
      %v2632 = vmul.f32 %v2624, %v2624
      %v2633 = vmul.f32 %v2625, %v2625
      %v2634 = vmul.f32 %v2626, %v2626
      %v2635 = vmul.f32 %v2627, %v2627
      %v2636 = vmul.f32 %v2628, %v2628
      %v2637 = vmul.f32 %v2629, %v2629
      %v2638 = vmul.f32 %v2630, %v2630
      %2639 = vadd.xlane.f32.xlu0 %v2631
      %v2640 = vpop.xlane.xlu0 %2639
      %2641 = vadd.xlane.f32.xlu0 %v2632
      %v2642 = vpop.xlane.xlu0 %2641
      %2643 = vadd.xlane.f32.xlu0 %v2633
      %v2644 = vpop.xlane.xlu0 %2643
      %2645 = vadd.xlane.f32.xlu0 %v2634
      %v2646 = vpop.xlane.xlu0 %2645
      %2647 = vadd.xlane.f32.xlu0 %v2635
      %v2648 = vpop.xlane.xlu0 %2647
      %2649 = vadd.xlane.f32.xlu0 %v2636
      %v2650 = vpop.xlane.xlu0 %2649
      %2651 = vadd.xlane.f32.xlu0 %v2637
      %v2652 = vpop.xlane.xlu0 %2651
      %2653 = vadd.xlane.f32.xlu0 %v2638
      %v2654 = vpop.xlane.xlu0 %2653
      %v2655 = vmul.f32 %v2640, 0.03125
      %v2656 = vmul.f32 %v2642, 0.03125
      %v2657 = vmul.f32 %v2644, 0.03125
      %v2658 = vmul.f32 %v2646, 0.03125
      %v2659 = vmul.f32 %v2648, 0.03125
      %v2660 = vmul.f32 %v2650, 0.03125
      %v2661 = vmul.f32 %v2652, 0.03125
      %v2662 = vmul.f32 %v2654, 0.03125
      %v2663 = vadd.f32 %v2655, 1e-08
      %v2664 = vadd.f32 %v2656, 1e-08
      %v2665 = vadd.f32 %v2657, 1e-08
      %v2666 = vadd.f32 %v2658, 1e-08
      %v2667 = vadd.f32 %v2659, 1e-08
      %v2668 = vadd.f32 %v2660, 1e-08
      %v2669 = vadd.f32 %v2661, 1e-08
      %v2670 = vadd.f32 %v2662, 1e-08
      %v2671 = vrsqrt.pop %v2663
      %v2672 = vrsqrt.pop %v2664
      %v2673 = vrsqrt.pop %v2665
      %v2674 = vrsqrt.pop %v2666
      %v2675 = vrsqrt.pop %v2667
      %v2676 = vrsqrt.pop %v2668
      %v2677 = vrsqrt.pop %v2669
      %v2678 = vrsqrt.pop %v2670
      %v2679 = vmul.f32 %v2623, %v2671
      %v2680 = vmul.f32 %v2624, %v2672
      %v2681 = vmul.f32 %v2625, %v2673
      %v2682 = vmul.f32 %v2626, %v2674
      %v2683 = vmul.f32 %v2627, %v2675
      %v2684 = vmul.f32 %v2628, %v2676
      %v2685 = vmul.f32 %v2629, %v2677
      %v2686 = vmul.f32 %v2630, %v2678
      %v2688 = vlaneseq
      %v2689 = vshrl.u32 %v2688, 7
      %v2690 = vsub.s32 0, %v2689
      %v2691 = vrot.slane %v2587, %v2690
      %v2693 = vmul.f32 %v2679, %v2691
      %v2694 = vmul.f32 %v2680, %v2691
      %v2695 = vmul.f32 %v2681, %v2691
      %v2696 = vmul.f32 %v2682, %v2691
      %v2697 = vmul.f32 %v2683, %v2691
      %v2698 = vmul.f32 %v2684, %v2691
      %v2699 = vmul.f32 %v2685, %v2691
      %v2700 = vmul.f32 %v2686, %v2691
      %v2702 = vlaneseq
      %v2703 = vshrl.u32 %v2702, 7
      %v2704 = vsub.s32 0, %v2703
      %v2705 = vrot.slane %v2588, %v2704
      %v2707 = vadd.f32 %v2693, %v2705
      %v2708 = vadd.f32 %v2694, %v2705
      %v2709 = vadd.f32 %v2695, %v2705
      %v2710 = vadd.f32 %v2696, %v2705
      %v2711 = vadd.f32 %v2697, %v2705
      %v2712 = vadd.f32 %v2698, %v2705
      %v2713 = vadd.f32 %v2699, %v2705
      %v2714 = vadd.f32 %v2700, %v2705
      %v2715 = vld [vmem:[%s669] sm:$0xf]
      %v2716 = vld [vmem:[%s669 + $0x4] sm:$0xf]
      %v2717 = vld [vmem:[%s669 + $0x8] sm:$0xf]
      %v2718 = vld [vmem:[%s669 + $0xc] sm:$0xf]
      %v2719 = vld [vmem:[%s669 + $0x10] sm:$0xf]
      %v2720 = vld [vmem:[%s669 + $0x14] sm:$0xf]
      %v2721 = vld [vmem:[%s669 + $0x18] sm:$0xf]
      %v2722 = vld [vmem:[%s669 + $0x1c] sm:$0xf]
      %v2723 = vunpack.c.l.bf16 %v2715
      %v2724 = vunpack.c.l.bf16 %v2716
      %v2725 = vunpack.c.l.bf16 %v2717
      %v2726 = vunpack.c.l.bf16 %v2718
      %v2727 = vunpack.c.l.bf16 %v2719
      %v2728 = vunpack.c.l.bf16 %v2720
      %v2729 = vunpack.c.l.bf16 %v2721
      %v2730 = vunpack.c.l.bf16 %v2722
      %v2731 = vmul.f32 %v2707, %v2723
      %v2732 = vmul.f32 %v2708, %v2724
      %v2733 = vmul.f32 %v2709, %v2725
      %v2734 = vmul.f32 %v2710, %v2726
      %v2735 = vmul.f32 %v2711, %v2727
      %v2736 = vmul.f32 %v2712, %v2728
      %v2737 = vmul.f32 %v2713, %v2729
      %v2738 = vmul.f32 %v2714, %v2730
      %2739 = vadd.xlane.f32.xlu0 %v2731
      %v2740 = vpop.xlane.xlu0 %2739
      %2741 = vadd.xlane.f32.xlu0 %v2732
      %v2742 = vpop.xlane.xlu0 %2741
      %2743 = vadd.xlane.f32.xlu0 %v2733
      %v2744 = vpop.xlane.xlu0 %2743
      %2745 = vadd.xlane.f32.xlu0 %v2734
      %v2746 = vpop.xlane.xlu0 %2745
      %2747 = vadd.xlane.f32.xlu0 %v2735
      %v2748 = vpop.xlane.xlu0 %2747
      %2749 = vadd.xlane.f32.xlu0 %v2736
      %v2750 = vpop.xlane.xlu0 %2749
      %2751 = vadd.xlane.f32.xlu0 %v2737
      %v2752 = vpop.xlane.xlu0 %2751
      %2753 = vadd.xlane.f32.xlu0 %v2738
      %v2754 = vpop.xlane.xlu0 %2753
      %v2755 = vld [vmem:[%s675] sm:$0xf]
      %v2756 = vld [vmem:[%s675 + $0x4] sm:$0xf]
      %v2757 = vld [vmem:[%s675 + $0x8] sm:$0xf]
      %v2758 = vld [vmem:[%s675 + $0xc] sm:$0xf]
      %v2759 = vld [vmem:[%s675 + $0x10] sm:$0xf]
      %v2760 = vld [vmem:[%s675 + $0x14] sm:$0xf]
      %v2761 = vld [vmem:[%s675 + $0x18] sm:$0xf]
      %v2762 = vld [vmem:[%s675 + $0x1c] sm:$0xf]
      %v2763 = vunpack.c.l.bf16 %v2755
      %v2764 = vunpack.c.l.bf16 %v2756
      %v2765 = vunpack.c.l.bf16 %v2757
      %v2766 = vunpack.c.l.bf16 %v2758
      %v2767 = vunpack.c.l.bf16 %v2759
      %v2768 = vunpack.c.l.bf16 %v2760
      %v2769 = vunpack.c.l.bf16 %v2761
      %v2770 = vunpack.c.l.bf16 %v2762
      %v2771 = vmul.f32 %v2707, %v2763
      %v2772 = vmul.f32 %v2708, %v2764
      %v2773 = vmul.f32 %v2709, %v2765
      %v2774 = vmul.f32 %v2710, %v2766
      %v2775 = vmul.f32 %v2711, %v2767
      %v2776 = vmul.f32 %v2712, %v2768
      %v2777 = vmul.f32 %v2713, %v2769
      %v2778 = vmul.f32 %v2714, %v2770
      %2779 = vadd.xlane.f32.xlu0 %v2771
      %v2780 = vpop.xlane.xlu0 %2779
      %2781 = vadd.xlane.f32.xlu0 %v2772
      %v2782 = vpop.xlane.xlu0 %2781
      %2783 = vadd.xlane.f32.xlu0 %v2773
      %v2784 = vpop.xlane.xlu0 %2783
      %2785 = vadd.xlane.f32.xlu0 %v2774
      %v2786 = vpop.xlane.xlu0 %2785
      %2787 = vadd.xlane.f32.xlu0 %v2775
      %v2788 = vpop.xlane.xlu0 %2787
      %2789 = vadd.xlane.f32.xlu0 %v2776
      %v2790 = vpop.xlane.xlu0 %2789
      %2791 = vadd.xlane.f32.xlu0 %v2777
      %v2792 = vpop.xlane.xlu0 %2791
      %2793 = vadd.xlane.f32.xlu0 %v2778
      %v2794 = vpop.xlane.xlu0 %2793
      %2795 = vst [vmem:[%s680] sm:$0xff] 0.0
      %2796 = vst [vmem:[%s684] sm:$0xff] 0.0
      %v2805 = vlaneseq
      %v2806 = vshrl.u32 %v2805, 7
      %v2807 = vsub.s32 %v703, %v2806
      %v2808 = vrot.slane %v2740, %v2807
      %v2809 = vlaneseq
      %v2810 = vshrl.u32 %v2809, 7
      %v2811 = vsub.s32 %v703, %v2810
      %v2812 = vrot.slane %v2742, %v2811
      %v2813 = vlaneseq
      %v2814 = vshrl.u32 %v2813, 7
      %v2815 = vsub.s32 %v703, %v2814
      %v2816 = vrot.slane %v2744, %v2815
      %v2817 = vlaneseq
      %v2818 = vshrl.u32 %v2817, 7
      %v2819 = vsub.s32 %v703, %v2818
      %v2820 = vrot.slane %v2746, %v2819
      %v2821 = vlaneseq
      %v2822 = vshrl.u32 %v2821, 7
      %v2823 = vsub.s32 %v703, %v2822
      %v2824 = vrot.slane %v2748, %v2823
      %v2825 = vlaneseq
      %v2826 = vshrl.u32 %v2825, 7
      %v2827 = vsub.s32 %v703, %v2826
      %v2828 = vrot.slane %v2750, %v2827
      %v2829 = vlaneseq
      %v2830 = vshrl.u32 %v2829, 7
      %v2831 = vsub.s32 %v703, %v2830
      %v2832 = vrot.slane %v2752, %v2831
      %v2833 = vlaneseq
      %v2834 = vshrl.u32 %v2833, 7
      %v2835 = vsub.s32 %v703, %v2834
      %v2836 = vrot.slane %v2754, %v2835
      %vm2837 = vcmask 1041409
      %v2838 = vsel %vm2837, %v2812, %v2808
      %vm2839 = vcmask 1042434
      %v2840 = vsel %vm2839, %v2816, %v2838
      %vm2841 = vcmask 1043459
      %v2842 = vsel %vm2841, %v2820, %v2840
      %vm2843 = vcmask 1044484
      %v2844 = vsel %vm2843, %v2824, %v2842
      %vm2845 = vcmask 1045509
      %v2846 = vsel %vm2845, %v2828, %v2844
      %vm2847 = vcmask 1046534
      %v2848 = vsel %vm2847, %v2832, %v2846
      %vm2849 = vcmask 1047559
      %v2850 = vsel %vm2849, %v2836, %v2848
      %vm2852 = vcmask 64512
      %2853 = vst.msk [vmem:[%s680] sm:$0xff] %vm2852, %v2850
      %v2862 = vlaneseq
      %v2863 = vshrl.u32 %v2862, 7
      %v2864 = vsub.s32 %v703, %v2863
      %v2865 = vrot.slane %v2780, %v2864
      %v2866 = vlaneseq
      %v2867 = vshrl.u32 %v2866, 7
      %v2868 = vsub.s32 %v703, %v2867
      %v2869 = vrot.slane %v2782, %v2868
      %v2870 = vlaneseq
      %v2871 = vshrl.u32 %v2870, 7
      %v2872 = vsub.s32 %v703, %v2871
      %v2873 = vrot.slane %v2784, %v2872
      %v2874 = vlaneseq
      %v2875 = vshrl.u32 %v2874, 7
      %v2876 = vsub.s32 %v703, %v2875
      %v2877 = vrot.slane %v2786, %v2876
      %v2878 = vlaneseq
      %v2879 = vshrl.u32 %v2878, 7
      %v2880 = vsub.s32 %v703, %v2879
      %v2881 = vrot.slane %v2788, %v2880
      %v2882 = vlaneseq
      %v2883 = vshrl.u32 %v2882, 7
      %v2884 = vsub.s32 %v703, %v2883
      %v2885 = vrot.slane %v2790, %v2884
      %v2886 = vlaneseq
      %v2887 = vshrl.u32 %v2886, 7
      %v2888 = vsub.s32 %v703, %v2887
      %v2889 = vrot.slane %v2792, %v2888
      %v2890 = vlaneseq
      %v2891 = vshrl.u32 %v2890, 7
      %v2892 = vsub.s32 %v703, %v2891
      %v2893 = vrot.slane %v2794, %v2892
      %v2894 = vsel %vm2837, %v2869, %v2865
      %v2895 = vsel %vm2839, %v2873, %v2894
      %v2896 = vsel %vm2841, %v2877, %v2895
      %v2897 = vsel %vm2843, %v2881, %v2896
      %v2898 = vsel %vm2845, %v2885, %v2897
      %v2899 = vsel %vm2847, %v2889, %v2898
      %v2900 = vsel %vm2849, %v2893, %v2899
      %2902 = vst.msk [vmem:[%s684] sm:$0xff] %vm2852, %v2900
      %p2903 = scmp.lt.s32.totalorder %s32, 1
      %s2904 = scalar_select %p2903, %s32, 1
      %s2905 = smul.addr %s2904, 8
      %s2906 = scalar_lea.vmem %s19, %s2905
      %p2907 = scmp.lt.s32.totalorder %s32, 1
      %s2908 = scalar_select %p2907, %s32, 1
      %s2909 = smul.addr %s2908, 8
      %s2910 = scalar_lea.vmem %s20, %s2909
      // Predicated region
      $region104: #{sasrec_forward.3} parent=95 // pred_check
        %p2911 = pneg %p464
      $region105: #{sasrec_forward.3} parent=95 // pred_check_branch
        %2913 = sbr.rel (%p2911) target = $region107
      $region106: #{sasrec_forward.3} parent=95 // pred_region
        _
      $region107: #{sasrec_forward.3} parent=95 // pred_fallthru
        _
      // Predicated region
      $region108: #{sasrec_forward.3} parent=95 // pred_check
        %p2914 = pneg %p490
      $region109: #{sasrec_forward.3} parent=95 // pred_check_branch
        %2916 = sbr.rel (%p2914) target = $region111
      $region110: #{sasrec_forward.3} parent=95 // pred_region
        _
      $region111: #{sasrec_forward.3} parent=95 // pred_fallthru
        _
    $region96: #{sasrec_forward.3} parent=5 // pred_fallthru
      _
    %p2917 = scmp.le.s32.totalorder 2, %s27
    // Predicated region
    $region112: #{sasrec_forward.3} parent=5 // pred_check
      %p2918 = pneg %p2917
    $region113: #{sasrec_forward.3} parent=5 // pred_check_branch
      %2920 = sbr.rel (%p2918) target = $region115
    $region114: #{sasrec_forward.3} parent=5 // pred_region
      %s2921 = ssub.s32 %s27, 2
      // Predicated region
      $region116: #{sasrec_forward.3} parent=114 // pred_check
        %p2922 = pneg %p470
      $region117: #{sasrec_forward.3} parent=114 // pred_check_branch
        %2924 = sbr.rel (%p2922) target = $region119
      $region118: #{sasrec_forward.3} parent=114 // pred_region
        %p2925 = scmp.lt.s32.totalorder %s33, 1
        %s2926 = scalar_select %p2925, %s33, 1
        %s2927 = smul.addr %s2926, 8
        %s2928 = scalar_lea.vmem %s19, %s2927
      $region119: #{sasrec_forward.3} parent=114 // pred_fallthru
        _
      // Predicated region
      $region120: #{sasrec_forward.3} parent=114 // pred_check
        %p2929 = pneg %p496
      $region121: #{sasrec_forward.3} parent=114 // pred_check_branch
        %2931 = sbr.rel (%p2929) target = $region123
      $region122: #{sasrec_forward.3} parent=114 // pred_region
        %p2932 = scmp.lt.s32.totalorder %s33, 1
        %s2933 = scalar_select %p2932, %s33, 1
        %s2934 = smul.addr %s2933, 8
        %s2935 = scalar_lea.vmem %s20, %s2934
      $region123: #{sasrec_forward.3} parent=114 // pred_fallthru
        _
    $region115: #{sasrec_forward.3} parent=5 // pred_fallthru
      _
  $region6: #{sasrec_forward.3} parent=0 // loop_footer
    %s31 = sadd.s32 1, %s27
  $region7: #{sasrec_forward.3} parent=0 // loop_footer_branch
    %26 = sbr.rel target = $region3
  $region8: #{sasrec_forward.3} parent=0 // loop_exit
    _

</llo_original>
